<compile_context>
chip_gen: v5e
topology: v5e:2x2
jax: 0.10.0
libtpu: 0.0.40
codegen_flags: <defaults>
</compile_context>

<pallas_src>
import jax
import jax.numpy as jnp
from jax import lax
from jax.experimental import pallas as pl
from jax.experimental.pallas import tpu as pltpu

# ----------------------------- configuration --------------------------------
SEQ_LEN = 8            # sequence_length (T)
NUM_AGENTS = 4         # num_agents (A)
LATENT_DIM = 6         # latent_dim (L); sigma_dim = L*L
EMBED_DIM = 24         # embedding_dim (E), divisible by NUM_HEADS (=12)
NUM_HEADS = 12
HEAD_DIM = EMBED_DIM // NUM_HEADS
FF_DIM = 2048          # nn.TransformerEncoderLayer default dim_feedforward
NUM_LAYERS = 6
MLP_HIDDEN = 64        # assumed hidden width of the (undefined) MLP class
OUT_DIM = SEQ_LEN * NUM_AGENTS * 3
LN_EPS = 1e-5


# ------------------------------- kernel helpers -------------------------------
def _layer_norm(x, w, b):
    mean = jnp.mean(x, axis=-1, keepdims=True)
    var = jnp.mean((x - mean) ** 2, axis=-1, keepdims=True)
    return (x - mean) * jax.lax.rsqrt(var + LN_EPS) * w + b


def _mlp(x, w1, b1, w2, b2):
    h = jnp.maximum(jnp.dot(x, w1, preferred_element_type=jnp.float32) + b1, 0.0)
    return jnp.dot(h, w2, preferred_element_type=jnp.float32) + b2


_NT = (((1,), (1,)), ((), ()))   # "A @ B.T"-style dot_general dimension numbers


# --------------------------------- kernel -------------------------------------
def _vae_kernel(x_ref, eps_ref, bmask_ref, hmask_ref, g_ref, hseg_ref,
                ie_w1, ie_b1, ie_w2, ie_b2,
                wq, bq, wk, bk, wv, bv, wo, bo,
                wf1, bf1, wf2t, bf2,
                ln1w, ln1b, ln2w, ln2b,
                mu_w1, mu_b1, mu_w2, mu_b2,
                sg_w1, sg_b1, sg_w2, sg_b2,
                de_w1, de_b1, de_w2, de_b2,
                recon_ref, mu_ref, logvar_ref,
                act_ref):
    layer = pl.program_id(0)

    # ---- grid step 0: input-encoder MLP fills the resident activation slab ----
    @pl.when(layer == 0)
    def _():
        act_ref[...] = _mlp(x_ref[...], ie_w1[...], ie_b1[...],
                            ie_w2[...], ie_b2[...])

    act = act_ref[...]                                          # [N, E] f32

    # ---- one post-norm transformer encoder layer (this grid step's weights) ----
    q = jnp.dot(act, wq[0], preferred_element_type=jnp.float32) + bq[0]  # scale folded
    k = jnp.dot(act, wk[0], preferred_element_type=jnp.float32) + bk[0]
    v = jnp.dot(act, wv[0], preferred_element_type=jnp.float32) + bv[0]

    hmask = hmask_ref[...]                                      # [H*N, E] 0/1 head bands
    khat = jnp.concatenate([k] * NUM_HEADS, axis=0) * hmask     # [H*N, E]
    vhat = jnp.concatenate([v] * NUM_HEADS, axis=0) * hmask     # [H*N, E]

    # lane-dense per-head scores: S[n, h*N+m] = sum_{d in head h} q[n,d]*k[m,d]
    s = lax.dot_general(q, khat, _NT, preferred_element_type=jnp.float32)  # [N, H*N]
    s = s + bmask_ref[...]                                      # block-diag batch mask
    s = s - jnp.max(s, axis=-1, keepdims=True)                  # global row max (valid stabilizer)
    p = jnp.exp(s)

    # per-(row, head) softmax denominators via one grouping matmul
    denom = jnp.dot(p, g_ref[...], preferred_element_type=jnp.float32)     # [N, H]
    recip = pl.reciprocal(jnp.maximum(denom, 1e-30), approx=True)
    o = jnp.dot(p, vhat, preferred_element_type=jnp.float32)               # [N, E]
    o = o * jnp.dot(recip, hseg_ref[...], preferred_element_type=jnp.float32)

    attn = jnp.dot(o, wo[0], preferred_element_type=jnp.float32) + bo[0]
    y = _layer_norm(act + attn, ln1w[0], ln1b[0])

    # feed-forward: lane-dense bf16 weights on the MXU, f32 accumulate/elementwise
    ff = jnp.dot(y.astype(jnp.bfloat16), wf1[0],
                 preferred_element_type=jnp.float32) + bf1[0]               # [N, FF]
    ff = jnp.maximum(ff, 0.0)
    ff = lax.dot_general(ff.astype(jnp.bfloat16), wf2t[0], _NT,
                         preferred_element_type=jnp.float32) + bf2[0]       # [N, E]

    new_act = _layer_norm(y + ff, ln2w[0], ln2b[0])
    act_ref[...] = new_act

    # ---- last grid step: pool -> latent heads -> reparameterize -> decode ----
    @pl.when(layer == pl.num_programs(0) - 1)
    def _():
        bsz = act_ref.shape[0] // SEQ_LEN
        # torch.max(result, dim=1).values ; rows are ordered (batch, time)
        pooled = jnp.concatenate(
            [jnp.max(new_act[b * SEQ_LEN:(b + 1) * SEQ_LEN, :], axis=0, keepdims=True)
             for b in range(bsz)], axis=0)                      # [B, E]

        mu = _mlp(pooled, mu_w1[...], mu_b1[...], mu_w2[...], mu_b2[...])       # [B, L]
        log_var = _mlp(pooled, sg_w1[...], sg_b1[...], sg_w2[...], sg_b2[...])  # [B, L*L]

        # reparameterize: z[b,i] = sum_j exp(0.5*logvar[b,i,j]) * eps[b,j] + mu[b,i]
        std = jnp.exp(0.5 * log_var)                            # [B, L*L]
        eps = eps_ref[...]                                      # [B, L]
        eps_rep = jnp.concatenate([eps] * LATENT_DIM, axis=-1)  # [B, L*L]
        r_idx = lax.broadcasted_iota(jnp.int32, (LATENT_DIM * LATENT_DIM, LATENT_DIM), 0)
        c_idx = lax.broadcasted_iota(jnp.int32, (LATENT_DIM * LATENT_DIM, LATENT_DIM), 1)
        grp = ((r_idx >= c_idx * LATENT_DIM) &
               (r_idx < (c_idx + 1) * LATENT_DIM)).astype(jnp.float32)      # [L*L, L]
        z = jnp.dot(std * eps_rep, grp, preferred_element_type=jnp.float32) + mu

        recon = _mlp(z, de_w1[...], de_b1[...], de_w2[...], de_b2[...])     # [B, OUT]

        recon_ref[...] = recon.astype(recon_ref.dtype)
        mu_ref[...] = mu.astype(mu_ref.dtype)
        logvar_ref[...] = log_var.astype(logvar_ref.dtype)


# ----------------------------- parameter init ---------------------------------
def _init_linear(key, fan_in, fan_out):
    kw, kb = jax.random.split(key)
    bound = 1.0 / (fan_in ** 0.5)
    w = jax.random.uniform(kw, (fan_in, fan_out), jnp.float32, -bound, bound)
    b = jax.random.uniform(kb, (1, fan_out), jnp.float32, -bound, bound)
    return w, b


def _init_mlp(key, in_dim, out_dim, hidden=MLP_HIDDEN):
    k1, k2 = jax.random.split(key)
    w1, b1 = _init_linear(k1, in_dim, hidden)
    w2, b2 = _init_linear(k2, hidden, out_dim)
    return (w1, b1, w2, b2)


def _init_encoder_layer(key):
    kq, kk, kv, ko, k1, k2 = jax.random.split(key, 6)
    wq, bq = _init_linear(kq, EMBED_DIM, EMBED_DIM)
    # fold the 1/sqrt(head_dim) attention scale into the Q projection
    scale = 1.0 / (HEAD_DIM ** 0.5)
    wq, bq = wq * scale, bq * scale
    wk, bk = _init_linear(kk, EMBED_DIM, EMBED_DIM)
    wv, bv = _init_linear(kv, EMBED_DIM, EMBED_DIM)
    wo, bo = _init_linear(ko, EMBED_DIM, EMBED_DIM)
    wf1, bf1 = _init_linear(k1, EMBED_DIM, FF_DIM)
    wf2, bf2 = _init_linear(k2, FF_DIM, EMBED_DIM)
    wf2t = wf2.T                               # store lane-dense [E, FF_DIM]
    ones = jnp.ones((1, EMBED_DIM), jnp.float32)
    zeros = jnp.zeros((1, EMBED_DIM), jnp.float32)
    return (wq, bq, wk, bk, wv, bv, wo, bo,
            wf1, bf1, wf2t, bf2, ones, zeros, ones, zeros)


def init_params(key):
    keys = jax.random.split(key, 4 + NUM_LAYERS)
    layers = [_init_encoder_layer(keys[4 + i]) for i in range(NUM_LAYERS)]
    stacked = [jnp.stack([lp[j] for lp in layers]) for j in range(16)]
    # bf16 storage for the FF weights (the only non-trivial bytes): halves DMA,
    # bf16 MXU path; accumulation and elementwise math stay f32.
    stacked[8] = stacked[8].astype(jnp.bfloat16)    # wf1  [L, E, FF]
    stacked[10] = stacked[10].astype(jnp.bfloat16)  # wf2t [L, E, FF]
    return {
        "input_encoder": _init_mlp(keys[0], NUM_AGENTS * 3, EMBED_DIM),
        "fc_mu": _init_mlp(keys[1], EMBED_DIM, LATENT_DIM),
        "fc_sigma": _init_mlp(keys[2], EMBED_DIM, LATENT_DIM * LATENT_DIM),
        "decoder": _init_mlp(keys[3], LATENT_DIM, OUT_DIM),
        "enc": tuple(stacked),
    }


# ------------------------------- forward --------------------------------------
def attention_vae_forward(x, params, eps_key):
    """x: [B, A, T, 3]  ->  (recon [B, A, T, 3], mu [B, L], log_var [B, L, L])"""
    B, A, T, D = x.shape
    N = B * T
    HN = NUM_HEADS * N

    # encode prep: [B, A, T, 3] -> [B, T, A, 3] -> [B*T, A*3]
    xt = jnp.transpose(x, (0, 2, 1, 3)).reshape(N, A * D)
    eps = jax.random.normal(eps_key, (B, LATENT_DIM), jnp.float32)

    # hoisted constants (built once, DMA'd once, stay VMEM-resident)
    row_b = jnp.arange(N) // T
    bmask = jnp.where(row_b[:, None] == row_b[None, :], 0.0, -1e30).astype(jnp.float32)
    bmask_dense = jnp.tile(bmask, (1, NUM_HEADS))                               # [N, H*N]
    head_of_row = jnp.arange(HN) // N                                           # [H*N]
    head_of_col = jnp.arange(EMBED_DIM) // HEAD_DIM                             # [E]
    hmask = (head_of_row[:, None] == head_of_col[None, :]).astype(jnp.float32)  # [H*N, E]
    g = (head_of_row[:, None] == jnp.arange(NUM_HEADS)[None, :]).astype(jnp.float32)   # [H*N, H]
    hseg = (jnp.arange(NUM_HEADS)[:, None] == head_of_col[None, :]).astype(jnp.float32)  # [H, E]

    def const_spec(a):      # rank-2, resident across all grid steps
        return pl.BlockSpec(a.shape, lambda l: (0, 0))

    def layer_spec(a):      # rank-3 stacked [NUM_LAYERS, ...], per-layer slice
        return pl.BlockSpec((1,) + a.shape[1:], lambda l: (l, 0, 0))

    inputs, in_specs = [], []
    for a in (xt, eps, bmask_dense, hmask, g, hseg):
        inputs.append(a); in_specs.append(const_spec(a))
    for a in params["input_encoder"]:
        inputs.append(a); in_specs.append(const_spec(a))
    for a in params["enc"]:
        inputs.append(a); in_specs.append(layer_spec(a))
    for name in ("fc_mu", "fc_sigma", "decoder"):
        for a in params[name]:
            inputs.append(a); in_specs.append(const_spec(a))

    out_shape = (
        jax.ShapeDtypeStruct((B, OUT_DIM), jnp.float32),
        jax.ShapeDtypeStruct((B, LATENT_DIM), jnp.float32),
        jax.ShapeDtypeStruct((B, LATENT_DIM * LATENT_DIM), jnp.float32),
    )
    out_specs = (
        pl.BlockSpec((B, OUT_DIM), lambda l: (0, 0)),
        pl.BlockSpec((B, LATENT_DIM), lambda l: (0, 0)),
        pl.BlockSpec((B, LATENT_DIM * LATENT_DIM), lambda l: (0, 0)),
    )

    grid_spec = pltpu.PrefetchScalarGridSpec(
        num_scalar_prefetch=0,
        grid=(NUM_LAYERS,),
        in_specs=in_specs,
        out_specs=out_specs,
        scratch_shapes=[pltpu.VMEM((N, EMBED_DIM), jnp.float32)],  # resident activations
    )

    ff_flops = 2 * 2 * N * EMBED_DIM * FF_DIM * NUM_LAYERS          # dominant term
    cost = pl.CostEstimate(
        flops=int(ff_flops * 1.15),
        transcendentals=int(NUM_LAYERS * N * NUM_HEADS * N + 1024),
        bytes_accessed=int(1.4e6),
    )

    recon_flat, mu, logvar_flat = pl.pallas_call(
        _vae_kernel,
        grid_spec=grid_spec,
        out_shape=out_shape,
        compiler_params=pltpu.CompilerParams(
            dimension_semantics=("arbitrary",),
            vmem_limit_bytes=8 * 1024 * 1024),
        cost_estimate=cost,
    )(*inputs)

    recon = recon_flat.reshape(B, NUM_AGENTS, SEQ_LEN, 3)
    log_var = logvar_flat.reshape(B, LATENT_DIM, LATENT_DIM)
    return recon, mu, log_var


# --------------------------------- main ----------------------------------------
if __name__ == "__main__":
    root = jax.random.PRNGKey(0)
    k_params, k_x, k_eps = jax.random.split(root, 3)

    B = 2
    params = init_params(k_params)
    x = jax.random.normal(k_x, (B, NUM_AGENTS, SEQ_LEN, 3), jnp.float32)

    fwd = jax.jit(attention_vae_forward)
    recon, mu, log_var = fwd(x, params, k_eps)
    jax.block_until_ready((recon, mu, log_var))

    assert recon.shape == (B, NUM_AGENTS, SEQ_LEN, 3)
    assert mu.shape == (B, LATENT_DIM)
    assert log_var.shape == (B, LATENT_DIM, LATENT_DIM)
    assert bool(jnp.all(jnp.isfinite(recon)))
    assert bool(jnp.all(jnp.isfinite(mu)))
    assert bool(jnp.all(jnp.isfinite(log_var)))
    print("KERNEL_OK")
</pallas_src>

<mosaic_0001>
module attributes {stable_mosaic.version = 11 : i64} {
  func.func @_vae_kernel(%arg0: i32, %arg1: memref<16x12xf32, #tpu.memory_space<vmem>>, %arg2: memref<2x6xf32, #tpu.memory_space<vmem>>, %arg3: memref<16x192xf32, #tpu.memory_space<vmem>>, %arg4: memref<192x24xf32, #tpu.memory_space<vmem>>, %arg5: memref<192x12xf32, #tpu.memory_space<vmem>>, %arg6: memref<12x24xf32, #tpu.memory_space<vmem>>, %arg7: memref<12x64xf32, #tpu.memory_space<vmem>>, %arg8: memref<1x64xf32, #tpu.memory_space<vmem>>, %arg9: memref<64x24xf32, #tpu.memory_space<vmem>>, %arg10: memref<1x24xf32, #tpu.memory_space<vmem>>, %arg11: memref<1x24x24xf32, #tpu.memory_space<vmem>>, %arg12: memref<1x1x24xf32, #tpu.memory_space<vmem>>, %arg13: memref<1x24x24xf32, #tpu.memory_space<vmem>>, %arg14: memref<1x1x24xf32, #tpu.memory_space<vmem>>, %arg15: memref<1x24x24xf32, #tpu.memory_space<vmem>>, %arg16: memref<1x1x24xf32, #tpu.memory_space<vmem>>, %arg17: memref<1x24x24xf32, #tpu.memory_space<vmem>>, %arg18: memref<1x1x24xf32, #tpu.memory_space<vmem>>, %arg19: memref<1x24x2048xbf16, #tpu.memory_space<vmem>>, %arg20: memref<1x1x2048xf32, #tpu.memory_space<vmem>>, %arg21: memref<1x24x2048xbf16, #tpu.memory_space<vmem>>, %arg22: memref<1x1x24xf32, #tpu.memory_space<vmem>>, %arg23: memref<1x1x24xf32, #tpu.memory_space<vmem>>, %arg24: memref<1x1x24xf32, #tpu.memory_space<vmem>>, %arg25: memref<1x1x24xf32, #tpu.memory_space<vmem>>, %arg26: memref<1x1x24xf32, #tpu.memory_space<vmem>>, %arg27: memref<24x64xf32, #tpu.memory_space<vmem>>, %arg28: memref<1x64xf32, #tpu.memory_space<vmem>>, %arg29: memref<64x6xf32, #tpu.memory_space<vmem>>, %arg30: memref<1x6xf32, #tpu.memory_space<vmem>>, %arg31: memref<24x64xf32, #tpu.memory_space<vmem>>, %arg32: memref<1x64xf32, #tpu.memory_space<vmem>>, %arg33: memref<64x36xf32, #tpu.memory_space<vmem>>, %arg34: memref<1x36xf32, #tpu.memory_space<vmem>>, %arg35: memref<6x64xf32, #tpu.memory_space<vmem>>, %arg36: memref<1x64xf32, #tpu.memory_space<vmem>>, %arg37: memref<64x96xf32, #tpu.memory_space<vmem>>, %arg38: memref<1x96xf32, #tpu.memory_space<vmem>>, %arg39: memref<2x96xf32, #tpu.memory_space<vmem>>, %arg40: memref<2x6xf32, #tpu.memory_space<vmem>>, %arg41: memref<2x36xf32, #tpu.memory_space<vmem>>, %arg42: memref<16x24xf32, #tpu.memory_space<vmem>>) attributes {dimension_semantics = [#tpu.dimension_semantics<arbitrary>], iteration_bounds = array<i64: 6>, scalar_prefetch = 0 : i64, scratch_operands = 1 : i64, tpu.core_type = #tpu.core_type<tc>, window_params = [{pipeline_mode = #tpu.pipeline_mode<synchronous>, transform_indices = @transform_0, window_bounds = array<i64: 16, 12>}, {pipeline_mode = #tpu.pipeline_mode<synchronous>, transform_indices = @transform_1, window_bounds = array<i64: 2, 6>}, {pipeline_mode = #tpu.pipeline_mode<synchronous>, transform_indices = @transform_2, window_bounds = array<i64: 16, 192>}, {pipeline_mode = #tpu.pipeline_mode<synchronous>, transform_indices = @transform_3, window_bounds = array<i64: 192, 24>}, {pipeline_mode = #tpu.pipeline_mode<synchronous>, transform_indices = @transform_4, window_bounds = array<i64: 192, 12>}, {pipeline_mode = #tpu.pipeline_mode<synchronous>, transform_indices = @transform_5, window_bounds = array<i64: 12, 24>}, {pipeline_mode = #tpu.pipeline_mode<synchronous>, transform_indices = @transform_6, window_bounds = array<i64: 12, 64>}, {pipeline_mode = #tpu.pipeline_mode<synchronous>, transform_indices = @transform_7, window_bounds = array<i64: 1, 64>}, {pipeline_mode = #tpu.pipeline_mode<synchronous>, transform_indices = @transform_8, window_bounds = array<i64: 64, 24>}, {pipeline_mode = #tpu.pipeline_mode<synchronous>, transform_indices = @transform_9, window_bounds = array<i64: 1, 24>}, {transform_indices = @transform_10, window_bounds = array<i64: 1, 24, 24>}, {transform_indices = @transform_11, window_bounds = array<i64: 1, 1, 24>}, {transform_indices = @transform_12, window_bounds = array<i64: 1, 24, 24>}, {transform_indices = @transform_13, window_bounds = array<i64: 1, 1, 24>}, {transform_indices = @transform_14, window_bounds = array<i64: 1, 24, 24>}, {transform_indices = @transform_15, window_bounds = array<i64: 1, 1, 24>}, {transform_indices = @transform_16, window_bounds = array<i64: 1, 24, 24>}, {transform_indices = @transform_17, window_bounds = array<i64: 1, 1, 24>}, {transform_indices = @transform_18, window_bounds = array<i64: 1, 24, 2048>}, {transform_indices = @transform_19, window_bounds = array<i64: 1, 1, 2048>}, {transform_indices = @transform_20, window_bounds = array<i64: 1, 24, 2048>}, {transform_indices = @transform_21, window_bounds = array<i64: 1, 1, 24>}, {transform_indices = @transform_22, window_bounds = array<i64: 1, 1, 24>}, {transform_indices = @transform_23, window_bounds = array<i64: 1, 1, 24>}, {transform_indices = @transform_24, window_bounds = array<i64: 1, 1, 24>}, {transform_indices = @transform_25, window_bounds = array<i64: 1, 1, 24>}, {pipeline_mode = #tpu.pipeline_mode<synchronous>, transform_indices = @transform_26, window_bounds = array<i64: 24, 64>}, {pipeline_mode = #tpu.pipeline_mode<synchronous>, transform_indices = @transform_27, window_bounds = array<i64: 1, 64>}, {pipeline_mode = #tpu.pipeline_mode<synchronous>, transform_indices = @transform_28, window_bounds = array<i64: 64, 6>}, {pipeline_mode = #tpu.pipeline_mode<synchronous>, transform_indices = @transform_29, window_bounds = array<i64: 1, 6>}, {pipeline_mode = #tpu.pipeline_mode<synchronous>, transform_indices = @transform_30, window_bounds = array<i64: 24, 64>}, {pipeline_mode = #tpu.pipeline_mode<synchronous>, transform_indices = @transform_31, window_bounds = array<i64: 1, 64>}, {pipeline_mode = #tpu.pipeline_mode<synchronous>, transform_indices = @transform_32, window_bounds = array<i64: 64, 36>}, {pipeline_mode = #tpu.pipeline_mode<synchronous>, transform_indices = @transform_33, window_bounds = array<i64: 1, 36>}, {pipeline_mode = #tpu.pipeline_mode<synchronous>, transform_indices = @transform_34, window_bounds = array<i64: 6, 64>}, {pipeline_mode = #tpu.pipeline_mode<synchronous>, transform_indices = @transform_35, window_bounds = array<i64: 1, 64>}, {pipeline_mode = #tpu.pipeline_mode<synchronous>, transform_indices = @transform_36, window_bounds = array<i64: 64, 96>}, {pipeline_mode = #tpu.pipeline_mode<synchronous>, transform_indices = @transform_37, window_bounds = array<i64: 1, 96>}, {pipeline_mode = #tpu.pipeline_mode<synchronous>, transform_indices = @transform_38, window_bounds = array<i64: 2, 96>}, {pipeline_mode = #tpu.pipeline_mode<synchronous>, transform_indices = @transform_39, window_bounds = array<i64: 2, 6>}, {pipeline_mode = #tpu.pipeline_mode<synchronous>, transform_indices = @transform_40, window_bounds = array<i64: 2, 36>}]} {
    %c0_i32 = arith.constant 0 : i32
    %0 = arith.cmpi eq, %arg0, %c0_i32 : i32
    %1 = arith.extui %0 : i1 to i32
    %c0_i32_0 = arith.constant 0 : i32
    %2 = arith.cmpi ne, %1, %c0_i32_0 : i32
    scf.if %2 {
      %c0_83 = arith.constant 0 : index
      %c0_84 = arith.constant 0 : index
      %130 = vector.load %arg1[%c0_83, %c0_84] : memref<16x12xf32, #tpu.memory_space<vmem>>, vector<16x12xf32>
      %c0_85 = arith.constant 0 : index
      %c0_86 = arith.constant 0 : index
      %131 = vector.load %arg7[%c0_85, %c0_86] : memref<12x64xf32, #tpu.memory_space<vmem>>, vector<12x64xf32>
      %c0_87 = arith.constant 0 : index
      %c0_88 = arith.constant 0 : index
      %132 = vector.load %arg8[%c0_87, %c0_88] : memref<1x64xf32, #tpu.memory_space<vmem>>, vector<1x64xf32>
      %c0_89 = arith.constant 0 : index
      %c0_90 = arith.constant 0 : index
      %133 = vector.load %arg9[%c0_89, %c0_90] : memref<64x24xf32, #tpu.memory_space<vmem>>, vector<64x24xf32>
      %c0_91 = arith.constant 0 : index
      %c0_92 = arith.constant 0 : index
      %134 = vector.load %arg10[%c0_91, %c0_92] : memref<1x24xf32, #tpu.memory_space<vmem>>, vector<1x24xf32>
      %cst_93 = arith.constant dense<0.000000e+00> : vector<16x64xf32>
      %135 = tpu.matmul %130, %131, %cst_93 {dimension_numbers = #tpu.dot_dimension_numbers<[1], [0], [0], [1], [0, 0, 1, 1], [], []>} : vector<16x12xf32>, vector<12x64xf32>, vector<16x64xf32> -> vector<16x64xf32>
      %136 = vector.broadcast %132 : vector<1x64xf32> to vector<16x64xf32>
      %137 = arith.addf %135, %136 : vector<16x64xf32>
      %cst_94 = arith.constant 0.000000e+00 : f32
      %138 = vector.broadcast %cst_94 : f32 to vector<16x64xf32>
      %139 = arith.maximumf %137, %138 : vector<16x64xf32>
      %cst_95 = arith.constant dense<0.000000e+00> : vector<16x24xf32>
      %140 = tpu.matmul %139, %133, %cst_95 {dimension_numbers = #tpu.dot_dimension_numbers<[1], [0], [0], [1], [0, 0, 1, 1], [], []>} : vector<16x64xf32>, vector<64x24xf32>, vector<16x24xf32> -> vector<16x24xf32>
      %141 = vector.broadcast %134 : vector<1x24xf32> to vector<16x24xf32>
      %142 = arith.addf %140, %141 : vector<16x24xf32>
      %c0_96 = arith.constant 0 : index
      %c0_97 = arith.constant 0 : index
      %143 = vector.load %arg42[%c0_96, %c0_97] : memref<16x24xf32, #tpu.memory_space<vmem>>, vector<16x24xf32>
      tpu.vector_store %arg42[%c0_96, %c0_97], %142 {strides = array<i32>} : memref<16x24xf32, #tpu.memory_space<vmem>>, vector<16x24xf32>,
    } else {
    }
    %c0 = arith.constant 0 : index
    %c0_1 = arith.constant 0 : index
    %3 = vector.load %arg42[%c0, %c0_1] : memref<16x24xf32, #tpu.memory_space<vmem>>, vector<16x24xf32>
    %c0_2 = arith.constant 0 : index
    %c0_3 = arith.constant 0 : index
    %c0_4 = arith.constant 0 : index
    %4 = vector.load %arg11[%c0_2, %c0_3, %c0_4] : memref<1x24x24xf32, #tpu.memory_space<vmem>>, vector<1x24x24xf32>
    %5 = vector.shape_cast %4 : vector<1x24x24xf32> to vector<24x24xf32>
    %cst = arith.constant dense<0.000000e+00> : vector<16x24xf32>
    %6 = tpu.matmul %3, %5, %cst {dimension_numbers = #tpu.dot_dimension_numbers<[1], [0], [0], [1], [0, 0, 1, 1], [], []>} : vector<16x24xf32>, vector<24x24xf32>, vector<16x24xf32> -> vector<16x24xf32>
    %c0_5 = arith.constant 0 : index
    %c0_6 = arith.constant 0 : index
    %c0_7 = arith.constant 0 : index
    %7 = vector.load %arg12[%c0_5, %c0_6, %c0_7] : memref<1x1x24xf32, #tpu.memory_space<vmem>>, vector<1x1x24xf32>
    %8 = vector.shape_cast %7 : vector<1x1x24xf32> to vector<1x24xf32>
    %9 = vector.broadcast %8 : vector<1x24xf32> to vector<16x24xf32>
    %10 = arith.addf %6, %9 : vector<16x24xf32>
    %c0_8 = arith.constant 0 : index
    %c0_9 = arith.constant 0 : index
    %c0_10 = arith.constant 0 : index
    %11 = vector.load %arg13[%c0_8, %c0_9, %c0_10] : memref<1x24x24xf32, #tpu.memory_space<vmem>>, vector<1x24x24xf32>
    %12 = vector.shape_cast %11 : vector<1x24x24xf32> to vector<24x24xf32>
    %cst_11 = arith.constant dense<0.000000e+00> : vector<16x24xf32>
    %13 = tpu.matmul %3, %12, %cst_11 {dimension_numbers = #tpu.dot_dimension_numbers<[1], [0], [0], [1], [0, 0, 1, 1], [], []>} : vector<16x24xf32>, vector<24x24xf32>, vector<16x24xf32> -> vector<16x24xf32>
    %c0_12 = arith.constant 0 : index
    %c0_13 = arith.constant 0 : index
    %c0_14 = arith.constant 0 : index
    %14 = vector.load %arg14[%c0_12, %c0_13, %c0_14] : memref<1x1x24xf32, #tpu.memory_space<vmem>>, vector<1x1x24xf32>
    %15 = vector.shape_cast %14 : vector<1x1x24xf32> to vector<1x24xf32>
    %16 = vector.broadcast %15 : vector<1x24xf32> to vector<16x24xf32>
    %17 = arith.addf %13, %16 : vector<16x24xf32>
    %c0_15 = arith.constant 0 : index
    %c0_16 = arith.constant 0 : index
    %c0_17 = arith.constant 0 : index
    %18 = vector.load %arg15[%c0_15, %c0_16, %c0_17] : memref<1x24x24xf32, #tpu.memory_space<vmem>>, vector<1x24x24xf32>
    %19 = vector.shape_cast %18 : vector<1x24x24xf32> to vector<24x24xf32>
    %cst_18 = arith.constant dense<0.000000e+00> : vector<16x24xf32>
    %20 = tpu.matmul %3, %19, %cst_18 {dimension_numbers = #tpu.dot_dimension_numbers<[1], [0], [0], [1], [0, 0, 1, 1], [], []>} : vector<16x24xf32>, vector<24x24xf32>, vector<16x24xf32> -> vector<16x24xf32>
    %c0_19 = arith.constant 0 : index
    %c0_20 = arith.constant 0 : index
    %c0_21 = arith.constant 0 : index
    %21 = vector.load %arg16[%c0_19, %c0_20, %c0_21] : memref<1x1x24xf32, #tpu.memory_space<vmem>>, vector<1x1x24xf32>
    %22 = vector.shape_cast %21 : vector<1x1x24xf32> to vector<1x24xf32>
    %23 = vector.broadcast %22 : vector<1x24xf32> to vector<16x24xf32>
    %24 = arith.addf %20, %23 : vector<16x24xf32>
    %c0_22 = arith.constant 0 : index
    %c0_23 = arith.constant 0 : index
    %25 = vector.load %arg4[%c0_22, %c0_23] : memref<192x24xf32, #tpu.memory_space<vmem>>, vector<192x24xf32>
    %26 = tpu.concatenate %17, %17, %17, %17, %17, %17, %17, %17, %17, %17, %17, %17 in 0 : vector<16x24xf32>, vector<16x24xf32>, vector<16x24xf32>, vector<16x24xf32>, vector<16x24xf32>, vector<16x24xf32>, vector<16x24xf32>, vector<16x24xf32>, vector<16x24xf32>, vector<16x24xf32>, vector<16x24xf32>, vector<16x24xf32> -> vector<192x24xf32>
    %27 = arith.mulf %26, %25 : vector<192x24xf32>
    %28 = tpu.concatenate %24, %24, %24, %24, %24, %24, %24, %24, %24, %24, %24, %24 in 0 : vector<16x24xf32>, vector<16x24xf32>, vector<16x24xf32>, vector<16x24xf32>, vector<16x24xf32>, vector<16x24xf32>, vector<16x24xf32>, vector<16x24xf32>, vector<16x24xf32>, vector<16x24xf32>, vector<16x24xf32>, vector<16x24xf32> -> vector<192x24xf32>
    %29 = arith.mulf %28, %25 : vector<192x24xf32>
    %cst_24 = arith.constant dense<0.000000e+00> : vector<16x192xf32>
    %30 = tpu.matmul %10, %27, %cst_24 {dimension_numbers = #tpu.dot_dimension_numbers<[1], [1], [0], [0], [0, 0, 1, 0], [], []>} : vector<16x24xf32>, vector<192x24xf32>, vector<16x192xf32> -> vector<16x192xf32>
    %c0_25 = arith.constant 0 : index
    %c0_26 = arith.constant 0 : index
    %31 = vector.load %arg3[%c0_25, %c0_26] : memref<16x192xf32, #tpu.memory_space<vmem>>, vector<16x192xf32>
    %32 = arith.addf %30, %31 : vector<16x192xf32>
    %cst_27 = arith.constant dense<0xFF800000> : vector<16xf32>
    %33 = vector.multi_reduction <maximumf>, %32, %cst_27 [1] : vector<16x192xf32> to vector<16xf32>
    %34 = vector.shape_cast %33 : vector<16xf32> to vector<16x1xf32>
    %35 = vector.broadcast %34 : vector<16x1xf32> to vector<16x192xf32>
    %36 = arith.subf %32, %35 : vector<16x192xf32>
    %37 = math.exp %36 : vector<16x192xf32>
    %c0_28 = arith.constant 0 : index
    %c0_29 = arith.constant 0 : index
    %38 = vector.load %arg5[%c0_28, %c0_29] : memref<192x12xf32, #tpu.memory_space<vmem>>, vector<192x12xf32>
    %cst_30 = arith.constant dense<0.000000e+00> : vector<16x12xf32>
    %39 = tpu.matmul %37, %38, %cst_30 {dimension_numbers = #tpu.dot_dimension_numbers<[1], [0], [0], [1], [0, 0, 1, 1], [], []>} : vector<16x192xf32>, vector<192x12xf32>, vector<16x12xf32> -> vector<16x12xf32>
    %cst_31 = arith.constant 1.000000e-30 : f32
    %40 = vector.broadcast %cst_31 : f32 to vector<16x12xf32>
    %41 = arith.maximumf %39, %40 : vector<16x12xf32>
    %42 = tpu.reciprocal %41 {approx = true} : vector<16x12xf32> -> vector<16x12xf32>
    %cst_32 = arith.constant dense<0.000000e+00> : vector<16x24xf32>
    %43 = tpu.matmul %37, %29, %cst_32 {dimension_numbers = #tpu.dot_dimension_numbers<[1], [0], [0], [1], [0, 0, 1, 1], [], []>} : vector<16x192xf32>, vector<192x24xf32>, vector<16x24xf32> -> vector<16x24xf32>
    %c0_33 = arith.constant 0 : index
    %c0_34 = arith.constant 0 : index
    %44 = vector.load %arg6[%c0_33, %c0_34] : memref<12x24xf32, #tpu.memory_space<vmem>>, vector<12x24xf32>
    %cst_35 = arith.constant dense<0.000000e+00> : vector<16x24xf32>
    %45 = tpu.matmul %42, %44, %cst_35 {dimension_numbers = #tpu.dot_dimension_numbers<[1], [0], [0], [1], [0, 0, 1, 1], [], []>} : vector<16x12xf32>, vector<12x24xf32>, vector<16x24xf32> -> vector<16x24xf32>
    %46 = arith.mulf %43, %45 : vector<16x24xf32>
    %c0_36 = arith.constant 0 : index
    %c0_37 = arith.constant 0 : index
    %c0_38 = arith.constant 0 : index
    %47 = vector.load %arg17[%c0_36, %c0_37, %c0_38] : memref<1x24x24xf32, #tpu.memory_space<vmem>>, vector<1x24x24xf32>
    %48 = vector.shape_cast %47 : vector<1x24x24xf32> to vector<24x24xf32>
    %cst_39 = arith.constant dense<0.000000e+00> : vector<16x24xf32>
    %49 = tpu.matmul %46, %48, %cst_39 {dimension_numbers = #tpu.dot_dimension_numbers<[1], [0], [0], [1], [0, 0, 1, 1], [], []>} : vector<16x24xf32>, vector<24x24xf32>, vector<16x24xf32> -> vector<16x24xf32>
    %c0_40 = arith.constant 0 : index
    %c0_41 = arith.constant 0 : index
    %c0_42 = arith.constant 0 : index
    %50 = vector.load %arg18[%c0_40, %c0_41, %c0_42] : memref<1x1x24xf32, #tpu.memory_space<vmem>>, vector<1x1x24xf32>
    %51 = vector.shape_cast %50 : vector<1x1x24xf32> to vector<1x24xf32>
    %52 = vector.broadcast %51 : vector<1x24xf32> to vector<16x24xf32>
    %53 = arith.addf %49, %52 : vector<16x24xf32>
    %54 = arith.addf %3, %53 : vector<16x24xf32>
    %c0_43 = arith.constant 0 : index
    %c0_44 = arith.constant 0 : index
    %c0_45 = arith.constant 0 : index
    %55 = vector.load %arg23[%c0_43, %c0_44, %c0_45] : memref<1x1x24xf32, #tpu.memory_space<vmem>>, vector<1x1x24xf32>
    %56 = vector.shape_cast %55 : vector<1x1x24xf32> to vector<1x24xf32>
    %c0_46 = arith.constant 0 : index
    %c0_47 = arith.constant 0 : index
    %c0_48 = arith.constant 0 : index
    %57 = vector.load %arg24[%c0_46, %c0_47, %c0_48] : memref<1x1x24xf32, #tpu.memory_space<vmem>>, vector<1x1x24xf32>
    %58 = vector.shape_cast %57 : vector<1x1x24xf32> to vector<1x24xf32>
    %cst_49 = arith.constant dense<0.000000e+00> : vector<16xf32>
    %59 = vector.multi_reduction <add>, %54, %cst_49 [1] : vector<16x24xf32> to vector<16xf32>
    %60 = vector.shape_cast %59 : vector<16xf32> to vector<16x1xf32>
    %cst_50 = arith.constant 2.400000e+01 : f32
    %61 = vector.broadcast %cst_50 : f32 to vector<16x1xf32>
    %62 = arith.divf %60, %61 : vector<16x1xf32>
    %63 = vector.broadcast %62 : vector<16x1xf32> to vector<16x24xf32>
    %64 = arith.subf %54, %63 : vector<16x24xf32>
    %65 = arith.mulf %64, %64 : vector<16x24xf32>
    %cst_51 = arith.constant dense<0.000000e+00> : vector<16xf32>
    %66 = vector.multi_reduction <add>, %65, %cst_51 [1] : vector<16x24xf32> to vector<16xf32>
    %67 = vector.shape_cast %66 : vector<16xf32> to vector<16x1xf32>
    %cst_52 = arith.constant 2.400000e+01 : f32
    %68 = vector.broadcast %cst_52 : f32 to vector<16x1xf32>
    %69 = arith.divf %67, %68 : vector<16x1xf32>
    %70 = vector.broadcast %62 : vector<16x1xf32> to vector<16x24xf32>
    %71 = arith.subf %54, %70 : vector<16x24xf32>
    %cst_53 = arith.constant 9.99999974E-6 : f32
    %72 = vector.broadcast %cst_53 : f32 to vector<16x1xf32>
    %73 = arith.addf %69, %72 : vector<16x1xf32>
    %74 = math.rsqrt %73 : vector<16x1xf32>
    %75 = vector.broadcast %74 : vector<16x1xf32> to vector<16x24xf32>
    %76 = arith.mulf %71, %75 : vector<16x24xf32>
    %77 = vector.broadcast %56 : vector<1x24xf32> to vector<16x24xf32>
    %78 = arith.mulf %76, %77 : vector<16x24xf32>
    %79 = vector.broadcast %58 : vector<1x24xf32> to vector<16x24xf32>
    %80 = arith.addf %78, %79 : vector<16x24xf32>
    %81 = arith.truncf %80 : vector<16x24xf32> to vector<16x24xbf16>
    %c0_54 = arith.constant 0 : index
    %c0_55 = arith.constant 0 : index
    %c0_56 = arith.constant 0 : index
    %82 = vector.load %arg19[%c0_54, %c0_55, %c0_56] : memref<1x24x2048xbf16, #tpu.memory_space<vmem>>, vector<1x24x2048xbf16>
    %83 = vector.shape_cast %82 : vector<1x24x2048xbf16> to vector<24x2048xbf16>
    %cst_57 = arith.constant dense<0.000000e+00> : vector<16x2048xf32>
    %84 = tpu.matmul %81, %83, %cst_57 {dimension_numbers = #tpu.dot_dimension_numbers<[1], [0], [0], [1], [0, 0, 1, 1], [], []>} : vector<16x24xbf16>, vector<24x2048xbf16>, vector<16x2048xf32> -> vector<16x2048xf32>
    %c0_58 = arith.constant 0 : index
    %c0_59 = arith.constant 0 : index
    %c0_60 = arith.constant 0 : index
    %85 = vector.load %arg20[%c0_58, %c0_59, %c0_60] : memref<1x1x2048xf32, #tpu.memory_space<vmem>>, vector<1x1x2048xf32>
    %86 = vector.shape_cast %85 : vector<1x1x2048xf32> to vector<1x2048xf32>
    %87 = vector.broadcast %86 : vector<1x2048xf32> to vector<16x2048xf32>
    %88 = arith.addf %84, %87 : vector<16x2048xf32>
    %cst_61 = arith.constant 0.000000e+00 : f32
    %89 = vector.broadcast %cst_61 : f32 to vector<16x2048xf32>
    %90 = arith.maximumf %88, %89 : vector<16x2048xf32>
    %91 = arith.truncf %90 : vector<16x2048xf32> to vector<16x2048xbf16>
    %c0_62 = arith.constant 0 : index
    %c0_63 = arith.constant 0 : index
    %c0_64 = arith.constant 0 : index
    %92 = vector.load %arg21[%c0_62, %c0_63, %c0_64] : memref<1x24x2048xbf16, #tpu.memory_space<vmem>>, vector<1x24x2048xbf16>
    %93 = vector.shape_cast %92 : vector<1x24x2048xbf16> to vector<24x2048xbf16>
    %cst_65 = arith.constant dense<0.000000e+00> : vector<16x24xf32>
    %94 = tpu.matmul %91, %93, %cst_65 {dimension_numbers = #tpu.dot_dimension_numbers<[1], [1], [0], [0], [0, 0, 1, 0], [], []>} : vector<16x2048xbf16>, vector<24x2048xbf16>, vector<16x24xf32> -> vector<16x24xf32>
    %c0_66 = arith.constant 0 : index
    %c0_67 = arith.constant 0 : index
    %c0_68 = arith.constant 0 : index
    %95 = vector.load %arg22[%c0_66, %c0_67, %c0_68] : memref<1x1x24xf32, #tpu.memory_space<vmem>>, vector<1x1x24xf32>
    %96 = vector.shape_cast %95 : vector<1x1x24xf32> to vector<1x24xf32>
    %97 = vector.broadcast %96 : vector<1x24xf32> to vector<16x24xf32>
    %98 = arith.addf %94, %97 : vector<16x24xf32>
    %99 = arith.addf %80, %98 : vector<16x24xf32>
    %c0_69 = arith.constant 0 : index
    %c0_70 = arith.constant 0 : index
    %c0_71 = arith.constant 0 : index
    %100 = vector.load %arg25[%c0_69, %c0_70, %c0_71] : memref<1x1x24xf32, #tpu.memory_space<vmem>>, vector<1x1x24xf32>
    %101 = vector.shape_cast %100 : vector<1x1x24xf32> to vector<1x24xf32>
    %c0_72 = arith.constant 0 : index
    %c0_73 = arith.constant 0 : index
    %c0_74 = arith.constant 0 : index
    %102 = vector.load %arg26[%c0_72, %c0_73, %c0_74] : memref<1x1x24xf32, #tpu.memory_space<vmem>>, vector<1x1x24xf32>
    %103 = vector.shape_cast %102 : vector<1x1x24xf32> to vector<1x24xf32>
    %cst_75 = arith.constant dense<0.000000e+00> : vector<16xf32>
    %104 = vector.multi_reduction <add>, %99, %cst_75 [1] : vector<16x24xf32> to vector<16xf32>
    %105 = vector.shape_cast %104 : vector<16xf32> to vector<16x1xf32>
    %cst_76 = arith.constant 2.400000e+01 : f32
    %106 = vector.broadcast %cst_76 : f32 to vector<16x1xf32>
    %107 = arith.divf %105, %106 : vector<16x1xf32>
    %108 = vector.broadcast %107 : vector<16x1xf32> to vector<16x24xf32>
    %109 = arith.subf %99, %108 : vector<16x24xf32>
    %110 = arith.mulf %109, %109 : vector<16x24xf32>
    %cst_77 = arith.constant dense<0.000000e+00> : vector<16xf32>
    %111 = vector.multi_reduction <add>, %110, %cst_77 [1] : vector<16x24xf32> to vector<16xf32>
    %112 = vector.shape_cast %111 : vector<16xf32> to vector<16x1xf32>
    %cst_78 = arith.constant 2.400000e+01 : f32
    %113 = vector.broadcast %cst_78 : f32 to vector<16x1xf32>
    %114 = arith.divf %112, %113 : vector<16x1xf32>
    %115 = vector.broadcast %107 : vector<16x1xf32> to vector<16x24xf32>
    %116 = arith.subf %99, %115 : vector<16x24xf32>
    %cst_79 = arith.constant 9.99999974E-6 : f32
    %117 = vector.broadcast %cst_79 : f32 to vector<16x1xf32>
    %118 = arith.addf %114, %117 : vector<16x1xf32>
    %119 = math.rsqrt %118 : vector<16x1xf32>
    %120 = vector.broadcast %119 : vector<16x1xf32> to vector<16x24xf32>
    %121 = arith.mulf %116, %120 : vector<16x24xf32>
    %122 = vector.broadcast %101 : vector<1x24xf32> to vector<16x24xf32>
    %123 = arith.mulf %121, %122 : vector<16x24xf32>
    %124 = vector.broadcast %103 : vector<1x24xf32> to vector<16x24xf32>
    %125 = arith.addf %123, %124 : vector<16x24xf32>
    %c0_80 = arith.constant 0 : index
    %c0_81 = arith.constant 0 : index
    %126 = vector.load %arg42[%c0_80, %c0_81] : memref<16x24xf32, #tpu.memory_space<vmem>>, vector<16x24xf32>
    tpu.vector_store %arg42[%c0_80, %c0_81], %125 {strides = array<i32>} : memref<16x24xf32, #tpu.memory_space<vmem>>, vector<16x24xf32>,
    %c5_i32 = arith.constant 5 : i32
    %127 = arith.cmpi eq, %arg0, %c5_i32 : i32
    %128 = arith.extui %127 : i1 to i32
    %c0_i32_82 = arith.constant 0 : i32
    %129 = arith.cmpi ne, %128, %c0_i32_82 : i32
    scf.if %129 {
      %130 = vector.extract_strided_slice %125 {offsets = [0, 0], sizes = [8, 24], strides = [1, 1]} : vector<16x24xf32> to vector<8x24xf32>
      %cst_83 = arith.constant dense<0xFF800000> : vector<24xf32>
      %131 = vector.multi_reduction <maximumf>, %130, %cst_83 [0] : vector<8x24xf32> to vector<24xf32>
      %132 = vector.shape_cast %131 : vector<24xf32> to vector<1x24xf32>
      %133 = vector.extract_strided_slice %125 {offsets = [8, 0], sizes = [8, 24], strides = [1, 1]} : vector<16x24xf32> to vector<8x24xf32>
      %cst_84 = arith.constant dense<0xFF800000> : vector<24xf32>
      %134 = vector.multi_reduction <maximumf>, %133, %cst_84 [0] : vector<8x24xf32> to vector<24xf32>
      %135 = vector.shape_cast %134 : vector<24xf32> to vector<1x24xf32>
      %136 = tpu.concatenate %132, %135 in 0 : vector<1x24xf32>, vector<1x24xf32> -> vector<2x24xf32>
      %c0_85 = arith.constant 0 : index
      %c0_86 = arith.constant 0 : index
      %137 = vector.load %arg27[%c0_85, %c0_86] : memref<24x64xf32, #tpu.memory_space<vmem>>, vector<24x64xf32>
      %c0_87 = arith.constant 0 : index
      %c0_88 = arith.constant 0 : index
      %138 = vector.load %arg28[%c0_87, %c0_88] : memref<1x64xf32, #tpu.memory_space<vmem>>, vector<1x64xf32>
      %c0_89 = arith.constant 0 : index
      %c0_90 = arith.constant 0 : index
      %139 = vector.load %arg29[%c0_89, %c0_90] : memref<64x6xf32, #tpu.memory_space<vmem>>, vector<64x6xf32>
      %c0_91 = arith.constant 0 : index
      %c0_92 = arith.constant 0 : index
      %140 = vector.load %arg30[%c0_91, %c0_92] : memref<1x6xf32, #tpu.memory_space<vmem>>, vector<1x6xf32>
      %cst_93 = arith.constant dense<0.000000e+00> : vector<2x64xf32>
      %141 = tpu.matmul %136, %137, %cst_93 {dimension_numbers = #tpu.dot_dimension_numbers<[1], [0], [0], [1], [0, 0, 1, 1], [], []>} : vector<2x24xf32>, vector<24x64xf32>, vector<2x64xf32> -> vector<2x64xf32>
      %142 = vector.broadcast %138 : vector<1x64xf32> to vector<2x64xf32>
      %143 = arith.addf %141, %142 : vector<2x64xf32>
      %cst_94 = arith.constant 0.000000e+00 : f32
      %144 = vector.broadcast %cst_94 : f32 to vector<2x64xf32>
      %145 = arith.maximumf %143, %144 : vector<2x64xf32>
      %cst_95 = arith.constant dense<0.000000e+00> : vector<2x6xf32>
      %146 = tpu.matmul %145, %139, %cst_95 {dimension_numbers = #tpu.dot_dimension_numbers<[1], [0], [0], [1], [0, 0, 1, 1], [], []>} : vector<2x64xf32>, vector<64x6xf32>, vector<2x6xf32> -> vector<2x6xf32>
      %147 = vector.broadcast %140 : vector<1x6xf32> to vector<2x6xf32>
      %148 = arith.addf %146, %147 : vector<2x6xf32>
      %c0_96 = arith.constant 0 : index
      %c0_97 = arith.constant 0 : index
      %149 = vector.load %arg31[%c0_96, %c0_97] : memref<24x64xf32, #tpu.memory_space<vmem>>, vector<24x64xf32>
      %c0_98 = arith.constant 0 : index
      %c0_99 = arith.constant 0 : index
      %150 = vector.load %arg32[%c0_98, %c0_99] : memref<1x64xf32, #tpu.memory_space<vmem>>, vector<1x64xf32>
      %c0_100 = arith.constant 0 : index
      %c0_101 = arith.constant 0 : index
      %151 = vector.load %arg33[%c0_100, %c0_101] : memref<64x36xf32, #tpu.memory_space<vmem>>, vector<64x36xf32>
      %c0_102 = arith.constant 0 : index
      %c0_103 = arith.constant 0 : index
      %152 = vector.load %arg34[%c0_102, %c0_103] : memref<1x36xf32, #tpu.memory_space<vmem>>, vector<1x36xf32>
      %cst_104 = arith.constant dense<0.000000e+00> : vector<2x64xf32>
      %153 = tpu.matmul %136, %149, %cst_104 {dimension_numbers = #tpu.dot_dimension_numbers<[1], [0], [0], [1], [0, 0, 1, 1], [], []>} : vector<2x24xf32>, vector<24x64xf32>, vector<2x64xf32> -> vector<2x64xf32>
      %154 = vector.broadcast %150 : vector<1x64xf32> to vector<2x64xf32>
      %155 = arith.addf %153, %154 : vector<2x64xf32>
      %cst_105 = arith.constant 0.000000e+00 : f32
      %156 = vector.broadcast %cst_105 : f32 to vector<2x64xf32>
      %157 = arith.maximumf %155, %156 : vector<2x64xf32>
      %cst_106 = arith.constant dense<0.000000e+00> : vector<2x36xf32>
      %158 = tpu.matmul %157, %151, %cst_106 {dimension_numbers = #tpu.dot_dimension_numbers<[1], [0], [0], [1], [0, 0, 1, 1], [], []>} : vector<2x64xf32>, vector<64x36xf32>, vector<2x36xf32> -> vector<2x36xf32>
      %159 = vector.broadcast %152 : vector<1x36xf32> to vector<2x36xf32>
      %160 = arith.addf %158, %159 : vector<2x36xf32>
      %cst_107 = arith.constant 5.000000e-01 : f32
      %161 = vector.broadcast %cst_107 : f32 to vector<2x36xf32>
      %162 = arith.mulf %161, %160 : vector<2x36xf32>
      %163 = math.exp %162 : vector<2x36xf32>
      %c0_108 = arith.constant 0 : index
      %c0_109 = arith.constant 0 : index
      %164 = vector.load %arg2[%c0_108, %c0_109] : memref<2x6xf32, #tpu.memory_space<vmem>>, vector<2x6xf32>
      %165 = tpu.concatenate %164, %164, %164, %164, %164, %164 in 1 : vector<2x6xf32>, vector<2x6xf32>, vector<2x6xf32>, vector<2x6xf32>, vector<2x6xf32>, vector<2x6xf32> -> vector<2x36xf32>
      %166 = tpu.iota {dimensions = array<i32: 0>} : vector<36x6xi32>
      %167 = tpu.iota {dimensions = array<i32: 1>} : vector<36x6xi32>
      %c6_i32 = arith.constant 6 : i32
      %168 = vector.broadcast %c6_i32 : i32 to vector<36x6xi32>
      %169 = arith.muli %167, %168 : vector<36x6xi32>
      %170 = arith.cmpi sge, %166, %169 : vector<36x6xi32>
      %c1_i32 = arith.constant 1 : i32
      %171 = vector.broadcast %c1_i32 : i32 to vector<36x6xi32>
      %172 = arith.addi %167, %171 : vector<36x6xi32>
      %c6_i32_110 = arith.constant 6 : i32
      %173 = vector.broadcast %c6_i32_110 : i32 to vector<36x6xi32>
      %174 = arith.muli %172, %173 : vector<36x6xi32>
      %175 = arith.cmpi slt, %166, %174 : vector<36x6xi32>
      %176 = arith.andi %170, %175 : vector<36x6xi1>
      %177 = arith.extui %176 : vector<36x6xi1> to vector<36x6xi32>
      %178 = arith.sitofp %177 : vector<36x6xi32> to vector<36x6xf32>
      %179 = arith.mulf %163, %165 : vector<2x36xf32>
      %cst_111 = arith.constant dense<0.000000e+00> : vector<2x6xf32>
      %180 = tpu.matmul %179, %178, %cst_111 {dimension_numbers = #tpu.dot_dimension_numbers<[1], [0], [0], [1], [0, 0, 1, 1], [], []>} : vector<2x36xf32>, vector<36x6xf32>, vector<2x6xf32> -> vector<2x6xf32>
      %181 = arith.addf %180, %148 : vector<2x6xf32>
      %c0_112 = arith.constant 0 : index
      %c0_113 = arith.constant 0 : index
      %182 = vector.load %arg35[%c0_112, %c0_113] : memref<6x64xf32, #tpu.memory_space<vmem>>, vector<6x64xf32>
      %c0_114 = arith.constant 0 : index
      %c0_115 = arith.constant 0 : index
      %183 = vector.load %arg36[%c0_114, %c0_115] : memref<1x64xf32, #tpu.memory_space<vmem>>, vector<1x64xf32>
      %c0_116 = arith.constant 0 : index
      %c0_117 = arith.constant 0 : index
      %184 = vector.load %arg37[%c0_116, %c0_117] : memref<64x96xf32, #tpu.memory_space<vmem>>, vector<64x96xf32>
      %c0_118 = arith.constant 0 : index
      %c0_119 = arith.constant 0 : index
      %185 = vector.load %arg38[%c0_118, %c0_119] : memref<1x96xf32, #tpu.memory_space<vmem>>, vector<1x96xf32>
      %cst_120 = arith.constant dense<0.000000e+00> : vector<2x64xf32>
      %186 = tpu.matmul %181, %182, %cst_120 {dimension_numbers = #tpu.dot_dimension_numbers<[1], [0], [0], [1], [0, 0, 1, 1], [], []>} : vector<2x6xf32>, vector<6x64xf32>, vector<2x64xf32> -> vector<2x64xf32>
      %187 = vector.broadcast %183 : vector<1x64xf32> to vector<2x64xf32>
      %188 = arith.addf %186, %187 : vector<2x64xf32>
      %cst_121 = arith.constant 0.000000e+00 : f32
      %189 = vector.broadcast %cst_121 : f32 to vector<2x64xf32>
      %190 = arith.maximumf %188, %189 : vector<2x64xf32>
      %cst_122 = arith.constant dense<0.000000e+00> : vector<2x96xf32>
      %191 = tpu.matmul %190, %184, %cst_122 {dimension_numbers = #tpu.dot_dimension_numbers<[1], [0], [0], [1], [0, 0, 1, 1], [], []>} : vector<2x64xf32>, vector<64x96xf32>, vector<2x96xf32> -> vector<2x96xf32>
      %192 = vector.broadcast %185 : vector<1x96xf32> to vector<2x96xf32>
      %193 = arith.addf %191, %192 : vector<2x96xf32>
      %c0_123 = arith.constant 0 : index
      %c0_124 = arith.constant 0 : index
      %194 = vector.load %arg39[%c0_123, %c0_124] : memref<2x96xf32, #tpu.memory_space<vmem>>, vector<2x96xf32>
      tpu.vector_store %arg39[%c0_123, %c0_124], %193 {strides = array<i32>} : memref<2x96xf32, #tpu.memory_space<vmem>>, vector<2x96xf32>,
      %c0_125 = arith.constant 0 : index
      %c0_126 = arith.constant 0 : index
      %195 = vector.load %arg40[%c0_125, %c0_126] : memref<2x6xf32, #tpu.memory_space<vmem>>, vector<2x6xf32>
      tpu.vector_store %arg40[%c0_125, %c0_126], %148 {strides = array<i32>} : memref<2x6xf32, #tpu.memory_space<vmem>>, vector<2x6xf32>,
      %c0_127 = arith.constant 0 : index
      %c0_128 = arith.constant 0 : index
      %196 = vector.load %arg41[%c0_127, %c0_128] : memref<2x36xf32, #tpu.memory_space<vmem>>, vector<2x36xf32>
      tpu.vector_store %arg41[%c0_127, %c0_128], %160 {strides = array<i32>} : memref<2x36xf32, #tpu.memory_space<vmem>>, vector<2x36xf32>,
    } else {
    }
    return
  }
  func.func @transform_0(%arg0: i32) -> (i32, i32) {
    %c0_i32 = arith.constant 0 : i32
    %c0_i32_0 = arith.constant 0 : i32
    %c0_i32_1 = arith.constant 0 : i32
    return %c0_i32, %c0_i32_0 : i32, i32
  }
  func.func @transform_1(%arg0: i32) -> (i32, i32) {
    %c0_i32 = arith.constant 0 : i32
    %c0_i32_0 = arith.constant 0 : i32
    %c0_i32_1 = arith.constant 0 : i32
    return %c0_i32, %c0_i32_0 : i32, i32
  }
  func.func @transform_2(%arg0: i32) -> (i32, i32) {
    %c0_i32 = arith.constant 0 : i32
    %c0_i32_0 = arith.constant 0 : i32
    %c0_i32_1 = arith.constant 0 : i32
    return %c0_i32, %c0_i32_0 : i32, i32
  }
  func.func @transform_3(%arg0: i32) -> (i32, i32) {
    %c0_i32 = arith.constant 0 : i32
    %c0_i32_0 = arith.constant 0 : i32
    %c0_i32_1 = arith.constant 0 : i32
    return %c0_i32, %c0_i32_0 : i32, i32
  }
  func.func @transform_4(%arg0: i32) -> (i32, i32) {
    %c0_i32 = arith.constant 0 : i32
    %c0_i32_0 = arith.constant 0 : i32
    %c0_i32_1 = arith.constant 0 : i32
    return %c0_i32, %c0_i32_0 : i32, i32
  }
  func.func @transform_5(%arg0: i32) -> (i32, i32) {
    %c0_i32 = arith.constant 0 : i32
    %c0_i32_0 = arith.constant 0 : i32
    %c0_i32_1 = arith.constant 0 : i32
    return %c0_i32, %c0_i32_0 : i32, i32
  }
  func.func @transform_6(%arg0: i32) -> (i32, i32) {
    %c0_i32 = arith.constant 0 : i32
    %c0_i32_0 = arith.constant 0 : i32
    %c0_i32_1 = arith.constant 0 : i32
    return %c0_i32, %c0_i32_0 : i32, i32
  }
  func.func @transform_7(%arg0: i32) -> (i32, i32) {
    %c0_i32 = arith.constant 0 : i32
    %c0_i32_0 = arith.constant 0 : i32
    %c0_i32_1 = arith.constant 0 : i32
    return %c0_i32, %c0_i32_0 : i32, i32
  }
  func.func @transform_8(%arg0: i32) -> (i32, i32) {
    %c0_i32 = arith.constant 0 : i32
    %c0_i32_0 = arith.constant 0 : i32
    %c0_i32_1 = arith.constant 0 : i32
    return %c0_i32, %c0_i32_0 : i32, i32
  }
  func.func @transform_9(%arg0: i32) -> (i32, i32) {
    %c0_i32 = arith.constant 0 : i32
    %c0_i32_0 = arith.constant 0 : i32
    %c0_i32_1 = arith.constant 0 : i32
    return %c0_i32, %c0_i32_0 : i32, i32
  }
  func.func @transform_10(%arg0: i32) -> (i32, i32, i32) {
    %c0_i32 = arith.constant 0 : i32
    %c0_i32_0 = arith.constant 0 : i32
    %c0_i32_1 = arith.constant 0 : i32
    return %arg0, %c0_i32, %c0_i32_0 : i32, i32, i32
  }
  func.func @transform_11(%arg0: i32) -> (i32, i32, i32) {
    %c0_i32 = arith.constant 0 : i32
    %c0_i32_0 = arith.constant 0 : i32
    %c0_i32_1 = arith.constant 0 : i32
    return %arg0, %c0_i32, %c0_i32_0 : i32, i32, i32
  }
  func.func @transform_12(%arg0: i32) -> (i32, i32, i32) {
    %c0_i32 = arith.constant 0 : i32
    %c0_i32_0 = arith.constant 0 : i32
    %c0_i32_1 = arith.constant 0 : i32
    return %arg0, %c0_i32, %c0_i32_0 : i32, i32, i32
  }
  func.func @transform_13(%arg0: i32) -> (i32, i32, i32) {
    %c0_i32 = arith.constant 0 : i32
    %c0_i32_0 = arith.constant 0 : i32
    %c0_i32_1 = arith.constant 0 : i32
    return %arg0, %c0_i32, %c0_i32_0 : i32, i32, i32
  }
  func.func @transform_14(%arg0: i32) -> (i32, i32, i32) {
    %c0_i32 = arith.constant 0 : i32
    %c0_i32_0 = arith.constant 0 : i32
    %c0_i32_1 = arith.constant 0 : i32
    return %arg0, %c0_i32, %c0_i32_0 : i32, i32, i32
  }
  func.func @transform_15(%arg0: i32) -> (i32, i32, i32) {
    %c0_i32 = arith.constant 0 : i32
    %c0_i32_0 = arith.constant 0 : i32
    %c0_i32_1 = arith.constant 0 : i32
    return %arg0, %c0_i32, %c0_i32_0 : i32, i32, i32
  }
  func.func @transform_16(%arg0: i32) -> (i32, i32, i32) {
    %c0_i32 = arith.constant 0 : i32
    %c0_i32_0 = arith.constant 0 : i32
    %c0_i32_1 = arith.constant 0 : i32
    return %arg0, %c0_i32, %c0_i32_0 : i32, i32, i32
  }
  func.func @transform_17(%arg0: i32) -> (i32, i32, i32) {
    %c0_i32 = arith.constant 0 : i32
    %c0_i32_0 = arith.constant 0 : i32
    %c0_i32_1 = arith.constant 0 : i32
    return %arg0, %c0_i32, %c0_i32_0 : i32, i32, i32
  }
  func.func @transform_18(%arg0: i32) -> (i32, i32, i32) {
    %c0_i32 = arith.constant 0 : i32
    %c0_i32_0 = arith.constant 0 : i32
    %c0_i32_1 = arith.constant 0 : i32
    return %arg0, %c0_i32, %c0_i32_0 : i32, i32, i32
  }
  func.func @transform_19(%arg0: i32) -> (i32, i32, i32) {
    %c0_i32 = arith.constant 0 : i32
    %c0_i32_0 = arith.constant 0 : i32
    %c0_i32_1 = arith.constant 0 : i32
    return %arg0, %c0_i32, %c0_i32_0 : i32, i32, i32
  }
  func.func @transform_20(%arg0: i32) -> (i32, i32, i32) {
    %c0_i32 = arith.constant 0 : i32
    %c0_i32_0 = arith.constant 0 : i32
    %c0_i32_1 = arith.constant 0 : i32
    return %arg0, %c0_i32, %c0_i32_0 : i32, i32, i32
  }
  func.func @transform_21(%arg0: i32) -> (i32, i32, i32) {
    %c0_i32 = arith.constant 0 : i32
    %c0_i32_0 = arith.constant 0 : i32
    %c0_i32_1 = arith.constant 0 : i32
    return %arg0, %c0_i32, %c0_i32_0 : i32, i32, i32
  }
  func.func @transform_22(%arg0: i32) -> (i32, i32, i32) {
    %c0_i32 = arith.constant 0 : i32
    %c0_i32_0 = arith.constant 0 : i32
    %c0_i32_1 = arith.constant 0 : i32
    return %arg0, %c0_i32, %c0_i32_0 : i32, i32, i32
  }
  func.func @transform_23(%arg0: i32) -> (i32, i32, i32) {
    %c0_i32 = arith.constant 0 : i32
    %c0_i32_0 = arith.constant 0 : i32
    %c0_i32_1 = arith.constant 0 : i32
    return %arg0, %c0_i32, %c0_i32_0 : i32, i32, i32
  }
  func.func @transform_24(%arg0: i32) -> (i32, i32, i32) {
    %c0_i32 = arith.constant 0 : i32
    %c0_i32_0 = arith.constant 0 : i32
    %c0_i32_1 = arith.constant 0 : i32
    return %arg0, %c0_i32, %c0_i32_0 : i32, i32, i32
  }
  func.func @transform_25(%arg0: i32) -> (i32, i32, i32) {
    %c0_i32 = arith.constant 0 : i32
    %c0_i32_0 = arith.constant 0 : i32
    %c0_i32_1 = arith.constant 0 : i32
    return %arg0, %c0_i32, %c0_i32_0 : i32, i32, i32
  }
  func.func @transform_26(%arg0: i32) -> (i32, i32) {
    %c0_i32 = arith.constant 0 : i32
    %c0_i32_0 = arith.constant 0 : i32
    %c0_i32_1 = arith.constant 0 : i32
    return %c0_i32, %c0_i32_0 : i32, i32
  }
  func.func @transform_27(%arg0: i32) -> (i32, i32) {
    %c0_i32 = arith.constant 0 : i32
    %c0_i32_0 = arith.constant 0 : i32
    %c0_i32_1 = arith.constant 0 : i32
    return %c0_i32, %c0_i32_0 : i32, i32
  }
  func.func @transform_28(%arg0: i32) -> (i32, i32) {
    %c0_i32 = arith.constant 0 : i32
    %c0_i32_0 = arith.constant 0 : i32
    %c0_i32_1 = arith.constant 0 : i32
    return %c0_i32, %c0_i32_0 : i32, i32
  }
  func.func @transform_29(%arg0: i32) -> (i32, i32) {
    %c0_i32 = arith.constant 0 : i32
    %c0_i32_0 = arith.constant 0 : i32
    %c0_i32_1 = arith.constant 0 : i32
    return %c0_i32, %c0_i32_0 : i32, i32
  }
  func.func @transform_30(%arg0: i32) -> (i32, i32) {
    %c0_i32 = arith.constant 0 : i32
    %c0_i32_0 = arith.constant 0 : i32
    %c0_i32_1 = arith.constant 0 : i32
    return %c0_i32, %c0_i32_0 : i32, i32
  }
  func.func @transform_31(%arg0: i32) -> (i32, i32) {
    %c0_i32 = arith.constant 0 : i32
    %c0_i32_0 = arith.constant 0 : i32
    %c0_i32_1 = arith.constant 0 : i32
    return %c0_i32, %c0_i32_0 : i32, i32
  }
  func.func @transform_32(%arg0: i32) -> (i32, i32) {
    %c0_i32 = arith.constant 0 : i32
    %c0_i32_0 = arith.constant 0 : i32
    %c0_i32_1 = arith.constant 0 : i32
    return %c0_i32, %c0_i32_0 : i32, i32
  }
  func.func @transform_33(%arg0: i32) -> (i32, i32) {
    %c0_i32 = arith.constant 0 : i32
    %c0_i32_0 = arith.constant 0 : i32
    %c0_i32_1 = arith.constant 0 : i32
    return %c0_i32, %c0_i32_0 : i32, i32
  }
  func.func @transform_34(%arg0: i32) -> (i32, i32) {
    %c0_i32 = arith.constant 0 : i32
    %c0_i32_0 = arith.constant 0 : i32
    %c0_i32_1 = arith.constant 0 : i32
    return %c0_i32, %c0_i32_0 : i32, i32
  }
  func.func @transform_35(%arg0: i32) -> (i32, i32) {
    %c0_i32 = arith.constant 0 : i32
    %c0_i32_0 = arith.constant 0 : i32
    %c0_i32_1 = arith.constant 0 : i32
    return %c0_i32, %c0_i32_0 : i32, i32
  }
  func.func @transform_36(%arg0: i32) -> (i32, i32) {
    %c0_i32 = arith.constant 0 : i32
    %c0_i32_0 = arith.constant 0 : i32
    %c0_i32_1 = arith.constant 0 : i32
    return %c0_i32, %c0_i32_0 : i32, i32
  }
  func.func @transform_37(%arg0: i32) -> (i32, i32) {
    %c0_i32 = arith.constant 0 : i32
    %c0_i32_0 = arith.constant 0 : i32
    %c0_i32_1 = arith.constant 0 : i32
    return %c0_i32, %c0_i32_0 : i32, i32
  }
  func.func @transform_38(%arg0: i32) -> (i32, i32) {
    %c0_i32 = arith.constant 0 : i32
    %c0_i32_0 = arith.constant 0 : i32
    %c0_i32_1 = arith.constant 0 : i32
    return %c0_i32, %c0_i32_0 : i32, i32
  }
  func.func @transform_39(%arg0: i32) -> (i32, i32) {
    %c0_i32 = arith.constant 0 : i32
    %c0_i32_0 = arith.constant 0 : i32
    %c0_i32_1 = arith.constant 0 : i32
    return %c0_i32, %c0_i32_0 : i32, i32
  }
  func.func @transform_40(%arg0: i32) -> (i32, i32) {
    %c0_i32 = arith.constant 0 : i32
    %c0_i32_0 = arith.constant 0 : i32
    %c0_i32_1 = arith.constant 0 : i32
    return %c0_i32, %c0_i32_0 : i32, i32
  }
}

</mosaic_0001>

<llo_original>
// kernel: tile.9
$region0: #{tile.9}
  %s0 = inlined_call_operand.vmem [shape: f32[16,12,16], index: 0, kind: input, shape index: {}]
  %s1 = inlined_call_operand.vmem [shape: f32[16,192], index: 1, kind: output, shape index: {}]
  %v2 = vld [vmem:[%s0] ss:$8 sm:$0xf]
  %v3 = vld [vmem:[%s0] ss:$8 sm:$0xf0]
  %vm4 = vcmask 1047556
  %v5 = vsel %vm4, %v3, %v2
  %vm6 = vcmask 130048
  %7 = vst.msk [vmem:[%s1] ss:$8 sm:$0x3] %vm6, %v5
  %s8 = scalar_lea.vmem %s1, 4294967281
  %9 = vst.msk [vmem:[%s8] ss:$8 sm:$0xc] %vm6, %v5
  %s10 = scalar_lea.vmem %s1, 4294967266
  %11 = vst.msk [vmem:[%s10] ss:$8 sm:$0x30] %vm6, %v5
  %s12 = scalar_lea.vmem %s1, 4294967251
  %13 = vst.msk [vmem:[%s12] ss:$8 sm:$0xc0] %vm6, %v5
  %s14 = scalar_lea.vmem %s0, 64
  %v15 = vld [vmem:[%s14] ss:$8 sm:$0xf]
  %s16 = scalar_lea.vmem %s0, 64
  %v17 = vld [vmem:[%s16] ss:$8 sm:$0xf0]
  %vm18 = vcmask 1047556
  %v19 = vsel %vm18, %v17, %v15
  %vm20 = vcmask 130048
  %s21 = scalar_lea.vmem %s1, 4
  %22 = vst.msk [vmem:[%s21] ss:$8 sm:$0x3] %vm20, %v19
  %s23 = scalar_lea.vmem %s1, 4294967285
  %24 = vst.msk [vmem:[%s23] ss:$8 sm:$0xc] %vm20, %v19
  %s25 = scalar_lea.vmem %s1, 4294967270
  %26 = vst.msk [vmem:[%s25] ss:$8 sm:$0x30] %vm20, %v19
  %s27 = scalar_lea.vmem %s1, 4294967255
  %28 = vst.msk [vmem:[%s27] ss:$8 sm:$0xc0] %vm20, %v19
  %s29 = scalar_lea.vmem %s0, 128
  %v30 = vld [vmem:[%s29] ss:$8 sm:$0xf]
  %s31 = scalar_lea.vmem %s0, 128
  %v32 = vld [vmem:[%s31] ss:$8 sm:$0xf0]
  %vm33 = vcmask 1047556
  %v34 = vsel %vm33, %v32, %v30
  %vm35 = vcmask 130048
  %s36 = scalar_lea.vmem %s1, 16
  %37 = vst.msk [vmem:[%s36] ss:$8 sm:$0x3] %vm35, %v34
  %s38 = scalar_lea.vmem %s1, 1
  %39 = vst.msk [vmem:[%s38] ss:$8 sm:$0xc] %vm35, %v34
  %s40 = scalar_lea.vmem %s1, 4294967282
  %41 = vst.msk [vmem:[%s40] ss:$8 sm:$0x30] %vm35, %v34
  %s42 = scalar_lea.vmem %s1, 4294967267
  %43 = vst.msk [vmem:[%s42] ss:$8 sm:$0xc0] %vm35, %v34
  %s44 = scalar_lea.vmem %s0, 192
  %v45 = vld [vmem:[%s44] ss:$8 sm:$0xf]
  %s46 = scalar_lea.vmem %s0, 192
  %v47 = vld [vmem:[%s46] ss:$8 sm:$0xf0]
  %vm48 = vcmask 1047556
  %v49 = vsel %vm48, %v47, %v45
  %vm50 = vcmask 130048
  %s51 = scalar_lea.vmem %s1, 20
  %52 = vst.msk [vmem:[%s51] ss:$8 sm:$0x3] %vm50, %v49
  %s53 = scalar_lea.vmem %s1, 5
  %54 = vst.msk [vmem:[%s53] ss:$8 sm:$0xc] %vm50, %v49
  %s55 = scalar_lea.vmem %s1, 4294967286
  %56 = vst.msk [vmem:[%s55] ss:$8 sm:$0x30] %vm50, %v49
  %s57 = scalar_lea.vmem %s1, 4294967271
  %58 = vst.msk [vmem:[%s57] ss:$8 sm:$0xc0] %vm50, %v49
  %s59 = scalar_lea.vmem %s0, 7
  %s60 = smov 3
  %v61 = vld [vmem:[%s59] ss:$16 sm:%s60]
  %s62 = scalar_lea.vmem %s0, 7
  %s63 = smov 12
  %v64 = vld [vmem:[%s62] ss:$16 sm:%s63]
  %vm65 = vcmask 1043458
  %v66 = vsel %vm65, %v64, %v61
  %s67 = scalar_lea.vmem %s0, 7
  %s68 = smov 48
  %v69 = vld [vmem:[%s67] ss:$16 sm:%s68]
  %vm70 = vcmask 1045508
  %v71 = vsel %vm70, %v69, %v66
  %s72 = scalar_lea.vmem %s0, 7
  %s73 = smov 192
  %v74 = vld [vmem:[%s72] ss:$16 sm:%s73]
  %vm75 = vcmask 1047558
  %v76 = vsel %vm75, %v74, %v71
  %77 = vrot.lane.b32.xlu0 %v76, 112
  %v78 = vpop.permute.xlu0 %77
  %vm79 = vcmask 1048448
  %80 = vst.msk [vmem:[%s1] sm:$0xff] %vm79, %v78
  %s81 = scalar_lea.vmem %s0, 135
  %s82 = smov 3
  %v83 = vld [vmem:[%s81] ss:$16 sm:%s82]
  %s84 = scalar_lea.vmem %s0, 135
  %s85 = smov 12
  %v86 = vld [vmem:[%s84] ss:$16 sm:%s85]
  %vm87 = vcmask 1043458
  %v88 = vsel %vm87, %v86, %v83
  %s89 = scalar_lea.vmem %s0, 135
  %s90 = smov 48
  %v91 = vld [vmem:[%s89] ss:$16 sm:%s90]
  %vm92 = vcmask 1045508
  %v93 = vsel %vm92, %v91, %v88
  %s94 = scalar_lea.vmem %s0, 135
  %s95 = smov 192
  %v96 = vld [vmem:[%s94] ss:$16 sm:%s95]
  %vm97 = vcmask 1047558
  %v98 = vsel %vm97, %v96, %v93
  %99 = vrot.lane.b32.xlu0 %v98, 112
  %v100 = vpop.permute.xlu0 %99
  %vm101 = vcmask 1048448
  %s102 = scalar_lea.vmem %s1, 16
  %103 = vst.msk [vmem:[%s102] sm:$0xff] %vm101, %v100
  %s104 = scalar_lea.vmem %s0, 6
  %s105 = smov 3
  %v106 = vld [vmem:[%s104] ss:$16 sm:%s105]
  %s107 = scalar_lea.vmem %s0, 6
  %s108 = smov 12
  %v109 = vld [vmem:[%s107] ss:$16 sm:%s108]
  %vm110 = vcmask 1043458
  %v111 = vsel %vm110, %v109, %v106
  %s112 = scalar_lea.vmem %s0, 6
  %s113 = smov 48
  %v114 = vld [vmem:[%s112] ss:$16 sm:%s113]
  %vm115 = vcmask 1045508
  %v116 = vsel %vm115, %v114, %v111
  %s117 = scalar_lea.vmem %s0, 6
  %s118 = smov 192
  %v119 = vld [vmem:[%s117] ss:$16 sm:%s118]
  %vm120 = vcmask 1047558
  %v121 = vsel %vm120, %v119, %v116
  %122 = vrot.lane.b32.xlu0 %v121, 96
  %v123 = vpop.permute.xlu0 %122
  %vm124 = vcmask 917248
  %125 = vst.msk [vmem:[%s1] sm:$0xff] %vm124, %v123
  %s126 = scalar_lea.vmem %s0, 134
  %s127 = smov 3
  %v128 = vld [vmem:[%s126] ss:$16 sm:%s127]
  %s129 = scalar_lea.vmem %s0, 134
  %s130 = smov 12
  %v131 = vld [vmem:[%s129] ss:$16 sm:%s130]
  %vm132 = vcmask 1043458
  %v133 = vsel %vm132, %v131, %v128
  %s134 = scalar_lea.vmem %s0, 134
  %s135 = smov 48
  %v136 = vld [vmem:[%s134] ss:$16 sm:%s135]
  %vm137 = vcmask 1045508
  %v138 = vsel %vm137, %v136, %v133
  %s139 = scalar_lea.vmem %s0, 134
  %s140 = smov 192
  %v141 = vld [vmem:[%s139] ss:$16 sm:%s140]
  %vm142 = vcmask 1047558
  %v143 = vsel %vm142, %v141, %v138
  %144 = vrot.lane.b32.xlu0 %v143, 96
  %v145 = vpop.permute.xlu0 %144
  %vm146 = vcmask 917248
  %s147 = scalar_lea.vmem %s1, 16
  %148 = vst.msk [vmem:[%s147] sm:$0xff] %vm146, %v145
  %s149 = scalar_lea.vmem %s0, 5
  %s150 = smov 3
  %v151 = vld [vmem:[%s149] ss:$16 sm:%s150]
  %s152 = scalar_lea.vmem %s0, 5
  %s153 = smov 12
  %v154 = vld [vmem:[%s152] ss:$16 sm:%s153]
  %vm155 = vcmask 1043458
  %v156 = vsel %vm155, %v154, %v151
  %s157 = scalar_lea.vmem %s0, 5
  %s158 = smov 48
  %v159 = vld [vmem:[%s157] ss:$16 sm:%s158]
  %vm160 = vcmask 1045508
  %v161 = vsel %vm160, %v159, %v156
  %s162 = scalar_lea.vmem %s0, 5
  %s163 = smov 192
  %v164 = vld [vmem:[%s162] ss:$16 sm:%s163]
  %vm165 = vcmask 1047558
  %v166 = vsel %vm165, %v164, %v161
  %167 = vrot.lane.b32.xlu0 %v166, 80
  %v168 = vpop.permute.xlu0 %167
  %vm169 = vcmask 786048
  %170 = vst.msk [vmem:[%s1] sm:$0xff] %vm169, %v168
  %s171 = scalar_lea.vmem %s0, 133
  %s172 = smov 3
  %v173 = vld [vmem:[%s171] ss:$16 sm:%s172]
  %s174 = scalar_lea.vmem %s0, 133
  %s175 = smov 12
  %v176 = vld [vmem:[%s174] ss:$16 sm:%s175]
  %vm177 = vcmask 1043458
  %v178 = vsel %vm177, %v176, %v173
  %s179 = scalar_lea.vmem %s0, 133
  %s180 = smov 48
  %v181 = vld [vmem:[%s179] ss:$16 sm:%s180]
  %vm182 = vcmask 1045508
  %v183 = vsel %vm182, %v181, %v178
  %s184 = scalar_lea.vmem %s0, 133
  %s185 = smov 192
  %v186 = vld [vmem:[%s184] ss:$16 sm:%s185]
  %vm187 = vcmask 1047558
  %v188 = vsel %vm187, %v186, %v183
  %189 = vrot.lane.b32.xlu0 %v188, 80
  %v190 = vpop.permute.xlu0 %189
  %vm191 = vcmask 786048
  %s192 = scalar_lea.vmem %s1, 16
  %193 = vst.msk [vmem:[%s192] sm:$0xff] %vm191, %v190
  %s194 = scalar_lea.vmem %s0, 4
  %s195 = smov 3
  %v196 = vld [vmem:[%s194] ss:$16 sm:%s195]
  %s197 = scalar_lea.vmem %s0, 4
  %s198 = smov 12
  %v199 = vld [vmem:[%s197] ss:$16 sm:%s198]
  %vm200 = vcmask 1043458
  %v201 = vsel %vm200, %v199, %v196
  %s202 = scalar_lea.vmem %s0, 4
  %s203 = smov 48
  %v204 = vld [vmem:[%s202] ss:$16 sm:%s203]
  %vm205 = vcmask 1045508
  %v206 = vsel %vm205, %v204, %v201
  %s207 = scalar_lea.vmem %s0, 4
  %s208 = smov 192
  %v209 = vld [vmem:[%s207] ss:$16 sm:%s208]
  %vm210 = vcmask 1047558
  %v211 = vsel %vm210, %v209, %v206
  %212 = vrot.lane.b32.xlu0 %v211, 64
  %v213 = vpop.permute.xlu0 %212
  %vm214 = vcmask 654848
  %215 = vst.msk [vmem:[%s1] sm:$0xff] %vm214, %v213
  %s216 = scalar_lea.vmem %s0, 132
  %s217 = smov 3
  %v218 = vld [vmem:[%s216] ss:$16 sm:%s217]
  %s219 = scalar_lea.vmem %s0, 132
  %s220 = smov 12
  %v221 = vld [vmem:[%s219] ss:$16 sm:%s220]
  %vm222 = vcmask 1043458
  %v223 = vsel %vm222, %v221, %v218
  %s224 = scalar_lea.vmem %s0, 132
  %s225 = smov 48
  %v226 = vld [vmem:[%s224] ss:$16 sm:%s225]
  %vm227 = vcmask 1045508
  %v228 = vsel %vm227, %v226, %v223
  %s229 = scalar_lea.vmem %s0, 132
  %s230 = smov 192
  %v231 = vld [vmem:[%s229] ss:$16 sm:%s230]
  %vm232 = vcmask 1047558
  %v233 = vsel %vm232, %v231, %v228
  %234 = vrot.lane.b32.xlu0 %v233, 64
  %v235 = vpop.permute.xlu0 %234
  %vm236 = vcmask 654848
  %s237 = scalar_lea.vmem %s1, 16
  %238 = vst.msk [vmem:[%s237] sm:$0xff] %vm236, %v235
  %s239 = scalar_lea.vmem %s0, 3
  %s240 = smov 3
  %v241 = vld [vmem:[%s239] ss:$16 sm:%s240]
  %s242 = scalar_lea.vmem %s0, 3
  %s243 = smov 12
  %v244 = vld [vmem:[%s242] ss:$16 sm:%s243]
  %vm245 = vcmask 1043458
  %v246 = vsel %vm245, %v244, %v241
  %s247 = scalar_lea.vmem %s0, 3
  %s248 = smov 48
  %v249 = vld [vmem:[%s247] ss:$16 sm:%s248]
  %vm250 = vcmask 1045508
  %v251 = vsel %vm250, %v249, %v246
  %s252 = scalar_lea.vmem %s0, 3
  %s253 = smov 192
  %v254 = vld [vmem:[%s252] ss:$16 sm:%s253]
  %vm255 = vcmask 1047558
  %v256 = vsel %vm255, %v254, %v251
  %257 = vrot.lane.b32.xlu0 %v256, 48
  %v258 = vpop.permute.xlu0 %257
  %vm259 = vcmask 523648
  %260 = vst.msk [vmem:[%s1] sm:$0xff] %vm259, %v258
  %s261 = scalar_lea.vmem %s0, 11
  %s262 = smov 3
  %v263 = vld [vmem:[%s261] ss:$16 sm:%s262]
  %s264 = scalar_lea.vmem %s0, 11
  %s265 = smov 12
  %v266 = vld [vmem:[%s264] ss:$16 sm:%s265]
  %vm267 = vcmask 1043458
  %v268 = vsel %vm267, %v266, %v263
  %s269 = scalar_lea.vmem %s0, 11
  %s270 = smov 48
  %v271 = vld [vmem:[%s269] ss:$16 sm:%s270]
  %vm272 = vcmask 1045508
  %v273 = vsel %vm272, %v271, %v268
  %s274 = scalar_lea.vmem %s0, 11
  %s275 = smov 192
  %v276 = vld [vmem:[%s274] ss:$16 sm:%s275]
  %vm277 = vcmask 1047558
  %v278 = vsel %vm277, %v276, %v273
  %279 = vrot.lane.b32.xlu0 %v278, 48
  %v280 = vpop.permute.xlu0 %279
  %vm281 = vcmask 523648
  %s282 = scalar_lea.vmem %s1, 8
  %283 = vst.msk [vmem:[%s282] sm:$0xff] %vm281, %v280
  %s284 = scalar_lea.vmem %s0, 131
  %s285 = smov 3
  %v286 = vld [vmem:[%s284] ss:$16 sm:%s285]
  %s287 = scalar_lea.vmem %s0, 131
  %s288 = smov 12
  %v289 = vld [vmem:[%s287] ss:$16 sm:%s288]
  %vm290 = vcmask 1043458
  %v291 = vsel %vm290, %v289, %v286
  %s292 = scalar_lea.vmem %s0, 131
  %s293 = smov 48
  %v294 = vld [vmem:[%s292] ss:$16 sm:%s293]
  %vm295 = vcmask 1045508
  %v296 = vsel %vm295, %v294, %v291
  %s297 = scalar_lea.vmem %s0, 131
  %s298 = smov 192
  %v299 = vld [vmem:[%s297] ss:$16 sm:%s298]
  %vm300 = vcmask 1047558
  %v301 = vsel %vm300, %v299, %v296
  %302 = vrot.lane.b32.xlu0 %v301, 48
  %v303 = vpop.permute.xlu0 %302
  %vm304 = vcmask 523648
  %s305 = scalar_lea.vmem %s1, 16
  %306 = vst.msk [vmem:[%s305] sm:$0xff] %vm304, %v303
  %s307 = scalar_lea.vmem %s0, 139
  %s308 = smov 3
  %v309 = vld [vmem:[%s307] ss:$16 sm:%s308]
  %s310 = scalar_lea.vmem %s0, 139
  %s311 = smov 12
  %v312 = vld [vmem:[%s310] ss:$16 sm:%s311]
  %vm313 = vcmask 1043458
  %v314 = vsel %vm313, %v312, %v309
  %s315 = scalar_lea.vmem %s0, 139
  %s316 = smov 48
  %v317 = vld [vmem:[%s315] ss:$16 sm:%s316]
  %vm318 = vcmask 1045508
  %v319 = vsel %vm318, %v317, %v314
  %s320 = scalar_lea.vmem %s0, 139
  %s321 = smov 192
  %v322 = vld [vmem:[%s320] ss:$16 sm:%s321]
  %vm323 = vcmask 1047558
  %v324 = vsel %vm323, %v322, %v319
  %325 = vrot.lane.b32.xlu0 %v324, 48
  %v326 = vpop.permute.xlu0 %325
  %vm327 = vcmask 523648
  %s328 = scalar_lea.vmem %s1, 24
  %329 = vst.msk [vmem:[%s328] sm:$0xff] %vm327, %v326
  %s330 = scalar_lea.vmem %s0, 2
  %s331 = smov 3
  %v332 = vld [vmem:[%s330] ss:$16 sm:%s331]
  %s333 = scalar_lea.vmem %s0, 2
  %s334 = smov 12
  %v335 = vld [vmem:[%s333] ss:$16 sm:%s334]
  %vm336 = vcmask 1043458
  %v337 = vsel %vm336, %v335, %v332
  %s338 = scalar_lea.vmem %s0, 2
  %s339 = smov 48
  %v340 = vld [vmem:[%s338] ss:$16 sm:%s339]
  %vm341 = vcmask 1045508
  %v342 = vsel %vm341, %v340, %v337
  %s343 = scalar_lea.vmem %s0, 2
  %s344 = smov 192
  %v345 = vld [vmem:[%s343] ss:$16 sm:%s344]
  %vm346 = vcmask 1047558
  %v347 = vsel %vm346, %v345, %v342
  %348 = vrot.lane.b32.xlu0 %v347, 32
  %v349 = vpop.permute.xlu0 %348
  %vm350 = vcmask 392448
  %351 = vst.msk [vmem:[%s1] sm:$0xff] %vm350, %v349
  %s352 = scalar_lea.vmem %s0, 10
  %s353 = smov 3
  %v354 = vld [vmem:[%s352] ss:$16 sm:%s353]
  %s355 = scalar_lea.vmem %s0, 10
  %s356 = smov 12
  %v357 = vld [vmem:[%s355] ss:$16 sm:%s356]
  %vm358 = vcmask 1043458
  %v359 = vsel %vm358, %v357, %v354
  %s360 = scalar_lea.vmem %s0, 10
  %s361 = smov 48
  %v362 = vld [vmem:[%s360] ss:$16 sm:%s361]
  %vm363 = vcmask 1045508
  %v364 = vsel %vm363, %v362, %v359
  %s365 = scalar_lea.vmem %s0, 10
  %s366 = smov 192
  %v367 = vld [vmem:[%s365] ss:$16 sm:%s366]
  %vm368 = vcmask 1047558
  %v369 = vsel %vm368, %v367, %v364
  %370 = vrot.lane.b32.xlu0 %v369, 32
  %v371 = vpop.permute.xlu0 %370
  %vm372 = vcmask 392448
  %s373 = scalar_lea.vmem %s1, 8
  %374 = vst.msk [vmem:[%s373] sm:$0xff] %vm372, %v371
  %s375 = scalar_lea.vmem %s0, 130
  %s376 = smov 3
  %v377 = vld [vmem:[%s375] ss:$16 sm:%s376]
  %s378 = scalar_lea.vmem %s0, 130
  %s379 = smov 12
  %v380 = vld [vmem:[%s378] ss:$16 sm:%s379]
  %vm381 = vcmask 1043458
  %v382 = vsel %vm381, %v380, %v377
  %s383 = scalar_lea.vmem %s0, 130
  %s384 = smov 48
  %v385 = vld [vmem:[%s383] ss:$16 sm:%s384]
  %vm386 = vcmask 1045508
  %v387 = vsel %vm386, %v385, %v382
  %s388 = scalar_lea.vmem %s0, 130
  %s389 = smov 192
  %v390 = vld [vmem:[%s388] ss:$16 sm:%s389]
  %vm391 = vcmask 1047558
  %v392 = vsel %vm391, %v390, %v387
  %393 = vrot.lane.b32.xlu0 %v392, 32
  %v394 = vpop.permute.xlu0 %393
  %vm395 = vcmask 392448
  %s396 = scalar_lea.vmem %s1, 16
  %397 = vst.msk [vmem:[%s396] sm:$0xff] %vm395, %v394
  %s398 = scalar_lea.vmem %s0, 138
  %s399 = smov 3
  %v400 = vld [vmem:[%s398] ss:$16 sm:%s399]
  %s401 = scalar_lea.vmem %s0, 138
  %s402 = smov 12
  %v403 = vld [vmem:[%s401] ss:$16 sm:%s402]
  %vm404 = vcmask 1043458
  %v405 = vsel %vm404, %v403, %v400
  %s406 = scalar_lea.vmem %s0, 138
  %s407 = smov 48
  %v408 = vld [vmem:[%s406] ss:$16 sm:%s407]
  %vm409 = vcmask 1045508
  %v410 = vsel %vm409, %v408, %v405
  %s411 = scalar_lea.vmem %s0, 138
  %s412 = smov 192
  %v413 = vld [vmem:[%s411] ss:$16 sm:%s412]
  %vm414 = vcmask 1047558
  %v415 = vsel %vm414, %v413, %v410
  %416 = vrot.lane.b32.xlu0 %v415, 32
  %v417 = vpop.permute.xlu0 %416
  %vm418 = vcmask 392448
  %s419 = scalar_lea.vmem %s1, 24
  %420 = vst.msk [vmem:[%s419] sm:$0xff] %vm418, %v417
  %s421 = scalar_lea.vmem %s0, 1
  %s422 = smov 3
  %v423 = vld [vmem:[%s421] ss:$16 sm:%s422]
  %s424 = scalar_lea.vmem %s0, 1
  %s425 = smov 12
  %v426 = vld [vmem:[%s424] ss:$16 sm:%s425]
  %vm427 = vcmask 1043458
  %v428 = vsel %vm427, %v426, %v423
  %s429 = scalar_lea.vmem %s0, 1
  %s430 = smov 48
  %v431 = vld [vmem:[%s429] ss:$16 sm:%s430]
  %vm432 = vcmask 1045508
  %v433 = vsel %vm432, %v431, %v428
  %s434 = scalar_lea.vmem %s0, 1
  %s435 = smov 192
  %v436 = vld [vmem:[%s434] ss:$16 sm:%s435]
  %vm437 = vcmask 1047558
  %v438 = vsel %vm437, %v436, %v433
  %439 = vrot.lane.b32.xlu0 %v438, 16
  %v440 = vpop.permute.xlu0 %439
  %vm441 = vcmask 261248
  %442 = vst.msk [vmem:[%s1] sm:$0xff] %vm441, %v440
  %s443 = scalar_lea.vmem %s0, 9
  %s444 = smov 3
  %v445 = vld [vmem:[%s443] ss:$16 sm:%s444]
  %s446 = scalar_lea.vmem %s0, 9
  %s447 = smov 12
  %v448 = vld [vmem:[%s446] ss:$16 sm:%s447]
  %vm449 = vcmask 1043458
  %v450 = vsel %vm449, %v448, %v445
  %s451 = scalar_lea.vmem %s0, 9
  %s452 = smov 48
  %v453 = vld [vmem:[%s451] ss:$16 sm:%s452]
  %vm454 = vcmask 1045508
  %v455 = vsel %vm454, %v453, %v450
  %s456 = scalar_lea.vmem %s0, 9
  %s457 = smov 192
  %v458 = vld [vmem:[%s456] ss:$16 sm:%s457]
  %vm459 = vcmask 1047558
  %v460 = vsel %vm459, %v458, %v455
  %461 = vrot.lane.b32.xlu0 %v460, 16
  %v462 = vpop.permute.xlu0 %461
  %vm463 = vcmask 261248
  %s464 = scalar_lea.vmem %s1, 8
  %465 = vst.msk [vmem:[%s464] sm:$0xff] %vm463, %v462
  %s466 = scalar_lea.vmem %s0, 129
  %s467 = smov 3
  %v468 = vld [vmem:[%s466] ss:$16 sm:%s467]
  %s469 = scalar_lea.vmem %s0, 129
  %s470 = smov 12
  %v471 = vld [vmem:[%s469] ss:$16 sm:%s470]
  %vm472 = vcmask 1043458
  %v473 = vsel %vm472, %v471, %v468
  %s474 = scalar_lea.vmem %s0, 129
  %s475 = smov 48
  %v476 = vld [vmem:[%s474] ss:$16 sm:%s475]
  %vm477 = vcmask 1045508
  %v478 = vsel %vm477, %v476, %v473
  %s479 = scalar_lea.vmem %s0, 129
  %s480 = smov 192
  %v481 = vld [vmem:[%s479] ss:$16 sm:%s480]
  %vm482 = vcmask 1047558
  %v483 = vsel %vm482, %v481, %v478
  %484 = vrot.lane.b32.xlu0 %v483, 16
  %v485 = vpop.permute.xlu0 %484
  %vm486 = vcmask 261248
  %s487 = scalar_lea.vmem %s1, 16
  %488 = vst.msk [vmem:[%s487] sm:$0xff] %vm486, %v485
  %s489 = scalar_lea.vmem %s0, 137
  %s490 = smov 3
  %v491 = vld [vmem:[%s489] ss:$16 sm:%s490]
  %s492 = scalar_lea.vmem %s0, 137
  %s493 = smov 12
  %v494 = vld [vmem:[%s492] ss:$16 sm:%s493]
  %vm495 = vcmask 1043458
  %v496 = vsel %vm495, %v494, %v491
  %s497 = scalar_lea.vmem %s0, 137
  %s498 = smov 48
  %v499 = vld [vmem:[%s497] ss:$16 sm:%s498]
  %vm500 = vcmask 1045508
  %v501 = vsel %vm500, %v499, %v496
  %s502 = scalar_lea.vmem %s0, 137
  %s503 = smov 192
  %v504 = vld [vmem:[%s502] ss:$16 sm:%s503]
  %vm505 = vcmask 1047558
  %v506 = vsel %vm505, %v504, %v501
  %507 = vrot.lane.b32.xlu0 %v506, 16
  %v508 = vpop.permute.xlu0 %507
  %vm509 = vcmask 261248
  %s510 = scalar_lea.vmem %s1, 24
  %511 = vst.msk [vmem:[%s510] sm:$0xff] %vm509, %v508

// kernel: attention_vae_forward.1
$region0: #{attention_vae_forward.1}
  #allocation0 [shape = 'u32[]', space=smem, size = 0x4, offset = 0x4, fixed_abs, tag = 'smem constant byte address 0x4 - core index']
  #allocation1 [shape = 'u32[72,128]{1,0:T(1,128)}', space=vmem, size = 0x9000, scoped, tag = 'internal scratch']
  #allocation2 [shape = 'f32[16,24]{1,0:T(8,128)}', space=vmem, size = 0x2000, scoped, tag = 'scratch operand']
  %s0 = inlined_call_operand.smem [shape: u32[41], index: -1, kind: input, shape index: {}]
  %s1 = sld [smem:[%s0]]
  %s2 = scalar_lea.smem %s0, 1
  %s3 = sld [smem:[%s2]]
  %s4 = scalar_lea.smem %s0, 2
  %s5 = sld [smem:[%s4]]
  %s6 = scalar_lea.smem %s0, 3
  %s7 = sld [smem:[%s6]]
  %s8 = scalar_lea.smem %s0, 4
  %s9 = sld [smem:[%s8]]
  %s10 = scalar_lea.smem %s0, 5
  %s11 = sld [smem:[%s10]]
  %s12 = scalar_lea.smem %s0, 6
  %s13 = sld [smem:[%s12]]
  %s14 = scalar_lea.smem %s0, 7
  %s15 = sld [smem:[%s14]]
  %s16 = scalar_lea.smem %s0, 8
  %s17 = sld [smem:[%s16]]
  %s18 = scalar_lea.smem %s0, 9
  %s19 = sld [smem:[%s18]]
  %s20 = scalar_lea.smem %s0, 10
  %s21 = sld [smem:[%s20]]
  %s22 = scalar_lea.smem %s0, 11
  %s23 = sld [smem:[%s22]]
  %s24 = scalar_lea.smem %s0, 12
  %s25 = sld [smem:[%s24]]
  %s26 = scalar_lea.smem %s0, 13
  %s27 = sld [smem:[%s26]]
  %s28 = scalar_lea.smem %s0, 14
  %s29 = sld [smem:[%s28]]
  %s30 = scalar_lea.smem %s0, 15
  %s31 = sld [smem:[%s30]]
  %s32 = scalar_lea.smem %s0, 16
  %s33 = sld [smem:[%s32]]
  %s34 = scalar_lea.smem %s0, 17
  %s35 = sld [smem:[%s34]]
  %s36 = scalar_lea.smem %s0, 18
  %s37 = sld [smem:[%s36]]
  %s38 = scalar_lea.smem %s0, 19
  %s39 = sld [smem:[%s38]]
  %s40 = scalar_lea.smem %s0, 20
  %s41 = sld [smem:[%s40]]
  %s42 = scalar_lea.smem %s0, 21
  %s43 = sld [smem:[%s42]]
  %s44 = scalar_lea.smem %s0, 22
  %s45 = sld [smem:[%s44]]
  %s46 = scalar_lea.smem %s0, 23
  %s47 = sld [smem:[%s46]]
  %s48 = scalar_lea.smem %s0, 24
  %s49 = sld [smem:[%s48]]
  %s50 = scalar_lea.smem %s0, 25
  %s51 = sld [smem:[%s50]]
  %s52 = scalar_lea.smem %s0, 26
  %s53 = sld [smem:[%s52]]
  %s54 = scalar_lea.smem %s0, 27
  %s55 = sld [smem:[%s54]]
  %s56 = scalar_lea.smem %s0, 28
  %s57 = sld [smem:[%s56]]
  %s58 = scalar_lea.smem %s0, 29
  %s59 = sld [smem:[%s58]]
  %s60 = scalar_lea.smem %s0, 30
  %s61 = sld [smem:[%s60]]
  %s62 = scalar_lea.smem %s0, 31
  %s63 = sld [smem:[%s62]]
  %s64 = scalar_lea.smem %s0, 32
  %s65 = sld [smem:[%s64]]
  %s66 = scalar_lea.smem %s0, 33
  %s67 = sld [smem:[%s66]]
  %s68 = scalar_lea.smem %s0, 34
  %s69 = sld [smem:[%s68]]
  %s70 = scalar_lea.smem %s0, 35
  %s71 = sld [smem:[%s70]]
  %s72 = scalar_lea.smem %s0, 36
  %s73 = sld [smem:[%s72]]
  %s74 = scalar_lea.smem %s0, 37
  %s75 = sld [smem:[%s74]]
  %s76 = scalar_lea.smem %s0, 38
  %s77 = sld [smem:[%s76]]
  %s78 = scalar_lea.smem %s0, 39
  %s79 = sld [smem:[%s78]]
  %s80 = scalar_lea.smem %s0, 40
  %s81 = sld [smem:[%s80]]
  %82 = xla_tuple %s77, %s79, %s81
  %s83 = sld [smem:[#allocation0]]
  $region305: #{attention_vae_forward.1} parent=0
    _
  %s85 = ssub.s32 1, %s83
  %s86 = scalar_select 0, %s85, %s83
  $region1: #{attention_vae_forward.1} parent=0
    #allocation3 [shape = 'u8[8192]{0}', space=vmem, size = 0x2000, scoped, tag = 'input window, operand 6, single buffered']
    #allocation4 [shape = 's32[2]{0}', space=sflag, size = 0x8, scoped, tag = 'scoped memory for attention_vae_forward.1']
    #allocation5 [shape = 's32[2]{0}', space=sflag, size = 0x8, scoped, tag = 'scoped memory for attention_vae_forward.1']
    #allocation6 [shape = 'u8[512]{0}', space=vmem, size = 0x400, scoped, tag = 'input window, operand 9, single buffered']
    #allocation7 [shape = 's32[1]{0}', space=sflag, size = 0x4, scoped, tag = 'scoped memory for attention_vae_forward.1']
    #allocation8 [shape = 'u8[1024]{0}', space=vmem, size = 0x400, scoped, tag = 'input window, operand 11']
    #allocation9 [shape = 'u8[24576]{0}', space=vmem, size = 0x6000, scoped, tag = 'input window, operand 12']
    #allocation10 [shape = 'u8[1024]{0}', space=vmem, size = 0x400, scoped, tag = 'input window, operand 13']
    #allocation11 [shape = 'u8[24576]{0}', space=vmem, size = 0x6000, scoped, tag = 'input window, operand 14']
    #allocation12 [shape = 'u8[1024]{0}', space=vmem, size = 0x400, scoped, tag = 'input window, operand 15']
    #allocation13 [shape = 'u8[24576]{0}', space=vmem, size = 0x6000, scoped, tag = 'input window, operand 16']
    #allocation14 [shape = 'u8[1024]{0}', space=vmem, size = 0x400, scoped, tag = 'input window, operand 17']
    #allocation15 [shape = 'u8[196608]{0}', space=vmem, size = 0x30000, scoped, tag = 'input window, operand 20']
    #allocation16 [shape = 'u8[1024]{0}', space=vmem, size = 0x400, scoped, tag = 'input window, operand 21']
    #allocation17 [shape = 'u8[1024]{0}', space=vmem, size = 0x400, scoped, tag = 'input window, operand 22']
    #allocation18 [shape = 'u8[1024]{0}', space=vmem, size = 0x400, scoped, tag = 'input window, operand 23']
    #allocation19 [shape = 'u8[1024]{0}', space=vmem, size = 0x400, scoped, tag = 'input window, operand 24']
    #allocation20 [shape = 'u8[1024]{0}', space=vmem, size = 0x400, scoped, tag = 'input window, operand 25']
    #allocation21 [shape = 'u8[512]{0}', space=vmem, size = 0x400, scoped, tag = 'input window, operand 27, single buffered']
    #allocation22 [shape = 'u8[512]{0}', space=vmem, size = 0x400, scoped, tag = 'input window, operand 29, single buffered']
    #allocation23 [shape = 's32[1]{0}', space=sflag, size = 0x4, scoped, tag = 'scoped memory for attention_vae_forward.1']
    #allocation24 [shape = 'u8[12288]{0}', space=vmem, size = 0x3000, scoped, tag = 'input window, operand 30, single buffered']
    #allocation25 [shape = 'u8[512]{0}', space=vmem, size = 0x400, scoped, tag = 'input window, operand 31, single buffered']
    #allocation26 [shape = 's32[1]{0}', space=sflag, size = 0x4, scoped, tag = 'scoped memory for attention_vae_forward.1']
    #allocation27 [shape = 'u8[512]{0}', space=vmem, size = 0x400, scoped, tag = 'input window, operand 33, single buffered']
    #allocation28 [shape = 'u8[4096]{0}', space=vmem, size = 0x1000, scoped, tag = 'input window, operand 34, single buffered']
    #allocation29 [shape = 's32[1]{0}', space=sflag, size = 0x4, scoped, tag = 'scoped memory for attention_vae_forward.1']
    #allocation30 [shape = 'u8[512]{0}', space=vmem, size = 0x400, scoped, tag = 'input window, operand 35, single buffered']
    #allocation31 [shape = 'u8[32768]{0}', space=vmem, size = 0x8000, scoped, tag = 'input window, operand 36, single buffered']
    #allocation32 [shape = 's32[1]{0}', space=sflag, size = 0x4, scoped, tag = 'scoped memory for attention_vae_forward.1']
    #allocation33 [shape = 'u8[512]{0}', space=vmem, size = 0x400, scoped, tag = 'input window, operand 37, single buffered']
    #allocation34 [shape = 'u8[1024]{0}', space=vmem, size = 0x400, scoped, tag = 'output window, operand 1, single buffered']
    %87 = vsyncpa [#allocation4], 0
    %88 = vsyncpa [#allocation7], 0
    %89 = vsyncpa [#allocation23], 0
    %90 = vsyncpa [#allocation26], 0
    %91 = vsyncpa [#allocation29], 0
    %92 = vsyncpa [#allocation32], 0
    %93 = vsyncpa [#allocation5], 0
    loop: start=0, step=1, limit=8
    $region2: #{attention_vae_forward.1} parent=1 // loop_pre_header
      _
    $region3: #{attention_vae_forward.1} parent=1 // loop_header
      %s95 = sphi 0, %s99
      %p96 = scmp.ge.s32.totalorder %s95, 8
      %s103 = sphi 0, %s103
      %s105 = sphi 0, %s103
      %s106 = sphi 0, %s105
      %s120 = sphi 0, %s106
      %s124 = sphi 0, %s124
      %s126 = sphi 0, %s124
      %s127 = sphi 0, %s126
      %s141 = sphi 0, %s127
      %s145 = sphi 0, %s145
      %s147 = sphi 0, %s145
      %s148 = sphi 0, %s147
      %s162 = sphi 0, %s148
      %s166 = sphi 0, %s166
      %s168 = sphi 0, %s166
      %s169 = sphi 0, %s168
      %s183 = sphi 0, %s169
      %s187 = sphi 0, %s187
      %s189 = sphi 0, %s187
      %s190 = sphi 0, %s189
      %s204 = sphi 0, %s190
      %s208 = sphi 0, %s208
      %s210 = sphi 0, %s208
      %s211 = sphi 0, %s210
      %s225 = sphi 0, %s211
      %s229 = sphi 0, %s229
      %s231 = sphi 0, %s229
      %s232 = sphi 0, %s231
      %s246 = sphi 0, %s232
      %s250 = sphi 0, %s250
      %s252 = sphi 0, %s250
      %s253 = sphi 0, %s252
      %s267 = sphi 0, %s253
      %s271 = sphi 0, %s271
      %s273 = sphi 0, %s271
      %s274 = sphi 0, %s273
      %s288 = sphi 0, %s274
      %s292 = sphi 0, %s292
      %s294 = sphi 0, %s292
      %s295 = sphi 0, %s294
      %s309 = sphi 0, %s295
      %s315 = sphi 0, %s317
      %s318 = sphi 0, %s315
      %s319 = sphi 0, %s318
      %s335 = sphi 0, %s319
      %s341 = sphi 0, %s343
      %s344 = sphi 0, %s341
      %s345 = sphi 0, %s344
      %s361 = sphi 0, %s345
      %s367 = sphi 0, %s369
      %s370 = sphi 0, %s367
      %s371 = sphi 0, %s370
      %s387 = sphi 0, %s371
      %s393 = sphi 0, %s395
      %s396 = sphi 0, %s393
      %s397 = sphi 0, %s396
      %s413 = sphi 0, %s397
      %s419 = sphi 0, %s421
      %s422 = sphi 0, %s419
      %s423 = sphi 0, %s422
      %s439 = sphi 0, %s423
      %s445 = sphi 0, %s447
      %s448 = sphi 0, %s445
      %s449 = sphi 0, %s448
      %s465 = sphi 0, %s449
      %s471 = sphi 0, %s473
      %s474 = sphi 0, %s471
      %s475 = sphi 0, %s474
      %s491 = sphi 0, %s475
      %s497 = sphi 0, %s499
      %s500 = sphi 0, %s497
      %s501 = sphi 0, %s500
      %s517 = sphi 0, %s501
      %s523 = sphi 0, %s525
      %s526 = sphi 0, %s523
      %s527 = sphi 0, %s526
      %s543 = sphi 0, %s527
      %s549 = sphi 0, %s551
      %s552 = sphi 0, %s549
      %s553 = sphi 0, %s552
      %s569 = sphi 0, %s553
      %s575 = sphi 0, %s577
      %s578 = sphi 0, %s575
      %s579 = sphi 0, %s578
      %s595 = sphi 0, %s579
      %s601 = sphi 0, %s603
      %s604 = sphi 0, %s601
      %s605 = sphi 0, %s604
      %s621 = sphi 0, %s605
      %s627 = sphi 0, %s629
      %s630 = sphi 0, %s627
      %s631 = sphi 0, %s630
      %s647 = sphi 0, %s631
      %s653 = sphi 0, %s655
      %s656 = sphi 0, %s653
      %s657 = sphi 0, %s656
      %s673 = sphi 0, %s657
      %s679 = sphi 0, %s681
      %s682 = sphi 0, %s679
      %s683 = sphi 0, %s682
      %s699 = sphi 0, %s683
      %s705 = sphi 0, %s707
      %s708 = sphi 0, %s705
      %s709 = sphi 0, %s708
      %s725 = sphi 0, %s709
      %s729 = sphi 0, %s729
      %s731 = sphi 0, %s729
      %s732 = sphi 0, %s731
      %s746 = sphi 0, %s732
      %s750 = sphi 0, %s750
      %s752 = sphi 0, %s750
      %s753 = sphi 0, %s752
      %s767 = sphi 0, %s753
      %s771 = sphi 0, %s771
      %s773 = sphi 0, %s771
      %s774 = sphi 0, %s773
      %s788 = sphi 0, %s774
      %s792 = sphi 0, %s792
      %s794 = sphi 0, %s792
      %s795 = sphi 0, %s794
      %s809 = sphi 0, %s795
      %s813 = sphi 0, %s813
      %s815 = sphi 0, %s813
      %s816 = sphi 0, %s815
      %s830 = sphi 0, %s816
      %s834 = sphi 0, %s834
      %s836 = sphi 0, %s834
      %s837 = sphi 0, %s836
      %s851 = sphi 0, %s837
      %s855 = sphi 0, %s855
      %s857 = sphi 0, %s855
      %s858 = sphi 0, %s857
      %s872 = sphi 0, %s858
      %s876 = sphi 0, %s876
      %s878 = sphi 0, %s876
      %s879 = sphi 0, %s878
      %s893 = sphi 0, %s879
      %s897 = sphi 0, %s897
      %s899 = sphi 0, %s897
      %s900 = sphi 0, %s899
      %s914 = sphi 0, %s900
      %s918 = sphi 0, %s918
      %s920 = sphi 0, %s918
      %s921 = sphi 0, %s920
      %s935 = sphi 0, %s921
      %s939 = sphi 0, %s939
      %s941 = sphi 0, %s939
      %s942 = sphi 0, %s941
      %s956 = sphi 0, %s942
      %s960 = sphi 0, %s960
      %s962 = sphi 0, %s960
      %s963 = sphi 0, %s962
      %s977 = sphi 0, %s963
      %s981 = sphi 0, %s981
      %s983 = sphi 0, %s981
      %s984 = sphi 0, %s983
      %s998 = sphi 0, %s984
      %s1002 = sphi 0, %s1002
      %s1004 = sphi 0, %s1002
      %s1005 = sphi 0, %s1004
      %s1019 = sphi 0, %s1005
      %s1023 = sphi 0, %s1023
      %s1025 = sphi 0, %s1023
      %s1026 = sphi 0, %s1025
      %s1040 = sphi 0, %s1026
    $region4: #{attention_vae_forward.1} parent=1 // loop_header_branch
      %98 = sbr.rel (%p96) target = $region8
    $region5: #{attention_vae_forward.1} parent=1 // loop_body
      %s100 = ssub.s32 %s95, 1
      %s101 = ssub.s32 %s95, 2
      %s102 = sadd.s32 %s95, 1
      %s104 = sadd.s32 %s103, 1
      %p107 = scmp.eq.s32.totalorder %s95, 5
      %p108 = scmp.ne.s32.totalorder %s103, %s105
      %p109 = scmp.eq.s32.totalorder %s95, 0
      %p110 = por %p108, %p109
      %p111 = scmp.ne.s32.totalorder %s103, %s105
      %p112 = scmp.eq.s32.totalorder %s100, 5
      %p113 = por %p111, %p112
      %p114 = scmp.ne.s32.totalorder %s105, %s106
      %p115 = scmp.eq.s32.totalorder %s100, 0
      %p116 = por %p114, %p115
      %p117 = scmp.ne.s32.totalorder %s105, %s106
      %p118 = scmp.eq.s32.totalorder %s101, 5
      %p119 = por %p117, %p118
      %p121 = scmp.ne.s32.totalorder %s106, %s120
      %p122 = scmp.eq.s32.totalorder %s101, 0
      %p123 = por %p121, %p122
      %s125 = sadd.s32 %s124, 1
      %p128 = scmp.eq.s32.totalorder %s95, 5
      %p129 = scmp.ne.s32.totalorder %s124, %s126
      %p130 = scmp.eq.s32.totalorder %s95, 0
      %p131 = por %p129, %p130
      %p132 = scmp.ne.s32.totalorder %s124, %s126
      %p133 = scmp.eq.s32.totalorder %s100, 5
      %p134 = por %p132, %p133
      %p135 = scmp.ne.s32.totalorder %s126, %s127
      %p136 = scmp.eq.s32.totalorder %s100, 0
      %p137 = por %p135, %p136
      %p138 = scmp.ne.s32.totalorder %s126, %s127
      %p139 = scmp.eq.s32.totalorder %s101, 5
      %p140 = por %p138, %p139
      %p142 = scmp.ne.s32.totalorder %s127, %s141
      %p143 = scmp.eq.s32.totalorder %s101, 0
      %p144 = por %p142, %p143
      %s146 = sadd.s32 %s145, 1
      %p149 = scmp.eq.s32.totalorder %s95, 5
      %p150 = scmp.ne.s32.totalorder %s145, %s147
      %p151 = scmp.eq.s32.totalorder %s95, 0
      %p152 = por %p150, %p151
      %p153 = scmp.ne.s32.totalorder %s145, %s147
      %p154 = scmp.eq.s32.totalorder %s100, 5
      %p155 = por %p153, %p154
      %p156 = scmp.ne.s32.totalorder %s147, %s148
      %p157 = scmp.eq.s32.totalorder %s100, 0
      %p158 = por %p156, %p157
      %p159 = scmp.ne.s32.totalorder %s147, %s148
      %p160 = scmp.eq.s32.totalorder %s101, 5
      %p161 = por %p159, %p160
      %p163 = scmp.ne.s32.totalorder %s148, %s162
      %p164 = scmp.eq.s32.totalorder %s101, 0
      %p165 = por %p163, %p164
      %s167 = sadd.s32 %s166, 1
      %p170 = scmp.eq.s32.totalorder %s95, 5
      %p171 = scmp.ne.s32.totalorder %s166, %s168
      %p172 = scmp.eq.s32.totalorder %s95, 0
      %p173 = por %p171, %p172
      %p174 = scmp.ne.s32.totalorder %s166, %s168
      %p175 = scmp.eq.s32.totalorder %s100, 5
      %p176 = por %p174, %p175
      %p177 = scmp.ne.s32.totalorder %s168, %s169
      %p178 = scmp.eq.s32.totalorder %s100, 0
      %p179 = por %p177, %p178
      %p180 = scmp.ne.s32.totalorder %s168, %s169
      %p181 = scmp.eq.s32.totalorder %s101, 5
      %p182 = por %p180, %p181
      %p184 = scmp.ne.s32.totalorder %s169, %s183
      %p185 = scmp.eq.s32.totalorder %s101, 0
      %p186 = por %p184, %p185
      %s188 = sadd.s32 %s187, 1
      %p191 = scmp.eq.s32.totalorder %s95, 5
      %p192 = scmp.ne.s32.totalorder %s187, %s189
      %p193 = scmp.eq.s32.totalorder %s95, 0
      %p194 = por %p192, %p193
      %p195 = scmp.ne.s32.totalorder %s187, %s189
      %p196 = scmp.eq.s32.totalorder %s100, 5
      %p197 = por %p195, %p196
      %p198 = scmp.ne.s32.totalorder %s189, %s190
      %p199 = scmp.eq.s32.totalorder %s100, 0
      %p200 = por %p198, %p199
      %p201 = scmp.ne.s32.totalorder %s189, %s190
      %p202 = scmp.eq.s32.totalorder %s101, 5
      %p203 = por %p201, %p202
      %p205 = scmp.ne.s32.totalorder %s190, %s204
      %p206 = scmp.eq.s32.totalorder %s101, 0
      %p207 = por %p205, %p206
      %s209 = sadd.s32 %s208, 1
      %p212 = scmp.eq.s32.totalorder %s95, 5
      %p213 = scmp.ne.s32.totalorder %s208, %s210
      %p214 = scmp.eq.s32.totalorder %s95, 0
      %p215 = por %p213, %p214
      %p216 = scmp.ne.s32.totalorder %s208, %s210
      %p217 = scmp.eq.s32.totalorder %s100, 5
      %p218 = por %p216, %p217
      %p219 = scmp.ne.s32.totalorder %s210, %s211
      %p220 = scmp.eq.s32.totalorder %s100, 0
      %p221 = por %p219, %p220
      %p222 = scmp.ne.s32.totalorder %s210, %s211
      %p223 = scmp.eq.s32.totalorder %s101, 5
      %p224 = por %p222, %p223
      %p226 = scmp.ne.s32.totalorder %s211, %s225
      %p227 = scmp.eq.s32.totalorder %s101, 0
      %p228 = por %p226, %p227
      %s230 = sadd.s32 %s229, 1
      %p233 = scmp.eq.s32.totalorder %s95, 5
      %p234 = scmp.ne.s32.totalorder %s229, %s231
      %p235 = scmp.eq.s32.totalorder %s95, 0
      %p236 = por %p234, %p235
      %p237 = scmp.ne.s32.totalorder %s229, %s231
      %p238 = scmp.eq.s32.totalorder %s100, 5
      %p239 = por %p237, %p238
      %p240 = scmp.ne.s32.totalorder %s231, %s232
      %p241 = scmp.eq.s32.totalorder %s100, 0
      %p242 = por %p240, %p241
      %p243 = scmp.ne.s32.totalorder %s231, %s232
      %p244 = scmp.eq.s32.totalorder %s101, 5
      %p245 = por %p243, %p244
      %p247 = scmp.ne.s32.totalorder %s232, %s246
      %p248 = scmp.eq.s32.totalorder %s101, 0
      %p249 = por %p247, %p248
      %s251 = sadd.s32 %s250, 1
      %p254 = scmp.eq.s32.totalorder %s95, 5
      %p255 = scmp.ne.s32.totalorder %s250, %s252
      %p256 = scmp.eq.s32.totalorder %s95, 0
      %p257 = por %p255, %p256
      %p258 = scmp.ne.s32.totalorder %s250, %s252
      %p259 = scmp.eq.s32.totalorder %s100, 5
      %p260 = por %p258, %p259
      %p261 = scmp.ne.s32.totalorder %s252, %s253
      %p262 = scmp.eq.s32.totalorder %s100, 0
      %p263 = por %p261, %p262
      %p264 = scmp.ne.s32.totalorder %s252, %s253
      %p265 = scmp.eq.s32.totalorder %s101, 5
      %p266 = por %p264, %p265
      %p268 = scmp.ne.s32.totalorder %s253, %s267
      %p269 = scmp.eq.s32.totalorder %s101, 0
      %p270 = por %p268, %p269
      %s272 = sadd.s32 %s271, 1
      %p275 = scmp.eq.s32.totalorder %s95, 5
      %p276 = scmp.ne.s32.totalorder %s271, %s273
      %p277 = scmp.eq.s32.totalorder %s95, 0
      %p278 = por %p276, %p277
      %p279 = scmp.ne.s32.totalorder %s271, %s273
      %p280 = scmp.eq.s32.totalorder %s100, 5
      %p281 = por %p279, %p280
      %p282 = scmp.ne.s32.totalorder %s273, %s274
      %p283 = scmp.eq.s32.totalorder %s100, 0
      %p284 = por %p282, %p283
      %p285 = scmp.ne.s32.totalorder %s273, %s274
      %p286 = scmp.eq.s32.totalorder %s101, 5
      %p287 = por %p285, %p286
      %p289 = scmp.ne.s32.totalorder %s274, %s288
      %p290 = scmp.eq.s32.totalorder %s101, 0
      %p291 = por %p289, %p290
      %s293 = sadd.s32 %s292, 1
      %p296 = scmp.eq.s32.totalorder %s95, 5
      %p297 = scmp.ne.s32.totalorder %s292, %s294
      %p298 = scmp.eq.s32.totalorder %s95, 0
      %p299 = por %p297, %p298
      %p300 = scmp.ne.s32.totalorder %s292, %s294
      %p301 = scmp.eq.s32.totalorder %s100, 5
      %p302 = por %p300, %p301
      %p303 = scmp.ne.s32.totalorder %s294, %s295
      %p304 = scmp.eq.s32.totalorder %s100, 0
      %p305 = por %p303, %p304
      %p306 = scmp.ne.s32.totalorder %s294, %s295
      %p307 = scmp.eq.s32.totalorder %s101, 5
      %p308 = por %p306, %p307
      %p310 = scmp.ne.s32.totalorder %s295, %s309
      %p311 = scmp.eq.s32.totalorder %s101, 0
      %p312 = por %p310, %p311
      %s313 = ssub.s32 %s95, %s102
      %p314 = scmp.eq.s32.totalorder %s313, 0
      %s316 = sadd.s32 %s315, 1
      %s317 = scalar_select %p314, %s315, %s316
      %p320 = pneg %p314
      %p321 = scmp.eq.s32.totalorder %s95, 5
      %p322 = por %p320, %p321
      %p323 = scmp.ne.s32.totalorder %s315, %s318
      %p324 = scmp.eq.s32.totalorder %s95, 0
      %p325 = por %p323, %p324
      %p326 = scmp.ne.s32.totalorder %s315, %s318
      %p327 = scmp.eq.s32.totalorder %s100, 5
      %p328 = por %p326, %p327
      %p329 = scmp.ne.s32.totalorder %s318, %s319
      %p330 = scmp.eq.s32.totalorder %s100, 0
      %p331 = por %p329, %p330
      %p332 = scmp.ne.s32.totalorder %s318, %s319
      %p333 = scmp.eq.s32.totalorder %s101, 5
      %p334 = por %p332, %p333
      %p336 = scmp.ne.s32.totalorder %s319, %s335
      %p337 = scmp.eq.s32.totalorder %s101, 0
      %p338 = por %p336, %p337
      %s339 = ssub.s32 %s95, %s102
      %p340 = scmp.eq.s32.totalorder %s339, 0
      %s342 = sadd.s32 %s341, 1
      %s343 = scalar_select %p340, %s341, %s342
      %p346 = pneg %p340
      %p347 = scmp.eq.s32.totalorder %s95, 5
      %p348 = por %p346, %p347
      %p349 = scmp.ne.s32.totalorder %s341, %s344
      %p350 = scmp.eq.s32.totalorder %s95, 0
      %p351 = por %p349, %p350
      %p352 = scmp.ne.s32.totalorder %s341, %s344
      %p353 = scmp.eq.s32.totalorder %s100, 5
      %p354 = por %p352, %p353
      %p355 = scmp.ne.s32.totalorder %s344, %s345
      %p356 = scmp.eq.s32.totalorder %s100, 0
      %p357 = por %p355, %p356
      %p358 = scmp.ne.s32.totalorder %s344, %s345
      %p359 = scmp.eq.s32.totalorder %s101, 5
      %p360 = por %p358, %p359
      %p362 = scmp.ne.s32.totalorder %s345, %s361
      %p363 = scmp.eq.s32.totalorder %s101, 0
      %p364 = por %p362, %p363
      %s365 = ssub.s32 %s95, %s102
      %p366 = scmp.eq.s32.totalorder %s365, 0
      %s368 = sadd.s32 %s367, 1
      %s369 = scalar_select %p366, %s367, %s368
      %p372 = pneg %p366
      %p373 = scmp.eq.s32.totalorder %s95, 5
      %p374 = por %p372, %p373
      %p375 = scmp.ne.s32.totalorder %s367, %s370
      %p376 = scmp.eq.s32.totalorder %s95, 0
      %p377 = por %p375, %p376
      %p378 = scmp.ne.s32.totalorder %s367, %s370
      %p379 = scmp.eq.s32.totalorder %s100, 5
      %p380 = por %p378, %p379
      %p381 = scmp.ne.s32.totalorder %s370, %s371
      %p382 = scmp.eq.s32.totalorder %s100, 0
      %p383 = por %p381, %p382
      %p384 = scmp.ne.s32.totalorder %s370, %s371
      %p385 = scmp.eq.s32.totalorder %s101, 5
      %p386 = por %p384, %p385
      %p388 = scmp.ne.s32.totalorder %s371, %s387
      %p389 = scmp.eq.s32.totalorder %s101, 0
      %p390 = por %p388, %p389
      %s391 = ssub.s32 %s95, %s102
      %p392 = scmp.eq.s32.totalorder %s391, 0
      %s394 = sadd.s32 %s393, 1
      %s395 = scalar_select %p392, %s393, %s394
      %p398 = pneg %p392
      %p399 = scmp.eq.s32.totalorder %s95, 5
      %p400 = por %p398, %p399
      %p401 = scmp.ne.s32.totalorder %s393, %s396
      %p402 = scmp.eq.s32.totalorder %s95, 0
      %p403 = por %p401, %p402
      %p404 = scmp.ne.s32.totalorder %s393, %s396
      %p405 = scmp.eq.s32.totalorder %s100, 5
      %p406 = por %p404, %p405
      %p407 = scmp.ne.s32.totalorder %s396, %s397
      %p408 = scmp.eq.s32.totalorder %s100, 0
      %p409 = por %p407, %p408
      %p410 = scmp.ne.s32.totalorder %s396, %s397
      %p411 = scmp.eq.s32.totalorder %s101, 5
      %p412 = por %p410, %p411
      %p414 = scmp.ne.s32.totalorder %s397, %s413
      %p415 = scmp.eq.s32.totalorder %s101, 0
      %p416 = por %p414, %p415
      %s417 = ssub.s32 %s95, %s102
      %p418 = scmp.eq.s32.totalorder %s417, 0
      %s420 = sadd.s32 %s419, 1
      %s421 = scalar_select %p418, %s419, %s420
      %p424 = pneg %p418
      %p425 = scmp.eq.s32.totalorder %s95, 5
      %p426 = por %p424, %p425
      %p427 = scmp.ne.s32.totalorder %s419, %s422
      %p428 = scmp.eq.s32.totalorder %s95, 0
      %p429 = por %p427, %p428
      %p430 = scmp.ne.s32.totalorder %s419, %s422
      %p431 = scmp.eq.s32.totalorder %s100, 5
      %p432 = por %p430, %p431
      %p433 = scmp.ne.s32.totalorder %s422, %s423
      %p434 = scmp.eq.s32.totalorder %s100, 0
      %p435 = por %p433, %p434
      %p436 = scmp.ne.s32.totalorder %s422, %s423
      %p437 = scmp.eq.s32.totalorder %s101, 5
      %p438 = por %p436, %p437
      %p440 = scmp.ne.s32.totalorder %s423, %s439
      %p441 = scmp.eq.s32.totalorder %s101, 0
      %p442 = por %p440, %p441
      %s443 = ssub.s32 %s95, %s102
      %p444 = scmp.eq.s32.totalorder %s443, 0
      %s446 = sadd.s32 %s445, 1
      %s447 = scalar_select %p444, %s445, %s446
      %p450 = pneg %p444
      %p451 = scmp.eq.s32.totalorder %s95, 5
      %p452 = por %p450, %p451
      %p453 = scmp.ne.s32.totalorder %s445, %s448
      %p454 = scmp.eq.s32.totalorder %s95, 0
      %p455 = por %p453, %p454
      %p456 = scmp.ne.s32.totalorder %s445, %s448
      %p457 = scmp.eq.s32.totalorder %s100, 5
      %p458 = por %p456, %p457
      %p459 = scmp.ne.s32.totalorder %s448, %s449
      %p460 = scmp.eq.s32.totalorder %s100, 0
      %p461 = por %p459, %p460
      %p462 = scmp.ne.s32.totalorder %s448, %s449
      %p463 = scmp.eq.s32.totalorder %s101, 5
      %p464 = por %p462, %p463
      %p466 = scmp.ne.s32.totalorder %s449, %s465
      %p467 = scmp.eq.s32.totalorder %s101, 0
      %p468 = por %p466, %p467
      %s469 = ssub.s32 %s95, %s102
      %p470 = scmp.eq.s32.totalorder %s469, 0
      %s472 = sadd.s32 %s471, 1
      %s473 = scalar_select %p470, %s471, %s472
      %p476 = pneg %p470
      %p477 = scmp.eq.s32.totalorder %s95, 5
      %p478 = por %p476, %p477
      %p479 = scmp.ne.s32.totalorder %s471, %s474
      %p480 = scmp.eq.s32.totalorder %s95, 0
      %p481 = por %p479, %p480
      %p482 = scmp.ne.s32.totalorder %s471, %s474
      %p483 = scmp.eq.s32.totalorder %s100, 5
      %p484 = por %p482, %p483
      %p485 = scmp.ne.s32.totalorder %s474, %s475
      %p486 = scmp.eq.s32.totalorder %s100, 0
      %p487 = por %p485, %p486
      %p488 = scmp.ne.s32.totalorder %s474, %s475
      %p489 = scmp.eq.s32.totalorder %s101, 5
      %p490 = por %p488, %p489
      %p492 = scmp.ne.s32.totalorder %s475, %s491
      %p493 = scmp.eq.s32.totalorder %s101, 0
      %p494 = por %p492, %p493
      %s495 = ssub.s32 %s95, %s102
      %p496 = scmp.eq.s32.totalorder %s495, 0
      %s498 = sadd.s32 %s497, 1
      %s499 = scalar_select %p496, %s497, %s498
      %p502 = pneg %p496
      %p503 = scmp.eq.s32.totalorder %s95, 5
      %p504 = por %p502, %p503
      %p505 = scmp.ne.s32.totalorder %s497, %s500
      %p506 = scmp.eq.s32.totalorder %s95, 0
      %p507 = por %p505, %p506
      %p508 = scmp.ne.s32.totalorder %s497, %s500
      %p509 = scmp.eq.s32.totalorder %s100, 5
      %p510 = por %p508, %p509
      %p511 = scmp.ne.s32.totalorder %s500, %s501
      %p512 = scmp.eq.s32.totalorder %s100, 0
      %p513 = por %p511, %p512
      %p514 = scmp.ne.s32.totalorder %s500, %s501
      %p515 = scmp.eq.s32.totalorder %s101, 5
      %p516 = por %p514, %p515
      %p518 = scmp.ne.s32.totalorder %s501, %s517
      %p519 = scmp.eq.s32.totalorder %s101, 0
      %p520 = por %p518, %p519
      %s521 = ssub.s32 %s95, %s102
      %p522 = scmp.eq.s32.totalorder %s521, 0
      %s524 = sadd.s32 %s523, 1
      %s525 = scalar_select %p522, %s523, %s524
      %p528 = pneg %p522
      %p529 = scmp.eq.s32.totalorder %s95, 5
      %p530 = por %p528, %p529
      %p531 = scmp.ne.s32.totalorder %s523, %s526
      %p532 = scmp.eq.s32.totalorder %s95, 0
      %p533 = por %p531, %p532
      %p534 = scmp.ne.s32.totalorder %s523, %s526
      %p535 = scmp.eq.s32.totalorder %s100, 5
      %p536 = por %p534, %p535
      %p537 = scmp.ne.s32.totalorder %s526, %s527
      %p538 = scmp.eq.s32.totalorder %s100, 0
      %p539 = por %p537, %p538
      %p540 = scmp.ne.s32.totalorder %s526, %s527
      %p541 = scmp.eq.s32.totalorder %s101, 5
      %p542 = por %p540, %p541
      %p544 = scmp.ne.s32.totalorder %s527, %s543
      %p545 = scmp.eq.s32.totalorder %s101, 0
      %p546 = por %p544, %p545
      %s547 = ssub.s32 %s95, %s102
      %p548 = scmp.eq.s32.totalorder %s547, 0
      %s550 = sadd.s32 %s549, 1
      %s551 = scalar_select %p548, %s549, %s550
      %p554 = pneg %p548
      %p555 = scmp.eq.s32.totalorder %s95, 5
      %p556 = por %p554, %p555
      %p557 = scmp.ne.s32.totalorder %s549, %s552
      %p558 = scmp.eq.s32.totalorder %s95, 0
      %p559 = por %p557, %p558
      %p560 = scmp.ne.s32.totalorder %s549, %s552
      %p561 = scmp.eq.s32.totalorder %s100, 5
      %p562 = por %p560, %p561
      %p563 = scmp.ne.s32.totalorder %s552, %s553
      %p564 = scmp.eq.s32.totalorder %s100, 0
      %p565 = por %p563, %p564
      %p566 = scmp.ne.s32.totalorder %s552, %s553
      %p567 = scmp.eq.s32.totalorder %s101, 5
      %p568 = por %p566, %p567
      %p570 = scmp.ne.s32.totalorder %s553, %s569
      %p571 = scmp.eq.s32.totalorder %s101, 0
      %p572 = por %p570, %p571
      %s573 = ssub.s32 %s95, %s102
      %p574 = scmp.eq.s32.totalorder %s573, 0
      %s576 = sadd.s32 %s575, 1
      %s577 = scalar_select %p574, %s575, %s576
      %p580 = pneg %p574
      %p581 = scmp.eq.s32.totalorder %s95, 5
      %p582 = por %p580, %p581
      %p583 = scmp.ne.s32.totalorder %s575, %s578
      %p584 = scmp.eq.s32.totalorder %s95, 0
      %p585 = por %p583, %p584
      %p586 = scmp.ne.s32.totalorder %s575, %s578
      %p587 = scmp.eq.s32.totalorder %s100, 5
      %p588 = por %p586, %p587
      %p589 = scmp.ne.s32.totalorder %s578, %s579
      %p590 = scmp.eq.s32.totalorder %s100, 0
      %p591 = por %p589, %p590
      %p592 = scmp.ne.s32.totalorder %s578, %s579
      %p593 = scmp.eq.s32.totalorder %s101, 5
      %p594 = por %p592, %p593
      %p596 = scmp.ne.s32.totalorder %s579, %s595
      %p597 = scmp.eq.s32.totalorder %s101, 0
      %p598 = por %p596, %p597
      %s599 = ssub.s32 %s95, %s102
      %p600 = scmp.eq.s32.totalorder %s599, 0
      %s602 = sadd.s32 %s601, 1
      %s603 = scalar_select %p600, %s601, %s602
      %p606 = pneg %p600
      %p607 = scmp.eq.s32.totalorder %s95, 5
      %p608 = por %p606, %p607
      %p609 = scmp.ne.s32.totalorder %s601, %s604
      %p610 = scmp.eq.s32.totalorder %s95, 0
      %p611 = por %p609, %p610
      %p612 = scmp.ne.s32.totalorder %s601, %s604
      %p613 = scmp.eq.s32.totalorder %s100, 5
      %p614 = por %p612, %p613
      %p615 = scmp.ne.s32.totalorder %s604, %s605
      %p616 = scmp.eq.s32.totalorder %s100, 0
      %p617 = por %p615, %p616
      %p618 = scmp.ne.s32.totalorder %s604, %s605
      %p619 = scmp.eq.s32.totalorder %s101, 5
      %p620 = por %p618, %p619
      %p622 = scmp.ne.s32.totalorder %s605, %s621
      %p623 = scmp.eq.s32.totalorder %s101, 0
      %p624 = por %p622, %p623
      %s625 = ssub.s32 %s95, %s102
      %p626 = scmp.eq.s32.totalorder %s625, 0
      %s628 = sadd.s32 %s627, 1
      %s629 = scalar_select %p626, %s627, %s628
      %p632 = pneg %p626
      %p633 = scmp.eq.s32.totalorder %s95, 5
      %p634 = por %p632, %p633
      %p635 = scmp.ne.s32.totalorder %s627, %s630
      %p636 = scmp.eq.s32.totalorder %s95, 0
      %p637 = por %p635, %p636
      %p638 = scmp.ne.s32.totalorder %s627, %s630
      %p639 = scmp.eq.s32.totalorder %s100, 5
      %p640 = por %p638, %p639
      %p641 = scmp.ne.s32.totalorder %s630, %s631
      %p642 = scmp.eq.s32.totalorder %s100, 0
      %p643 = por %p641, %p642
      %p644 = scmp.ne.s32.totalorder %s630, %s631
      %p645 = scmp.eq.s32.totalorder %s101, 5
      %p646 = por %p644, %p645
      %p648 = scmp.ne.s32.totalorder %s631, %s647
      %p649 = scmp.eq.s32.totalorder %s101, 0
      %p650 = por %p648, %p649
      %s651 = ssub.s32 %s95, %s102
      %p652 = scmp.eq.s32.totalorder %s651, 0
      %s654 = sadd.s32 %s653, 1
      %s655 = scalar_select %p652, %s653, %s654
      %p658 = pneg %p652
      %p659 = scmp.eq.s32.totalorder %s95, 5
      %p660 = por %p658, %p659
      %p661 = scmp.ne.s32.totalorder %s653, %s656
      %p662 = scmp.eq.s32.totalorder %s95, 0
      %p663 = por %p661, %p662
      %p664 = scmp.ne.s32.totalorder %s653, %s656
      %p665 = scmp.eq.s32.totalorder %s100, 5
      %p666 = por %p664, %p665
      %p667 = scmp.ne.s32.totalorder %s656, %s657
      %p668 = scmp.eq.s32.totalorder %s100, 0
      %p669 = por %p667, %p668
      %p670 = scmp.ne.s32.totalorder %s656, %s657
      %p671 = scmp.eq.s32.totalorder %s101, 5
      %p672 = por %p670, %p671
      %p674 = scmp.ne.s32.totalorder %s657, %s673
      %p675 = scmp.eq.s32.totalorder %s101, 0
      %p676 = por %p674, %p675
      %s677 = ssub.s32 %s95, %s102
      %p678 = scmp.eq.s32.totalorder %s677, 0
      %s680 = sadd.s32 %s679, 1
      %s681 = scalar_select %p678, %s679, %s680
      %p684 = pneg %p678
      %p685 = scmp.eq.s32.totalorder %s95, 5
      %p686 = por %p684, %p685
      %p687 = scmp.ne.s32.totalorder %s679, %s682
      %p688 = scmp.eq.s32.totalorder %s95, 0
      %p689 = por %p687, %p688
      %p690 = scmp.ne.s32.totalorder %s679, %s682
      %p691 = scmp.eq.s32.totalorder %s100, 5
      %p692 = por %p690, %p691
      %p693 = scmp.ne.s32.totalorder %s682, %s683
      %p694 = scmp.eq.s32.totalorder %s100, 0
      %p695 = por %p693, %p694
      %p696 = scmp.ne.s32.totalorder %s682, %s683
      %p697 = scmp.eq.s32.totalorder %s101, 5
      %p698 = por %p696, %p697
      %p700 = scmp.ne.s32.totalorder %s683, %s699
      %p701 = scmp.eq.s32.totalorder %s101, 0
      %p702 = por %p700, %p701
      %s703 = ssub.s32 %s95, %s102
      %p704 = scmp.eq.s32.totalorder %s703, 0
      %s706 = sadd.s32 %s705, 1
      %s707 = scalar_select %p704, %s705, %s706
      %p710 = pneg %p704
      %p711 = scmp.eq.s32.totalorder %s95, 5
      %p712 = por %p710, %p711
      %p713 = scmp.ne.s32.totalorder %s705, %s708
      %p714 = scmp.eq.s32.totalorder %s95, 0
      %p715 = por %p713, %p714
      %p716 = scmp.ne.s32.totalorder %s705, %s708
      %p717 = scmp.eq.s32.totalorder %s100, 5
      %p718 = por %p716, %p717
      %p719 = scmp.ne.s32.totalorder %s708, %s709
      %p720 = scmp.eq.s32.totalorder %s100, 0
      %p721 = por %p719, %p720
      %p722 = scmp.ne.s32.totalorder %s708, %s709
      %p723 = scmp.eq.s32.totalorder %s101, 5
      %p724 = por %p722, %p723
      %p726 = scmp.ne.s32.totalorder %s709, %s725
      %p727 = scmp.eq.s32.totalorder %s101, 0
      %p728 = por %p726, %p727
      %s730 = sadd.s32 %s729, 1
      %p733 = scmp.eq.s32.totalorder %s95, 5
      %p734 = scmp.ne.s32.totalorder %s729, %s731
      %p735 = scmp.eq.s32.totalorder %s95, 0
      %p736 = por %p734, %p735
      %p737 = scmp.ne.s32.totalorder %s729, %s731
      %p738 = scmp.eq.s32.totalorder %s100, 5
      %p739 = por %p737, %p738
      %p740 = scmp.ne.s32.totalorder %s731, %s732
      %p741 = scmp.eq.s32.totalorder %s100, 0
      %p742 = por %p740, %p741
      %p743 = scmp.ne.s32.totalorder %s731, %s732
      %p744 = scmp.eq.s32.totalorder %s101, 5
      %p745 = por %p743, %p744
      %p747 = scmp.ne.s32.totalorder %s732, %s746
      %p748 = scmp.eq.s32.totalorder %s101, 0
      %p749 = por %p747, %p748
      %s751 = sadd.s32 %s750, 1
      %p754 = scmp.eq.s32.totalorder %s95, 5
      %p755 = scmp.ne.s32.totalorder %s750, %s752
      %p756 = scmp.eq.s32.totalorder %s95, 0
      %p757 = por %p755, %p756
      %p758 = scmp.ne.s32.totalorder %s750, %s752
      %p759 = scmp.eq.s32.totalorder %s100, 5
      %p760 = por %p758, %p759
      %p761 = scmp.ne.s32.totalorder %s752, %s753
      %p762 = scmp.eq.s32.totalorder %s100, 0
      %p763 = por %p761, %p762
      %p764 = scmp.ne.s32.totalorder %s752, %s753
      %p765 = scmp.eq.s32.totalorder %s101, 5
      %p766 = por %p764, %p765
      %p768 = scmp.ne.s32.totalorder %s753, %s767
      %p769 = scmp.eq.s32.totalorder %s101, 0
      %p770 = por %p768, %p769
      %s772 = sadd.s32 %s771, 1
      %p775 = scmp.eq.s32.totalorder %s95, 5
      %p776 = scmp.ne.s32.totalorder %s771, %s773
      %p777 = scmp.eq.s32.totalorder %s95, 0
      %p778 = por %p776, %p777
      %p779 = scmp.ne.s32.totalorder %s771, %s773
      %p780 = scmp.eq.s32.totalorder %s100, 5
      %p781 = por %p779, %p780
      %p782 = scmp.ne.s32.totalorder %s773, %s774
      %p783 = scmp.eq.s32.totalorder %s100, 0
      %p784 = por %p782, %p783
      %p785 = scmp.ne.s32.totalorder %s773, %s774
      %p786 = scmp.eq.s32.totalorder %s101, 5
      %p787 = por %p785, %p786
      %p789 = scmp.ne.s32.totalorder %s774, %s788
      %p790 = scmp.eq.s32.totalorder %s101, 0
      %p791 = por %p789, %p790
      %s793 = sadd.s32 %s792, 1
      %p796 = scmp.eq.s32.totalorder %s95, 5
      %p797 = scmp.ne.s32.totalorder %s792, %s794
      %p798 = scmp.eq.s32.totalorder %s95, 0
      %p799 = por %p797, %p798
      %p800 = scmp.ne.s32.totalorder %s792, %s794
      %p801 = scmp.eq.s32.totalorder %s100, 5
      %p802 = por %p800, %p801
      %p803 = scmp.ne.s32.totalorder %s794, %s795
      %p804 = scmp.eq.s32.totalorder %s100, 0
      %p805 = por %p803, %p804
      %p806 = scmp.ne.s32.totalorder %s794, %s795
      %p807 = scmp.eq.s32.totalorder %s101, 5
      %p808 = por %p806, %p807
      %p810 = scmp.ne.s32.totalorder %s795, %s809
      %p811 = scmp.eq.s32.totalorder %s101, 0
      %p812 = por %p810, %p811
      %s814 = sadd.s32 %s813, 1
      %p817 = scmp.eq.s32.totalorder %s95, 5
      %p818 = scmp.ne.s32.totalorder %s813, %s815
      %p819 = scmp.eq.s32.totalorder %s95, 0
      %p820 = por %p818, %p819
      %p821 = scmp.ne.s32.totalorder %s813, %s815
      %p822 = scmp.eq.s32.totalorder %s100, 5
      %p823 = por %p821, %p822
      %p824 = scmp.ne.s32.totalorder %s815, %s816
      %p825 = scmp.eq.s32.totalorder %s100, 0
      %p826 = por %p824, %p825
      %p827 = scmp.ne.s32.totalorder %s815, %s816
      %p828 = scmp.eq.s32.totalorder %s101, 5
      %p829 = por %p827, %p828
      %p831 = scmp.ne.s32.totalorder %s816, %s830
      %p832 = scmp.eq.s32.totalorder %s101, 0
      %p833 = por %p831, %p832
      %s835 = sadd.s32 %s834, 1
      %p838 = scmp.eq.s32.totalorder %s95, 5
      %p839 = scmp.ne.s32.totalorder %s834, %s836
      %p840 = scmp.eq.s32.totalorder %s95, 0
      %p841 = por %p839, %p840
      %p842 = scmp.ne.s32.totalorder %s834, %s836
      %p843 = scmp.eq.s32.totalorder %s100, 5
      %p844 = por %p842, %p843
      %p845 = scmp.ne.s32.totalorder %s836, %s837
      %p846 = scmp.eq.s32.totalorder %s100, 0
      %p847 = por %p845, %p846
      %p848 = scmp.ne.s32.totalorder %s836, %s837
      %p849 = scmp.eq.s32.totalorder %s101, 5
      %p850 = por %p848, %p849
      %p852 = scmp.ne.s32.totalorder %s837, %s851
      %p853 = scmp.eq.s32.totalorder %s101, 0
      %p854 = por %p852, %p853
      %s856 = sadd.s32 %s855, 1
      %p859 = scmp.eq.s32.totalorder %s95, 5
      %p860 = scmp.ne.s32.totalorder %s855, %s857
      %p861 = scmp.eq.s32.totalorder %s95, 0
      %p862 = por %p860, %p861
      %p863 = scmp.ne.s32.totalorder %s855, %s857
      %p864 = scmp.eq.s32.totalorder %s100, 5
      %p865 = por %p863, %p864
      %p866 = scmp.ne.s32.totalorder %s857, %s858
      %p867 = scmp.eq.s32.totalorder %s100, 0
      %p868 = por %p866, %p867
      %p869 = scmp.ne.s32.totalorder %s857, %s858
      %p870 = scmp.eq.s32.totalorder %s101, 5
      %p871 = por %p869, %p870
      %p873 = scmp.ne.s32.totalorder %s858, %s872
      %p874 = scmp.eq.s32.totalorder %s101, 0
      %p875 = por %p873, %p874
      %s877 = sadd.s32 %s876, 1
      %p880 = scmp.eq.s32.totalorder %s95, 5
      %p881 = scmp.ne.s32.totalorder %s876, %s878
      %p882 = scmp.eq.s32.totalorder %s95, 0
      %p883 = por %p881, %p882
      %p884 = scmp.ne.s32.totalorder %s876, %s878
      %p885 = scmp.eq.s32.totalorder %s100, 5
      %p886 = por %p884, %p885
      %p887 = scmp.ne.s32.totalorder %s878, %s879
      %p888 = scmp.eq.s32.totalorder %s100, 0
      %p889 = por %p887, %p888
      %p890 = scmp.ne.s32.totalorder %s878, %s879
      %p891 = scmp.eq.s32.totalorder %s101, 5
      %p892 = por %p890, %p891
      %p894 = scmp.ne.s32.totalorder %s879, %s893
      %p895 = scmp.eq.s32.totalorder %s101, 0
      %p896 = por %p894, %p895
      %s898 = sadd.s32 %s897, 1
      %p901 = scmp.eq.s32.totalorder %s95, 5
      %p902 = scmp.ne.s32.totalorder %s897, %s899
      %p903 = scmp.eq.s32.totalorder %s95, 0
      %p904 = por %p902, %p903
      %p905 = scmp.ne.s32.totalorder %s897, %s899
      %p906 = scmp.eq.s32.totalorder %s100, 5
      %p907 = por %p905, %p906
      %p908 = scmp.ne.s32.totalorder %s899, %s900
      %p909 = scmp.eq.s32.totalorder %s100, 0
      %p910 = por %p908, %p909
      %p911 = scmp.ne.s32.totalorder %s899, %s900
      %p912 = scmp.eq.s32.totalorder %s101, 5
      %p913 = por %p911, %p912
      %p915 = scmp.ne.s32.totalorder %s900, %s914
      %p916 = scmp.eq.s32.totalorder %s101, 0
      %p917 = por %p915, %p916
      %s919 = sadd.s32 %s918, 1
      %p922 = scmp.eq.s32.totalorder %s95, 5
      %p923 = scmp.ne.s32.totalorder %s918, %s920
      %p924 = scmp.eq.s32.totalorder %s95, 0
      %p925 = por %p923, %p924
      %p926 = scmp.ne.s32.totalorder %s918, %s920
      %p927 = scmp.eq.s32.totalorder %s100, 5
      %p928 = por %p926, %p927
      %p929 = scmp.ne.s32.totalorder %s920, %s921
      %p930 = scmp.eq.s32.totalorder %s100, 0
      %p931 = por %p929, %p930
      %p932 = scmp.ne.s32.totalorder %s920, %s921
      %p933 = scmp.eq.s32.totalorder %s101, 5
      %p934 = por %p932, %p933
      %p936 = scmp.ne.s32.totalorder %s921, %s935
      %p937 = scmp.eq.s32.totalorder %s101, 0
      %p938 = por %p936, %p937
      %s940 = sadd.s32 %s939, 1
      %p943 = scmp.eq.s32.totalorder %s95, 5
      %p944 = scmp.ne.s32.totalorder %s939, %s941
      %p945 = scmp.eq.s32.totalorder %s95, 0
      %p946 = por %p944, %p945
      %p947 = scmp.ne.s32.totalorder %s939, %s941
      %p948 = scmp.eq.s32.totalorder %s100, 5
      %p949 = por %p947, %p948
      %p950 = scmp.ne.s32.totalorder %s941, %s942
      %p951 = scmp.eq.s32.totalorder %s100, 0
      %p952 = por %p950, %p951
      %p953 = scmp.ne.s32.totalorder %s941, %s942
      %p954 = scmp.eq.s32.totalorder %s101, 5
      %p955 = por %p953, %p954
      %p957 = scmp.ne.s32.totalorder %s942, %s956
      %p958 = scmp.eq.s32.totalorder %s101, 0
      %p959 = por %p957, %p958
      %s961 = sadd.s32 %s960, 1
      %p964 = scmp.eq.s32.totalorder %s95, 5
      %p965 = scmp.ne.s32.totalorder %s960, %s962
      %p966 = scmp.eq.s32.totalorder %s95, 0
      %p967 = por %p965, %p966
      %p968 = scmp.ne.s32.totalorder %s960, %s962
      %p969 = scmp.eq.s32.totalorder %s100, 5
      %p970 = por %p968, %p969
      %p971 = scmp.ne.s32.totalorder %s962, %s963
      %p972 = scmp.eq.s32.totalorder %s100, 0
      %p973 = por %p971, %p972
      %p974 = scmp.ne.s32.totalorder %s962, %s963
      %p975 = scmp.eq.s32.totalorder %s101, 5
      %p976 = por %p974, %p975
      %p978 = scmp.ne.s32.totalorder %s963, %s977
      %p979 = scmp.eq.s32.totalorder %s101, 0
      %p980 = por %p978, %p979
      %s982 = sadd.s32 %s981, 1
      %p985 = scmp.eq.s32.totalorder %s95, 5
      %p986 = scmp.ne.s32.totalorder %s981, %s983
      %p987 = scmp.eq.s32.totalorder %s95, 0
      %p988 = por %p986, %p987
      %p989 = scmp.ne.s32.totalorder %s981, %s983
      %p990 = scmp.eq.s32.totalorder %s100, 5
      %p991 = por %p989, %p990
      %p992 = scmp.ne.s32.totalorder %s983, %s984
      %p993 = scmp.eq.s32.totalorder %s100, 0
      %p994 = por %p992, %p993
      %p995 = scmp.ne.s32.totalorder %s983, %s984
      %p996 = scmp.eq.s32.totalorder %s101, 5
      %p997 = por %p995, %p996
      %p999 = scmp.ne.s32.totalorder %s984, %s998
      %p1000 = scmp.eq.s32.totalorder %s101, 0
      %p1001 = por %p999, %p1000
      %s1003 = sadd.s32 %s1002, 1
      %p1006 = scmp.eq.s32.totalorder %s95, 5
      %p1007 = scmp.ne.s32.totalorder %s1002, %s1004
      %p1008 = scmp.eq.s32.totalorder %s95, 0
      %p1009 = por %p1007, %p1008
      %p1010 = scmp.ne.s32.totalorder %s1002, %s1004
      %p1011 = scmp.eq.s32.totalorder %s100, 5
      %p1012 = por %p1010, %p1011
      %p1013 = scmp.ne.s32.totalorder %s1004, %s1005
      %p1014 = scmp.eq.s32.totalorder %s100, 0
      %p1015 = por %p1013, %p1014
      %p1016 = scmp.ne.s32.totalorder %s1004, %s1005
      %p1017 = scmp.eq.s32.totalorder %s101, 5
      %p1018 = por %p1016, %p1017
      %p1020 = scmp.ne.s32.totalorder %s1005, %s1019
      %p1021 = scmp.eq.s32.totalorder %s101, 0
      %p1022 = por %p1020, %p1021
      %s1024 = sadd.s32 %s1023, 1
      %p1027 = scmp.eq.s32.totalorder %s95, 5
      %p1028 = scmp.ne.s32.totalorder %s1023, %s1025
      %p1029 = scmp.eq.s32.totalorder %s95, 0
      %p1030 = por %p1028, %p1029
      %p1031 = scmp.ne.s32.totalorder %s1023, %s1025
      %p1032 = scmp.eq.s32.totalorder %s100, 5
      %p1033 = por %p1031, %p1032
      %p1034 = scmp.ne.s32.totalorder %s1025, %s1026
      %p1035 = scmp.eq.s32.totalorder %s100, 0
      %p1036 = por %p1034, %p1035
      %p1037 = scmp.ne.s32.totalorder %s1025, %s1026
      %p1038 = scmp.eq.s32.totalorder %s101, 5
      %p1039 = por %p1037, %p1038
      %p1041 = scmp.ne.s32.totalorder %s1026, %s1040
      %p1042 = scmp.eq.s32.totalorder %s101, 0
      %p1043 = por %p1041, %p1042
      %p1044 = scmp.le.s32.totalorder 1, %s95
      %p1045 = scmp.lt.s32.totalorder %s95, 7
      %p1046 = pnand %p1044, %p1045
      %p1047 = pneg %p1046
      // Predicated region
      $region9: #{attention_vae_forward.1} parent=5 // pred_check
        _
      $region10: #{attention_vae_forward.1} parent=5 // pred_check_branch
        %1049 = sbr.rel (%p1046) target = $region12
      $region11: #{attention_vae_forward.1} parent=5 // pred_region
        %s1050 = ssub.s32 %s95, 1
        // Predicated region
        $region13: #{attention_vae_forward.1} parent=11 // pred_check
          %p1051 = pneg %p116
        $region14: #{attention_vae_forward.1} parent=11 // pred_check_branch
          %1053 = sbr.rel (%p1051) target = $region16
        $region15: #{attention_vae_forward.1} parent=11 // pred_region
          _
        $region16: #{attention_vae_forward.1} parent=11 // pred_fallthru
          _
        // Predicated region
        $region17: #{attention_vae_forward.1} parent=11 // pred_check
          %p1054 = pneg %p137
        $region18: #{attention_vae_forward.1} parent=11 // pred_check_branch
          %1056 = sbr.rel (%p1054) target = $region20
        $region19: #{attention_vae_forward.1} parent=11 // pred_region
          _
        $region20: #{attention_vae_forward.1} parent=11 // pred_fallthru
          _
        // Predicated region
        $region21: #{attention_vae_forward.1} parent=11 // pred_check
          %p1057 = pneg %p158
        $region22: #{attention_vae_forward.1} parent=11 // pred_check_branch
          %1059 = sbr.rel (%p1057) target = $region24
        $region23: #{attention_vae_forward.1} parent=11 // pred_region
          _
        $region24: #{attention_vae_forward.1} parent=11 // pred_fallthru
          _
        // Predicated region
        $region25: #{attention_vae_forward.1} parent=11 // pred_check
          %p1060 = pneg %p179
        $region26: #{attention_vae_forward.1} parent=11 // pred_check_branch
          %1062 = sbr.rel (%p1060) target = $region28
        $region27: #{attention_vae_forward.1} parent=11 // pred_region
          _
        $region28: #{attention_vae_forward.1} parent=11 // pred_fallthru
          _
        // Predicated region
        $region29: #{attention_vae_forward.1} parent=11 // pred_check
          %p1063 = pneg %p200
        $region30: #{attention_vae_forward.1} parent=11 // pred_check_branch
          %1065 = sbr.rel (%p1063) target = $region32
        $region31: #{attention_vae_forward.1} parent=11 // pred_region
          _
        $region32: #{attention_vae_forward.1} parent=11 // pred_fallthru
          _
        // Predicated region
        $region33: #{attention_vae_forward.1} parent=11 // pred_check
          %p1066 = pneg %p221
        $region34: #{attention_vae_forward.1} parent=11 // pred_check_branch
          %1068 = sbr.rel (%p1066) target = $region36
        $region35: #{attention_vae_forward.1} parent=11 // pred_region
          _
        $region36: #{attention_vae_forward.1} parent=11 // pred_fallthru
          _
        // Predicated region
        $region37: #{attention_vae_forward.1} parent=11 // pred_check
          %p1069 = pneg %p242
        $region38: #{attention_vae_forward.1} parent=11 // pred_check_branch
          %1071 = sbr.rel (%p1069) target = $region40
        $region39: #{attention_vae_forward.1} parent=11 // pred_region
          %1073 = vsyncadd [#allocation4], 0
          %s1074 = sshll.u32 %s13, 4
          %s1075 = int_to_ptr.hbm [resolvable:$true] %s1074
          %s1076 = sshll.u32 [#allocation3], 4
          %s1077 = int_to_ptr.vmem [resolvable:$true] %s1076
          %1082 = dma.hbm_to_vmem [thread:$0]  %s1075, 256, %s1077, [#allocation4], 128, 128, 8
        $region40: #{attention_vae_forward.1} parent=11 // pred_fallthru
          _
        // Predicated region
        $region41: #{attention_vae_forward.1} parent=11 // pred_check
          %p1083 = pneg %p263
        $region42: #{attention_vae_forward.1} parent=11 // pred_check_branch
          %1085 = sbr.rel (%p1083) target = $region44
        $region43: #{attention_vae_forward.1} parent=11 // pred_region
          _
        $region44: #{attention_vae_forward.1} parent=11 // pred_fallthru
          _
        // Predicated region
        $region45: #{attention_vae_forward.1} parent=11 // pred_check
          %p1086 = pneg %p284
        $region46: #{attention_vae_forward.1} parent=11 // pred_check_branch
          %1088 = sbr.rel (%p1086) target = $region48
        $region47: #{attention_vae_forward.1} parent=11 // pred_region
          _
        $region48: #{attention_vae_forward.1} parent=11 // pred_fallthru
          _
        // Predicated region
        $region49: #{attention_vae_forward.1} parent=11 // pred_check
          %p1089 = pneg %p305
        $region50: #{attention_vae_forward.1} parent=11 // pred_check_branch
          %1091 = sbr.rel (%p1089) target = $region52
        $region51: #{attention_vae_forward.1} parent=11 // pred_region
          %1093 = vsyncadd [#allocation7], 0
          %s1095 = sshll.u32 %s19, 4
          %s1096 = int_to_ptr.hbm [resolvable:$true] %s1095
          %s1097 = sshll.u32 [#allocation6], 4
          %s1098 = int_to_ptr.vmem [resolvable:$true] %s1097
          %1100 = dma.hbm_to_vmem [thread:$0]  %s1096, 16, %s1098, [#allocation7]
        $region52: #{attention_vae_forward.1} parent=11 // pred_fallthru
          _
        // Predicated region
        $region53: #{attention_vae_forward.1} parent=11 // pred_check
          %p1101 = pneg %p742
        $region54: #{attention_vae_forward.1} parent=11 // pred_check_branch
          %1103 = sbr.rel (%p1101) target = $region56
        $region55: #{attention_vae_forward.1} parent=11 // pred_region
          _
        $region56: #{attention_vae_forward.1} parent=11 // pred_fallthru
          _
        // Predicated region
        $region57: #{attention_vae_forward.1} parent=11 // pred_check
          %p1104 = pneg %p763
        $region58: #{attention_vae_forward.1} parent=11 // pred_check_branch
          %1106 = sbr.rel (%p1104) target = $region60
        $region59: #{attention_vae_forward.1} parent=11 // pred_region
          %1108 = vsyncadd [#allocation7], 0
          %s1110 = sshll.u32 %s55, 4
          %s1111 = int_to_ptr.hbm [resolvable:$true] %s1110
          %s1112 = sshll.u32 [#allocation21], 4
          %s1113 = int_to_ptr.vmem [resolvable:$true] %s1112
          %1115 = dma.hbm_to_vmem [thread:$0]  %s1111, 16, %s1113, [#allocation7]
        $region60: #{attention_vae_forward.1} parent=11 // pred_fallthru
          _
        // Predicated region
        $region61: #{attention_vae_forward.1} parent=11 // pred_check
          %p1116 = pneg %p784
        $region62: #{attention_vae_forward.1} parent=11 // pred_check_branch
          %1118 = sbr.rel (%p1116) target = $region64
        $region63: #{attention_vae_forward.1} parent=11 // pred_region
          _
        $region64: #{attention_vae_forward.1} parent=11 // pred_fallthru
          _
        // Predicated region
        $region65: #{attention_vae_forward.1} parent=11 // pred_check
          %p1119 = pneg %p805
        $region66: #{attention_vae_forward.1} parent=11 // pred_check_branch
          %1121 = sbr.rel (%p1119) target = $region68
        $region67: #{attention_vae_forward.1} parent=11 // pred_region
          %1123 = vsyncadd [#allocation23], 0
          %s1125 = sshll.u32 %s59, 4
          %s1126 = int_to_ptr.hbm [resolvable:$true] %s1125
          %s1127 = sshll.u32 [#allocation22], 4
          %s1128 = int_to_ptr.vmem [resolvable:$true] %s1127
          %1130 = dma.hbm_to_vmem [thread:$0]  %s1126, 16, %s1128, [#allocation23]
        $region68: #{attention_vae_forward.1} parent=11 // pred_fallthru
          _
        // Predicated region
        $region69: #{attention_vae_forward.1} parent=11 // pred_check
          %p1131 = pneg %p826
        $region70: #{attention_vae_forward.1} parent=11 // pred_check_branch
          %1133 = sbr.rel (%p1131) target = $region72
        $region71: #{attention_vae_forward.1} parent=11 // pred_region
          %1135 = vsyncadd [#allocation23], 0
          %s1136 = sshll.u32 %s61, 4
          %s1137 = int_to_ptr.hbm [resolvable:$true] %s1136
          %s1138 = sshll.u32 [#allocation24], 4
          %s1139 = int_to_ptr.vmem [resolvable:$true] %s1138
          %1144 = dma.hbm_to_vmem [thread:$0]  %s1137, 384, %s1139, [#allocation23], 128, 128, 8
        $region72: #{attention_vae_forward.1} parent=11 // pred_fallthru
          _
        // Predicated region
        $region73: #{attention_vae_forward.1} parent=11 // pred_check
          %p1145 = pneg %p847
        $region74: #{attention_vae_forward.1} parent=11 // pred_check_branch
          %1147 = sbr.rel (%p1145) target = $region76
        $region75: #{attention_vae_forward.1} parent=11 // pred_region
          %1149 = vsyncadd [#allocation26], 0
          %s1151 = sshll.u32 %s63, 4
          %s1152 = int_to_ptr.hbm [resolvable:$true] %s1151
          %s1153 = sshll.u32 [#allocation25], 4
          %s1154 = int_to_ptr.vmem [resolvable:$true] %s1153
          %1156 = dma.hbm_to_vmem [thread:$0]  %s1152, 16, %s1154, [#allocation26]
        $region76: #{attention_vae_forward.1} parent=11 // pred_fallthru
          _
        // Predicated region
        $region77: #{attention_vae_forward.1} parent=11 // pred_check
          %p1157 = pneg %p868
        $region78: #{attention_vae_forward.1} parent=11 // pred_check_branch
          %1159 = sbr.rel (%p1157) target = $region80
        $region79: #{attention_vae_forward.1} parent=11 // pred_region
          _
        $region80: #{attention_vae_forward.1} parent=11 // pred_fallthru
          _
        // Predicated region
        $region81: #{attention_vae_forward.1} parent=11 // pred_check
          %p1160 = pneg %p889
        $region82: #{attention_vae_forward.1} parent=11 // pred_check_branch
          %1162 = sbr.rel (%p1160) target = $region84
        $region83: #{attention_vae_forward.1} parent=11 // pred_region
          %1164 = vsyncadd [#allocation26], 0
          %s1166 = sshll.u32 %s67, 4
          %s1167 = int_to_ptr.hbm [resolvable:$true] %s1166
          %s1168 = sshll.u32 [#allocation27], 4
          %s1169 = int_to_ptr.vmem [resolvable:$true] %s1168
          %1171 = dma.hbm_to_vmem [thread:$0]  %s1167, 16, %s1169, [#allocation26]
        $region84: #{attention_vae_forward.1} parent=11 // pred_fallthru
          _
        // Predicated region
        $region85: #{attention_vae_forward.1} parent=11 // pred_check
          %p1172 = pneg %p910
        $region86: #{attention_vae_forward.1} parent=11 // pred_check_branch
          %1174 = sbr.rel (%p1172) target = $region88
        $region87: #{attention_vae_forward.1} parent=11 // pred_region
          %1176 = vsyncadd [#allocation29], 0
          %s1178 = sshll.u32 %s69, 4
          %s1179 = int_to_ptr.hbm [resolvable:$true] %s1178
          %s1180 = sshll.u32 [#allocation28], 4
          %s1181 = int_to_ptr.vmem [resolvable:$true] %s1180
          %1183 = dma.hbm_to_vmem [thread:$0]  %s1179, 128, %s1181, [#allocation29]
        $region88: #{attention_vae_forward.1} parent=11 // pred_fallthru
          _
        // Predicated region
        $region89: #{attention_vae_forward.1} parent=11 // pred_check
          %p1184 = pneg %p931
        $region90: #{attention_vae_forward.1} parent=11 // pred_check_branch
          %1186 = sbr.rel (%p1184) target = $region92
        $region91: #{attention_vae_forward.1} parent=11 // pred_region
          %1188 = vsyncadd [#allocation29], 0
          %s1190 = sshll.u32 %s71, 4
          %s1191 = int_to_ptr.hbm [resolvable:$true] %s1190
          %s1192 = sshll.u32 [#allocation30], 4
          %s1193 = int_to_ptr.vmem [resolvable:$true] %s1192
          %1195 = dma.hbm_to_vmem [thread:$0]  %s1191, 16, %s1193, [#allocation29]
        $region92: #{attention_vae_forward.1} parent=11 // pred_fallthru
          _
        // Predicated region
        $region93: #{attention_vae_forward.1} parent=11 // pred_check
          %p1196 = pneg %p952
        $region94: #{attention_vae_forward.1} parent=11 // pred_check_branch
          %1198 = sbr.rel (%p1196) target = $region96
        $region95: #{attention_vae_forward.1} parent=11 // pred_region
          %1200 = vsyncadd [#allocation32], 0
          %s1201 = sshll.u32 %s73, 4
          %s1202 = int_to_ptr.hbm [resolvable:$true] %s1201
          %s1203 = sshll.u32 [#allocation31], 4
          %s1204 = int_to_ptr.vmem [resolvable:$true] %s1203
          %1209 = dma.hbm_to_vmem [thread:$0]  %s1202, 1024, %s1204, [#allocation32], 128, 128, 8
        $region96: #{attention_vae_forward.1} parent=11 // pred_fallthru
          _
        // Predicated region
        $region97: #{attention_vae_forward.1} parent=11 // pred_check
          %p1210 = pneg %p973
        $region98: #{attention_vae_forward.1} parent=11 // pred_check_branch
          %1212 = sbr.rel (%p1210) target = $region100
        $region99: #{attention_vae_forward.1} parent=11 // pred_region
          %1214 = vsyncadd [#allocation32], 0
          %s1216 = sshll.u32 %s75, 4
          %s1217 = int_to_ptr.hbm [resolvable:$true] %s1216
          %s1218 = sshll.u32 [#allocation33], 4
          %s1219 = int_to_ptr.vmem [resolvable:$true] %s1218
          %1221 = dma.hbm_to_vmem [thread:$0]  %s1217, 16, %s1219, [#allocation32]
        $region100: #{attention_vae_forward.1} parent=11 // pred_fallthru
          _
      $region12: #{attention_vae_forward.1} parent=5 // pred_fallthru
        _
      %p1222 = scmp.lt.s32.totalorder %s95, 6
      // Predicated region
      $region101: #{attention_vae_forward.1} parent=5 // pred_check
        %p1223 = pneg %p1222
      $region102: #{attention_vae_forward.1} parent=5 // pred_check_branch
        %1225 = sbr.rel (%p1223) target = $region104
      $region103: #{attention_vae_forward.1} parent=5 // pred_region
        // Predicated region
        $region105: #{attention_vae_forward.1} parent=103 // pred_check
          %p1226 = pneg %p325
        $region106: #{attention_vae_forward.1} parent=103 // pred_check_branch
          %1228 = sbr.rel (%p1226) target = $region108
        $region107: #{attention_vae_forward.1} parent=103 // pred_region
          %p1229 = scmp.lt.s32.totalorder %s95, 5
          %s1230 = scalar_select %p1229, %s95, 5
          %s1231 = smul.addr %s1230, 3
          %s1232 = smul.addr %s1231, 8
          %s1233 = scalar_lea.vmem %s21, %s1232
        $region108: #{attention_vae_forward.1} parent=103 // pred_fallthru
          _
        // Predicated region
        $region109: #{attention_vae_forward.1} parent=103 // pred_check
          %p1234 = pneg %p351
        $region110: #{attention_vae_forward.1} parent=103 // pred_check_branch
          %1236 = sbr.rel (%p1234) target = $region112
        $region111: #{attention_vae_forward.1} parent=103 // pred_region
          %s1237 = sand.u32 %s95, 1
          %s1238 = scalar_lea.sflag [#allocation4], %s1237
          %s1239 = sand.u32 %s341, 1
          %s1240 = scalar_lea.vmem [#allocation8], %s1239
          %1242 = vsyncadd %s1238, 0
          %s1243 = scalar_lea.hbm %s23, %s95
          %s1245 = sshll.u32 %s1243, 4
          %s1246 = int_to_ptr.hbm [resolvable:$true] %s1245
          %s1247 = sshll.u32 %s1240, 4
          %s1248 = int_to_ptr.vmem [resolvable:$true] %s1247
          %1250 = dma.hbm_to_vmem [thread:$0]  %s1246, 16, %s1248, %s1238
        $region112: #{attention_vae_forward.1} parent=103 // pred_fallthru
          _
        // Predicated region
        $region113: #{attention_vae_forward.1} parent=103 // pred_check
          %p1251 = pneg %p377
        $region114: #{attention_vae_forward.1} parent=103 // pred_check_branch
          %1253 = sbr.rel (%p1251) target = $region116
        $region115: #{attention_vae_forward.1} parent=103 // pred_region
          %s1254 = sand.u32 %s95, 1
          %s1255 = scalar_lea.sflag [#allocation4], %s1254
          %s1256 = sand.u32 %s367, 1
          %s1257 = smul.addr %s1256, 24
          %s1258 = scalar_lea.vmem [#allocation9], %s1257
          %1260 = vsyncadd %s1255, 0
          %s1261 = smul.addr %s95, 3
          %s1262 = smul.addr %s1261, 8
          %s1263 = scalar_lea.hbm %s25, %s1262
          %s1264 = sshll.u32 %s1263, 4
          %s1265 = int_to_ptr.hbm [resolvable:$true] %s1264
          %s1266 = sshll.u32 %s1258, 4
          %s1267 = int_to_ptr.vmem [resolvable:$true] %s1266
          %1272 = dma.hbm_to_vmem [thread:$0]  %s1265, 384, %s1267, %s1255, 128, 128, 8
        $region116: #{attention_vae_forward.1} parent=103 // pred_fallthru
          _
        // Predicated region
        $region117: #{attention_vae_forward.1} parent=103 // pred_check
          %p1273 = pneg %p403
        $region118: #{attention_vae_forward.1} parent=103 // pred_check_branch
          %1275 = sbr.rel (%p1273) target = $region120
        $region119: #{attention_vae_forward.1} parent=103 // pred_region
          %s1276 = sand.u32 %s95, 1
          %s1277 = scalar_lea.sflag [#allocation4], %s1276
          %s1278 = sand.u32 %s393, 1
          %s1279 = scalar_lea.vmem [#allocation10], %s1278
          %1281 = vsyncadd %s1277, 0
          %s1282 = scalar_lea.hbm %s27, %s95
          %s1284 = sshll.u32 %s1282, 4
          %s1285 = int_to_ptr.hbm [resolvable:$true] %s1284
          %s1286 = sshll.u32 %s1279, 4
          %s1287 = int_to_ptr.vmem [resolvable:$true] %s1286
          %1289 = dma.hbm_to_vmem [thread:$0]  %s1285, 16, %s1287, %s1277
        $region120: #{attention_vae_forward.1} parent=103 // pred_fallthru
          _
        // Predicated region
        $region121: #{attention_vae_forward.1} parent=103 // pred_check
          %p1290 = pneg %p429
        $region122: #{attention_vae_forward.1} parent=103 // pred_check_branch
          %1292 = sbr.rel (%p1290) target = $region124
        $region123: #{attention_vae_forward.1} parent=103 // pred_region
          %s1293 = sand.u32 %s95, 1
          %s1294 = scalar_lea.sflag [#allocation4], %s1293
          %s1295 = sand.u32 %s419, 1
          %s1296 = smul.addr %s1295, 24
          %s1297 = scalar_lea.vmem [#allocation11], %s1296
          %1299 = vsyncadd %s1294, 0
          %s1300 = smul.addr %s95, 3
          %s1301 = smul.addr %s1300, 8
          %s1302 = scalar_lea.hbm %s29, %s1301
          %s1303 = sshll.u32 %s1302, 4
          %s1304 = int_to_ptr.hbm [resolvable:$true] %s1303
          %s1305 = sshll.u32 %s1297, 4
          %s1306 = int_to_ptr.vmem [resolvable:$true] %s1305
          %1311 = dma.hbm_to_vmem [thread:$0]  %s1304, 384, %s1306, %s1294, 128, 128, 8
        $region124: #{attention_vae_forward.1} parent=103 // pred_fallthru
          _
        // Predicated region
        $region125: #{attention_vae_forward.1} parent=103 // pred_check
          %p1312 = pneg %p455
        $region126: #{attention_vae_forward.1} parent=103 // pred_check_branch
          %1314 = sbr.rel (%p1312) target = $region128
        $region127: #{attention_vae_forward.1} parent=103 // pred_region
          %s1315 = sand.u32 %s95, 1
          %s1316 = scalar_lea.sflag [#allocation4], %s1315
          %s1317 = sand.u32 %s445, 1
          %s1318 = scalar_lea.vmem [#allocation12], %s1317
          %1320 = vsyncadd %s1316, 0
          %s1321 = scalar_lea.hbm %s31, %s95
          %s1323 = sshll.u32 %s1321, 4
          %s1324 = int_to_ptr.hbm [resolvable:$true] %s1323
          %s1325 = sshll.u32 %s1318, 4
          %s1326 = int_to_ptr.vmem [resolvable:$true] %s1325
          %1328 = dma.hbm_to_vmem [thread:$0]  %s1324, 16, %s1326, %s1316
        $region128: #{attention_vae_forward.1} parent=103 // pred_fallthru
          _
        // Predicated region
        $region129: #{attention_vae_forward.1} parent=103 // pred_check
          %p1329 = pneg %p481
        $region130: #{attention_vae_forward.1} parent=103 // pred_check_branch
          %1331 = sbr.rel (%p1329) target = $region132
        $region131: #{attention_vae_forward.1} parent=103 // pred_region
          %s1332 = sand.u32 %s95, 1
          %s1333 = scalar_lea.sflag [#allocation4], %s1332
          %s1334 = sand.u32 %s471, 1
          %s1335 = smul.addr %s1334, 24
          %s1336 = scalar_lea.vmem [#allocation13], %s1335
          %1338 = vsyncadd %s1333, 0
          %s1339 = smul.addr %s95, 3
          %s1340 = smul.addr %s1339, 8
          %s1341 = scalar_lea.hbm %s33, %s1340
          %s1342 = sshll.u32 %s1341, 4
          %s1343 = int_to_ptr.hbm [resolvable:$true] %s1342
          %s1344 = sshll.u32 %s1336, 4
          %s1345 = int_to_ptr.vmem [resolvable:$true] %s1344
          %1350 = dma.hbm_to_vmem [thread:$0]  %s1343, 384, %s1345, %s1333, 128, 128, 8
        $region132: #{attention_vae_forward.1} parent=103 // pred_fallthru
          _
        // Predicated region
        $region133: #{attention_vae_forward.1} parent=103 // pred_check
          %p1351 = pneg %p507
        $region134: #{attention_vae_forward.1} parent=103 // pred_check_branch
          %1353 = sbr.rel (%p1351) target = $region136
        $region135: #{attention_vae_forward.1} parent=103 // pred_region
          %s1354 = sand.u32 %s95, 1
          %s1355 = scalar_lea.sflag [#allocation4], %s1354
          %s1356 = sand.u32 %s497, 1
          %s1357 = scalar_lea.vmem [#allocation14], %s1356
          %1359 = vsyncadd %s1355, 0
          %s1360 = scalar_lea.hbm %s35, %s95
          %s1362 = sshll.u32 %s1360, 4
          %s1363 = int_to_ptr.hbm [resolvable:$true] %s1362
          %s1364 = sshll.u32 %s1357, 4
          %s1365 = int_to_ptr.vmem [resolvable:$true] %s1364
          %1367 = dma.hbm_to_vmem [thread:$0]  %s1363, 16, %s1365, %s1355
        $region136: #{attention_vae_forward.1} parent=103 // pred_fallthru
          _
        // Predicated region
        $region137: #{attention_vae_forward.1} parent=103 // pred_check
          %p1368 = pneg %p533
        $region138: #{attention_vae_forward.1} parent=103 // pred_check_branch
          %1370 = sbr.rel (%p1368) target = $region140
        $region139: #{attention_vae_forward.1} parent=103 // pred_region
          %p1371 = scmp.lt.s32.totalorder %s95, 5
          %s1372 = scalar_select %p1371, %s95, 5
          %s1373 = smul.addr %s1372, 48
          %s1374 = smul.addr %s1373, 4
          %s1375 = scalar_lea.vmem %s37, %s1374
        $region140: #{attention_vae_forward.1} parent=103 // pred_fallthru
          _
        // Predicated region
        $region141: #{attention_vae_forward.1} parent=103 // pred_check
          %p1376 = pneg %p559
        $region142: #{attention_vae_forward.1} parent=103 // pred_check_branch
          %1378 = sbr.rel (%p1376) target = $region144
        $region143: #{attention_vae_forward.1} parent=103 // pred_region
          %p1379 = scmp.lt.s32.totalorder %s95, 5
          %s1380 = scalar_select %p1379, %s95, 5
          %s1381 = smul.addr %s1380, 16
          %s1382 = scalar_lea.vmem %s39, %s1381
        $region144: #{attention_vae_forward.1} parent=103 // pred_fallthru
          _
        // Predicated region
        $region145: #{attention_vae_forward.1} parent=103 // pred_check
          %p1383 = pneg %p585
        $region146: #{attention_vae_forward.1} parent=103 // pred_check_branch
          %1385 = sbr.rel (%p1383) target = $region148
        $region147: #{attention_vae_forward.1} parent=103 // pred_region
          %s1386 = sand.u32 %s95, 1
          %s1387 = scalar_lea.sflag [#allocation4], %s1386
          %s1388 = sand.u32 %s575, 1
          %s1389 = smul.addr %s1388, 192
          %s1390 = scalar_lea.vmem [#allocation15], %s1389
          %1392 = vsyncadd %s1387, 0
          %s1393 = smul.addr %s95, 48
          %s1394 = smul.addr %s1393, 4
          %s1395 = scalar_lea.hbm %s41, %s1394
          %s1396 = sshll.u32 %s1395, 4
          %s1397 = int_to_ptr.hbm [resolvable:$true] %s1396
          %s1398 = sshll.u32 %s1390, 4
          %s1399 = int_to_ptr.vmem [resolvable:$true] %s1398
          %1404 = dma.hbm_to_vmem [thread:$0]  %s1397, 3072, %s1399, %s1387, 1024, 1024, 64
        $region148: #{attention_vae_forward.1} parent=103 // pred_fallthru
          _
        // Predicated region
        $region149: #{attention_vae_forward.1} parent=103 // pred_check
          %p1405 = pneg %p611
        $region150: #{attention_vae_forward.1} parent=103 // pred_check_branch
          %1407 = sbr.rel (%p1405) target = $region152
        $region151: #{attention_vae_forward.1} parent=103 // pred_region
          %s1408 = sand.u32 %s95, 1
          %s1409 = scalar_lea.sflag [#allocation4], %s1408
          %s1410 = sand.u32 %s601, 1
          %s1411 = scalar_lea.vmem [#allocation16], %s1410
          %1413 = vsyncadd %s1409, 0
          %s1414 = scalar_lea.hbm %s43, %s95
          %s1416 = sshll.u32 %s1414, 4
          %s1417 = int_to_ptr.hbm [resolvable:$true] %s1416
          %s1418 = sshll.u32 %s1411, 4
          %s1419 = int_to_ptr.vmem [resolvable:$true] %s1418
          %1421 = dma.hbm_to_vmem [thread:$0]  %s1417, 16, %s1419, %s1409
        $region152: #{attention_vae_forward.1} parent=103 // pred_fallthru
          _
        // Predicated region
        $region153: #{attention_vae_forward.1} parent=103 // pred_check
          %p1422 = pneg %p637
        $region154: #{attention_vae_forward.1} parent=103 // pred_check_branch
          %1424 = sbr.rel (%p1422) target = $region156
        $region155: #{attention_vae_forward.1} parent=103 // pred_region
          %s1425 = sand.u32 %s95, 1
          %s1426 = scalar_lea.sflag [#allocation4], %s1425
          %s1427 = sand.u32 %s627, 1
          %s1428 = scalar_lea.vmem [#allocation17], %s1427
          %1430 = vsyncadd %s1426, 0
          %s1431 = scalar_lea.hbm %s45, %s95
          %s1433 = sshll.u32 %s1431, 4
          %s1434 = int_to_ptr.hbm [resolvable:$true] %s1433
          %s1435 = sshll.u32 %s1428, 4
          %s1436 = int_to_ptr.vmem [resolvable:$true] %s1435
          %1438 = dma.hbm_to_vmem [thread:$0]  %s1434, 16, %s1436, %s1426
        $region156: #{attention_vae_forward.1} parent=103 // pred_fallthru
          _
        // Predicated region
        $region157: #{attention_vae_forward.1} parent=103 // pred_check
          %p1439 = pneg %p663
        $region158: #{attention_vae_forward.1} parent=103 // pred_check_branch
          %1441 = sbr.rel (%p1439) target = $region160
        $region159: #{attention_vae_forward.1} parent=103 // pred_region
          %s1442 = sand.u32 %s95, 1
          %s1443 = scalar_lea.sflag [#allocation4], %s1442
          %s1444 = sand.u32 %s653, 1
          %s1445 = scalar_lea.vmem [#allocation18], %s1444
          %1447 = vsyncadd %s1443, 0
          %s1448 = scalar_lea.hbm %s47, %s95
          %s1450 = sshll.u32 %s1448, 4
          %s1451 = int_to_ptr.hbm [resolvable:$true] %s1450
          %s1452 = sshll.u32 %s1445, 4
          %s1453 = int_to_ptr.vmem [resolvable:$true] %s1452
          %1455 = dma.hbm_to_vmem [thread:$0]  %s1451, 16, %s1453, %s1443
        $region160: #{attention_vae_forward.1} parent=103 // pred_fallthru
          _
        // Predicated region
        $region161: #{attention_vae_forward.1} parent=103 // pred_check
          %p1456 = pneg %p689
        $region162: #{attention_vae_forward.1} parent=103 // pred_check_branch
          %1458 = sbr.rel (%p1456) target = $region164
        $region163: #{attention_vae_forward.1} parent=103 // pred_region
          %s1459 = sand.u32 %s95, 1
          %s1460 = scalar_lea.sflag [#allocation4], %s1459
          %s1461 = sand.u32 %s679, 1
          %s1462 = scalar_lea.vmem [#allocation19], %s1461
          %1464 = vsyncadd %s1460, 0
          %s1465 = scalar_lea.hbm %s49, %s95
          %s1467 = sshll.u32 %s1465, 4
          %s1468 = int_to_ptr.hbm [resolvable:$true] %s1467
          %s1469 = sshll.u32 %s1462, 4
          %s1470 = int_to_ptr.vmem [resolvable:$true] %s1469
          %1472 = dma.hbm_to_vmem [thread:$0]  %s1468, 16, %s1470, %s1460
        $region164: #{attention_vae_forward.1} parent=103 // pred_fallthru
          _
        // Predicated region
        $region165: #{attention_vae_forward.1} parent=103 // pred_check
          %p1473 = pneg %p715
        $region166: #{attention_vae_forward.1} parent=103 // pred_check_branch
          %1475 = sbr.rel (%p1473) target = $region168
        $region167: #{attention_vae_forward.1} parent=103 // pred_region
          %s1476 = sand.u32 %s95, 1
          %s1477 = scalar_lea.sflag [#allocation4], %s1476
          %s1478 = sand.u32 %s705, 1
          %s1479 = scalar_lea.vmem [#allocation20], %s1478
          %1481 = vsyncadd %s1477, 0
          %s1482 = scalar_lea.hbm %s51, %s95
          %s1484 = sshll.u32 %s1482, 4
          %s1485 = int_to_ptr.hbm [resolvable:$true] %s1484
          %s1486 = sshll.u32 %s1479, 4
          %s1487 = int_to_ptr.vmem [resolvable:$true] %s1486
          %1489 = dma.hbm_to_vmem [thread:$0]  %s1485, 16, %s1487, %s1477
        $region168: #{attention_vae_forward.1} parent=103 // pred_fallthru
          _
      $region104: #{attention_vae_forward.1} parent=5 // pred_fallthru
        _
      %p1490 = scmp.le.s32.totalorder 1, %s95
      %p1491 = scmp.lt.s32.totalorder %s95, 7
      %p1492 = pnand %p1490, %p1491
      %p1493 = pneg %p1492
      // Predicated region
      $region169: #{attention_vae_forward.1} parent=5 // pred_check
        _
      $region170: #{attention_vae_forward.1} parent=5 // pred_check_branch
        %1495 = sbr.rel (%p1492) target = $region172
      $region171: #{attention_vae_forward.1} parent=5 // pred_region
        %s1496 = ssub.s32 %s95, 1
        // Predicated region
        $region173: #{attention_vae_forward.1} parent=171 // pred_check
          %p1497 = pneg %p242
        $region174: #{attention_vae_forward.1} parent=171 // pred_check_branch
          %1499 = sbr.rel (%p1497) target = $region176
        $region175: #{attention_vae_forward.1} parent=171 // pred_region
          %1501 = dma.done [#allocation4], 256
        $region176: #{attention_vae_forward.1} parent=171 // pred_fallthru
          _
        // Predicated region
        $region177: #{attention_vae_forward.1} parent=171 // pred_check
          %p1502 = pneg %p305
        $region178: #{attention_vae_forward.1} parent=171 // pred_check_branch
          %1504 = sbr.rel (%p1502) target = $region180
        $region179: #{attention_vae_forward.1} parent=171 // pred_region
          %1506 = dma.done [#allocation7], 16
        $region180: #{attention_vae_forward.1} parent=171 // pred_fallthru
          _
        %s1507 = sand.u32 %s100, 1
        %s1508 = scalar_lea.sflag [#allocation4], %s1507
        %s1509 = sand.u32 %s344, 1
        %s1510 = scalar_lea.vmem [#allocation8], %s1509
        // Predicated region
        $region181: #{attention_vae_forward.1} parent=171 // pred_check
          %p1511 = pneg %p357
        $region182: #{attention_vae_forward.1} parent=171 // pred_check_branch
          %1513 = sbr.rel (%p1511) target = $region184
        $region183: #{attention_vae_forward.1} parent=171 // pred_region
          %1515 = dma.done %s1508, 16
        $region184: #{attention_vae_forward.1} parent=171 // pred_fallthru
          _
        %s1516 = sand.u32 %s100, 1
        %s1517 = scalar_lea.sflag [#allocation4], %s1516
        %s1518 = sand.u32 %s370, 1
        %s1519 = smul.addr %s1518, 24
        %s1520 = scalar_lea.vmem [#allocation9], %s1519
        // Predicated region
        $region185: #{attention_vae_forward.1} parent=171 // pred_check
          %p1521 = pneg %p383
        $region186: #{attention_vae_forward.1} parent=171 // pred_check_branch
          %1523 = sbr.rel (%p1521) target = $region188
        $region187: #{attention_vae_forward.1} parent=171 // pred_region
          %1525 = dma.done %s1517, 384
        $region188: #{attention_vae_forward.1} parent=171 // pred_fallthru
          _
        %s1526 = sand.u32 %s100, 1
        %s1527 = scalar_lea.sflag [#allocation4], %s1526
        %s1528 = sand.u32 %s396, 1
        %s1529 = scalar_lea.vmem [#allocation10], %s1528
        // Predicated region
        $region189: #{attention_vae_forward.1} parent=171 // pred_check
          %p1530 = pneg %p409
        $region190: #{attention_vae_forward.1} parent=171 // pred_check_branch
          %1532 = sbr.rel (%p1530) target = $region192
        $region191: #{attention_vae_forward.1} parent=171 // pred_region
          %1534 = dma.done %s1527, 16
        $region192: #{attention_vae_forward.1} parent=171 // pred_fallthru
          _
        %s1535 = sand.u32 %s100, 1
        %s1536 = scalar_lea.sflag [#allocation4], %s1535
        %s1537 = sand.u32 %s422, 1
        %s1538 = smul.addr %s1537, 24
        %s1539 = scalar_lea.vmem [#allocation11], %s1538
        // Predicated region
        $region193: #{attention_vae_forward.1} parent=171 // pred_check
          %p1540 = pneg %p435
        $region194: #{attention_vae_forward.1} parent=171 // pred_check_branch
          %1542 = sbr.rel (%p1540) target = $region196
        $region195: #{attention_vae_forward.1} parent=171 // pred_region
          %1544 = dma.done %s1536, 384
        $region196: #{attention_vae_forward.1} parent=171 // pred_fallthru
          _
        %s1545 = sand.u32 %s100, 1
        %s1546 = scalar_lea.sflag [#allocation4], %s1545
        %s1547 = sand.u32 %s448, 1
        %s1548 = scalar_lea.vmem [#allocation12], %s1547
        // Predicated region
        $region197: #{attention_vae_forward.1} parent=171 // pred_check
          %p1549 = pneg %p461
        $region198: #{attention_vae_forward.1} parent=171 // pred_check_branch
          %1551 = sbr.rel (%p1549) target = $region200
        $region199: #{attention_vae_forward.1} parent=171 // pred_region
          %1553 = dma.done %s1546, 16
        $region200: #{attention_vae_forward.1} parent=171 // pred_fallthru
          _
        %s1554 = sand.u32 %s100, 1
        %s1555 = scalar_lea.sflag [#allocation4], %s1554
        %s1556 = sand.u32 %s474, 1
        %s1557 = smul.addr %s1556, 24
        %s1558 = scalar_lea.vmem [#allocation13], %s1557
        // Predicated region
        $region201: #{attention_vae_forward.1} parent=171 // pred_check
          %p1559 = pneg %p487
        $region202: #{attention_vae_forward.1} parent=171 // pred_check_branch
          %1561 = sbr.rel (%p1559) target = $region204
        $region203: #{attention_vae_forward.1} parent=171 // pred_region
          %1563 = dma.done %s1555, 384
        $region204: #{attention_vae_forward.1} parent=171 // pred_fallthru
          _
        %s1564 = sand.u32 %s100, 1
        %s1565 = scalar_lea.sflag [#allocation4], %s1564
        %s1566 = sand.u32 %s500, 1
        %s1567 = scalar_lea.vmem [#allocation14], %s1566
        // Predicated region
        $region205: #{attention_vae_forward.1} parent=171 // pred_check
          %p1568 = pneg %p513
        $region206: #{attention_vae_forward.1} parent=171 // pred_check_branch
          %1570 = sbr.rel (%p1568) target = $region208
        $region207: #{attention_vae_forward.1} parent=171 // pred_region
          %1572 = dma.done %s1565, 16
        $region208: #{attention_vae_forward.1} parent=171 // pred_fallthru
          _
        %s1573 = sand.u32 %s100, 1
        %s1574 = scalar_lea.sflag [#allocation4], %s1573
        %s1575 = sand.u32 %s578, 1
        %s1576 = smul.addr %s1575, 192
        %s1577 = scalar_lea.vmem [#allocation15], %s1576
        // Predicated region
        $region209: #{attention_vae_forward.1} parent=171 // pred_check
          %p1578 = pneg %p591
        $region210: #{attention_vae_forward.1} parent=171 // pred_check_branch
          %1580 = sbr.rel (%p1578) target = $region212
        $region211: #{attention_vae_forward.1} parent=171 // pred_region
          %1582 = dma.done %s1574, 3072
        $region212: #{attention_vae_forward.1} parent=171 // pred_fallthru
          _
        %s1583 = sand.u32 %s100, 1
        %s1584 = scalar_lea.sflag [#allocation4], %s1583
        %s1585 = sand.u32 %s604, 1
        %s1586 = scalar_lea.vmem [#allocation16], %s1585
        // Predicated region
        $region213: #{attention_vae_forward.1} parent=171 // pred_check
          %p1587 = pneg %p617
        $region214: #{attention_vae_forward.1} parent=171 // pred_check_branch
          %1589 = sbr.rel (%p1587) target = $region216
        $region215: #{attention_vae_forward.1} parent=171 // pred_region
          %1591 = dma.done %s1584, 16
        $region216: #{attention_vae_forward.1} parent=171 // pred_fallthru
          _
        %s1592 = sand.u32 %s100, 1
        %s1593 = scalar_lea.sflag [#allocation4], %s1592
        %s1594 = sand.u32 %s630, 1
        %s1595 = scalar_lea.vmem [#allocation17], %s1594
        // Predicated region
        $region217: #{attention_vae_forward.1} parent=171 // pred_check
          %p1596 = pneg %p643
        $region218: #{attention_vae_forward.1} parent=171 // pred_check_branch
          %1598 = sbr.rel (%p1596) target = $region220
        $region219: #{attention_vae_forward.1} parent=171 // pred_region
          %1600 = dma.done %s1593, 16
        $region220: #{attention_vae_forward.1} parent=171 // pred_fallthru
          _
        %s1601 = sand.u32 %s100, 1
        %s1602 = scalar_lea.sflag [#allocation4], %s1601
        %s1603 = sand.u32 %s656, 1
        %s1604 = scalar_lea.vmem [#allocation18], %s1603
        // Predicated region
        $region221: #{attention_vae_forward.1} parent=171 // pred_check
          %p1605 = pneg %p669
        $region222: #{attention_vae_forward.1} parent=171 // pred_check_branch
          %1607 = sbr.rel (%p1605) target = $region224
        $region223: #{attention_vae_forward.1} parent=171 // pred_region
          %1609 = dma.done %s1602, 16
        $region224: #{attention_vae_forward.1} parent=171 // pred_fallthru
          _
        %s1610 = sand.u32 %s100, 1
        %s1611 = scalar_lea.sflag [#allocation4], %s1610
        %s1612 = sand.u32 %s682, 1
        %s1613 = scalar_lea.vmem [#allocation19], %s1612
        // Predicated region
        $region225: #{attention_vae_forward.1} parent=171 // pred_check
          %p1614 = pneg %p695
        $region226: #{attention_vae_forward.1} parent=171 // pred_check_branch
          %1616 = sbr.rel (%p1614) target = $region228
        $region227: #{attention_vae_forward.1} parent=171 // pred_region
          %1618 = dma.done %s1611, 16
        $region228: #{attention_vae_forward.1} parent=171 // pred_fallthru
          _
        %s1619 = sand.u32 %s100, 1
        %s1620 = scalar_lea.sflag [#allocation4], %s1619
        %s1621 = sand.u32 %s708, 1
        %s1622 = scalar_lea.vmem [#allocation20], %s1621
        // Predicated region
        $region229: #{attention_vae_forward.1} parent=171 // pred_check
          %p1623 = pneg %p721
        $region230: #{attention_vae_forward.1} parent=171 // pred_check_branch
          %1625 = sbr.rel (%p1623) target = $region232
        $region231: #{attention_vae_forward.1} parent=171 // pred_region
          %1627 = dma.done %s1620, 16
        $region232: #{attention_vae_forward.1} parent=171 // pred_fallthru
          _
        // Predicated region
        $region233: #{attention_vae_forward.1} parent=171 // pred_check
          %p1628 = pneg %p763
        $region234: #{attention_vae_forward.1} parent=171 // pred_check_branch
          %1630 = sbr.rel (%p1628) target = $region236
        $region235: #{attention_vae_forward.1} parent=171 // pred_region
          %1632 = dma.done [#allocation7], 16
        $region236: #{attention_vae_forward.1} parent=171 // pred_fallthru
          _
        // Predicated region
        $region237: #{attention_vae_forward.1} parent=171 // pred_check
          %p1633 = pneg %p805
        $region238: #{attention_vae_forward.1} parent=171 // pred_check_branch
          %1635 = sbr.rel (%p1633) target = $region240
        $region239: #{attention_vae_forward.1} parent=171 // pred_region
          %1637 = dma.done [#allocation23], 16
        $region240: #{attention_vae_forward.1} parent=171 // pred_fallthru
          _
        // Predicated region
        $region241: #{attention_vae_forward.1} parent=171 // pred_check
          %p1638 = pneg %p826
        $region242: #{attention_vae_forward.1} parent=171 // pred_check_branch
          %1640 = sbr.rel (%p1638) target = $region244
        $region243: #{attention_vae_forward.1} parent=171 // pred_region
          %1642 = dma.done [#allocation23], 384
        $region244: #{attention_vae_forward.1} parent=171 // pred_fallthru
          _
        // Predicated region
        $region245: #{attention_vae_forward.1} parent=171 // pred_check
          %p1643 = pneg %p847
        $region246: #{attention_vae_forward.1} parent=171 // pred_check_branch
          %1645 = sbr.rel (%p1643) target = $region248
        $region247: #{attention_vae_forward.1} parent=171 // pred_region
          %1647 = dma.done [#allocation26], 16
        $region248: #{attention_vae_forward.1} parent=171 // pred_fallthru
          _
        // Predicated region
        $region249: #{attention_vae_forward.1} parent=171 // pred_check
          %p1648 = pneg %p889
        $region250: #{attention_vae_forward.1} parent=171 // pred_check_branch
          %1650 = sbr.rel (%p1648) target = $region252
        $region251: #{attention_vae_forward.1} parent=171 // pred_region
          %1652 = dma.done [#allocation26], 16
        $region252: #{attention_vae_forward.1} parent=171 // pred_fallthru
          _
        // Predicated region
        $region253: #{attention_vae_forward.1} parent=171 // pred_check
          %p1653 = pneg %p910
        $region254: #{attention_vae_forward.1} parent=171 // pred_check_branch
          %1655 = sbr.rel (%p1653) target = $region256
        $region255: #{attention_vae_forward.1} parent=171 // pred_region
          %1657 = dma.done [#allocation29], 128
        $region256: #{attention_vae_forward.1} parent=171 // pred_fallthru
          _
        // Predicated region
        $region257: #{attention_vae_forward.1} parent=171 // pred_check
          %p1658 = pneg %p931
        $region258: #{attention_vae_forward.1} parent=171 // pred_check_branch
          %1660 = sbr.rel (%p1658) target = $region260
        $region259: #{attention_vae_forward.1} parent=171 // pred_region
          %1662 = dma.done [#allocation29], 16
        $region260: #{attention_vae_forward.1} parent=171 // pred_fallthru
          _
        // Predicated region
        $region261: #{attention_vae_forward.1} parent=171 // pred_check
          %p1663 = pneg %p952
        $region262: #{attention_vae_forward.1} parent=171 // pred_check_branch
          %1665 = sbr.rel (%p1663) target = $region264
        $region263: #{attention_vae_forward.1} parent=171 // pred_region
          %1667 = dma.done [#allocation32], 1024
        $region264: #{attention_vae_forward.1} parent=171 // pred_fallthru
          _
        // Predicated region
        $region265: #{attention_vae_forward.1} parent=171 // pred_check
          %p1668 = pneg %p973
        $region266: #{attention_vae_forward.1} parent=171 // pred_check_branch
          %1670 = sbr.rel (%p1668) target = $region268
        $region267: #{attention_vae_forward.1} parent=171 // pred_region
          %1672 = dma.done [#allocation32], 16
        $region268: #{attention_vae_forward.1} parent=171 // pred_fallthru
          _
        %p1673 = pneg %p116
        %p1674 = pneg %p113
        %p1675 = pneg %p137
        %p1676 = pneg %p134
        %p1677 = pneg %p158
        %p1678 = pneg %p155
        %p1679 = pneg %p179
        %p1680 = pneg %p176
        %p1681 = pneg %p200
        %p1682 = pneg %p197
        %p1683 = pneg %p221
        %p1684 = pneg %p218
        %p1685 = pneg %p242
        %p1686 = pneg %p239
        %p1687 = pneg %p263
        %p1688 = pneg %p260
        %p1689 = pneg %p284
        %p1690 = pneg %p281
        %p1691 = pneg %p305
        %p1692 = pneg %p302
        %p1693 = scmp.lt.s32.totalorder %s100, 5
        %s1694 = scalar_select %p1693, %s100, 5
        %s1695 = smul.addr %s1694, 3
        %s1696 = smul.addr %s1695, 8
        %s1697 = scalar_lea.vmem %s21, %s1696
        %p1698 = pneg %p331
        %p1699 = pneg %p328
        %s1700 = sand.u32 %s100, 1
        %s1701 = scalar_lea.sflag [#allocation4], %s1700
        %s1702 = sand.u32 %s344, 1
        %s1703 = scalar_lea.vmem [#allocation8], %s1702
        %p1704 = pneg %p357
        %p1705 = pneg %p354
        %s1706 = sand.u32 %s100, 1
        %s1707 = scalar_lea.sflag [#allocation4], %s1706
        %s1708 = sand.u32 %s370, 1
        %s1709 = smul.addr %s1708, 24
        %s1710 = scalar_lea.vmem [#allocation9], %s1709
        %p1711 = pneg %p383
        %p1712 = pneg %p380
        %s1713 = sand.u32 %s100, 1
        %s1714 = scalar_lea.sflag [#allocation4], %s1713
        %s1715 = sand.u32 %s396, 1
        %s1716 = scalar_lea.vmem [#allocation10], %s1715
        %p1717 = pneg %p409
        %p1718 = pneg %p406
        %s1719 = sand.u32 %s100, 1
        %s1720 = scalar_lea.sflag [#allocation4], %s1719
        %s1721 = sand.u32 %s422, 1
        %s1722 = smul.addr %s1721, 24
        %s1723 = scalar_lea.vmem [#allocation11], %s1722
        %p1724 = pneg %p435
        %p1725 = pneg %p432
        %s1726 = sand.u32 %s100, 1
        %s1727 = scalar_lea.sflag [#allocation4], %s1726
        %s1728 = sand.u32 %s448, 1
        %s1729 = scalar_lea.vmem [#allocation12], %s1728
        %p1730 = pneg %p461
        %p1731 = pneg %p458
        %s1732 = sand.u32 %s100, 1
        %s1733 = scalar_lea.sflag [#allocation4], %s1732
        %s1734 = sand.u32 %s474, 1
        %s1735 = smul.addr %s1734, 24
        %s1736 = scalar_lea.vmem [#allocation13], %s1735
        %p1737 = pneg %p487
        %p1738 = pneg %p484
        %s1739 = sand.u32 %s100, 1
        %s1740 = scalar_lea.sflag [#allocation4], %s1739
        %s1741 = sand.u32 %s500, 1
        %s1742 = scalar_lea.vmem [#allocation14], %s1741
        %p1743 = pneg %p513
        %p1744 = pneg %p510
        %p1745 = scmp.lt.s32.totalorder %s100, 5
        %s1746 = scalar_select %p1745, %s100, 5
        %s1747 = smul.addr %s1746, 48
        %s1748 = smul.addr %s1747, 4
        %s1749 = scalar_lea.vmem %s37, %s1748
        %p1750 = pneg %p539
        %p1751 = pneg %p536
        %p1752 = scmp.lt.s32.totalorder %s100, 5
        %s1753 = scalar_select %p1752, %s100, 5
        %s1754 = smul.addr %s1753, 16
        %s1755 = scalar_lea.vmem %s39, %s1754
        %p1756 = pneg %p565
        %p1757 = pneg %p562
        %s1758 = sand.u32 %s100, 1
        %s1759 = scalar_lea.sflag [#allocation4], %s1758
        %s1760 = sand.u32 %s578, 1
        %s1761 = smul.addr %s1760, 192
        %s1762 = scalar_lea.vmem [#allocation15], %s1761
        %p1763 = pneg %p591
        %p1764 = pneg %p588
        %s1765 = sand.u32 %s100, 1
        %s1766 = scalar_lea.sflag [#allocation4], %s1765
        %s1767 = sand.u32 %s604, 1
        %s1768 = scalar_lea.vmem [#allocation16], %s1767
        %p1769 = pneg %p617
        %p1770 = pneg %p614
        %s1771 = sand.u32 %s100, 1
        %s1772 = scalar_lea.sflag [#allocation4], %s1771
        %s1773 = sand.u32 %s630, 1
        %s1774 = scalar_lea.vmem [#allocation17], %s1773
        %p1775 = pneg %p643
        %p1776 = pneg %p640
        %s1777 = sand.u32 %s100, 1
        %s1778 = scalar_lea.sflag [#allocation4], %s1777
        %s1779 = sand.u32 %s656, 1
        %s1780 = scalar_lea.vmem [#allocation18], %s1779
        %p1781 = pneg %p669
        %p1782 = pneg %p666
        %s1783 = sand.u32 %s100, 1
        %s1784 = scalar_lea.sflag [#allocation4], %s1783
        %s1785 = sand.u32 %s682, 1
        %s1786 = scalar_lea.vmem [#allocation19], %s1785
        %p1787 = pneg %p695
        %p1788 = pneg %p692
        %s1789 = sand.u32 %s100, 1
        %s1790 = scalar_lea.sflag [#allocation4], %s1789
        %s1791 = sand.u32 %s708, 1
        %s1792 = scalar_lea.vmem [#allocation20], %s1791
        %p1793 = pneg %p721
        %p1794 = pneg %p718
        %p1795 = pneg %p742
        %p1796 = pneg %p739
        %p1797 = pneg %p763
        %p1798 = pneg %p760
        %p1799 = pneg %p784
        %p1800 = pneg %p781
        %p1801 = pneg %p805
        %p1802 = pneg %p802
        %p1803 = pneg %p826
        %p1804 = pneg %p823
        %p1805 = pneg %p847
        %p1806 = pneg %p844
        %p1807 = pneg %p868
        %p1808 = pneg %p865
        %p1809 = pneg %p889
        %p1810 = pneg %p886
        %p1811 = pneg %p910
        %p1812 = pneg %p907
        %p1813 = pneg %p931
        %p1814 = pneg %p928
        %p1815 = pneg %p952
        %p1816 = pneg %p949
        %p1817 = pneg %p973
        %p1818 = pneg %p970
        %p1819 = pneg %p994
        %p1820 = pneg %p991
        %p1821 = pneg %p1015
        %p1822 = pneg %p1012
        %p1823 = pneg %p1036
        %p1824 = pneg %p1033
        %p1825 = scmp.lt.s32.totalorder %s100, 5
        %s1826 = scalar_select %p1825, %s100, 5
        %s1827 = smul.addr %s1826, 3
        %s1828 = smul.addr %s1827, 8
        %s1829 = scalar_lea.vmem %s21, %s1828
        %p1830 = scmp.lt.s32.totalorder %s100, 5
        %s1831 = scalar_select %p1830, %s100, 5
        %s1832 = smul.addr %s1831, 48
        %s1833 = smul.addr %s1832, 4
        %s1834 = scalar_lea.vmem %s37, %s1833
        %p1835 = scmp.lt.s32.totalorder %s100, 5
        %s1836 = scalar_select %p1835, %s100, 5
        %s1837 = smul.addr %s1836, 16
        %s1838 = scalar_lea.vmem %s39, %s1837
        %p1840 = scmp.eq.s32.totalorder %s100, 0
        // Predicated region
        $region269: #{attention_vae_forward.1} parent=171 // pred_check
          %p1841 = pneg %p1840
        $region270: #{attention_vae_forward.1} parent=171 // pred_check_branch
          %1843 = sbr.rel (%p1841) target = $region272
        $region271: #{attention_vae_forward.1} parent=171 // pred_region
          %v1844 = vld [vmem:[%s1] sm:$0xff]
          %v1845 = vld [vmem:[%s1 + $0x8] sm:$0xff]
          %v1846 = vld [vmem:[#allocation3] sm:$0xff]
          %v1847 = vld [vmem:[#allocation3 + $0x8] sm:$0xf]
          %v1848 = vld [vmem:[%s15] sm:$0x1]
          %v1849 = vld [vmem:[%s17] sm:$0xff]
          %v1850 = vld [vmem:[%s17 + $0x8] sm:$0xff]
          %v1851 = vld [vmem:[%s17 + $0x10] sm:$0xff]
          %v1852 = vld [vmem:[%s17 + $0x18] sm:$0xff]
          %v1853 = vld [vmem:[%s17 + $0x20] sm:$0xff]
          %v1854 = vld [vmem:[%s17 + $0x28] sm:$0xff]
          %v1855 = vld [vmem:[%s17 + $0x30] sm:$0xff]
          %v1856 = vld [vmem:[%s17 + $0x38] sm:$0xff]
          %v1857 = vld [vmem:[#allocation6] sm:$0x1]
          %v1859 = vperm.slane %v1848, 0
          %vm1861 = vcmask 97280
          %v1863 = vsel %vm1861, %v1844, 0
          %v1866 = vsel %vm1861, %v1845, 0
          %vm1868 = vcmask 1043456
          %v1870 = vsel %vm1868, %v1847, 0
          %1872 = vmatpush.msra.mxu0 0.0
          %1873 = vmatpush.msra.mxu0 0.0
          %1874 = vmatpush.msra.mxu0 0.0
          %1875 = vmatpush.msra.mxu0 0.0
          %1876 = vmatpush.msra.mxu0 0.0
          %1877 = vmatpush.msra.mxu0 0.0
          %1878 = vmatpush.msra.mxu0 0.0
          %1879 = vmatpush.msra.mxu0 0.0
          %1880 = vmatpush.msra.mxu0 0.0
          %1881 = vmatpush.msra.mxu0 0.0
          %1882 = vmatpush.msra.mxu0 0.0
          %1883 = vmatpush.msra.mxu0 0.0
          %1884 = vmatpush.msra.mxu0 0.0
          %1885 = vmatpush.msra.mxu0 0.0
          %1886 = vmatpush.msra.mxu0 %v1870
          %1887 = vmatpush.msra.mxu0 %v1846
          %1888 = vmatmul.f32.gmra.mxu0 %v1863
          %v1889 = vpop.f32.mrf.mxu0
          %v1890 = vadd.f32 %v1859, %v1889
          %1891 = vmatmul.f32.gmra.mxu0 %v1866
          %v1892 = vpop.f32.mrf.mxu0
          %v1893 = vadd.f32 %v1859, %v1892
          %1894 = vdwg.mxu0
          %v1895 = vmax.f32 %v1890, 0.0
          %v1896 = vmax.f32 %v1893, 0.0
          %v1898 = vperm.slane %v1857, 0
          %vm1900 = vcmask 523264
          %v1902 = vsel %vm1900, %v1895, 0
          %v1905 = vsel %vm1900, %v1896, 0
          %1907 = vmatpush.msra.mxu0 0.0
          %1908 = vmatpush.msra.mxu0 0.0
          %1909 = vmatpush.msra.mxu0 0.0
          %1910 = vmatpush.msra.mxu0 0.0
          %1911 = vmatpush.msra.mxu0 0.0
          %1912 = vmatpush.msra.mxu0 0.0
          %1913 = vmatpush.msra.mxu0 0.0
          %1914 = vmatpush.msra.mxu0 0.0
          %1915 = vmatpush.msra.mxu0 %v1856
          %1916 = vmatpush.msra.mxu0 %v1855
          %1917 = vmatpush.msra.mxu0 %v1854
          %1918 = vmatpush.msra.mxu0 %v1853
          %1919 = vmatpush.msra.mxu0 %v1852
          %1920 = vmatpush.msra.mxu0 %v1851
          %1921 = vmatpush.msra.mxu0 %v1850
          %1922 = vmatpush.msra.mxu0 %v1849
          %1923 = vmatmul.f32.gmra.mxu0 %v1902
          %v1924 = vpop.f32.mrf.mxu0
          %v1925 = vadd.f32 %v1898, %v1924
          %1926 = vmatmul.f32.gmra.mxu0 %v1905
          %v1927 = vpop.f32.mrf.mxu0
          %v1928 = vadd.f32 %v1898, %v1927
          %1929 = vdwg.mxu0
          %vm1930 = vcmask 195584
          %1931 = vst.msk [vmem:[#allocation2] sm:$0xff] %vm1930, %v1925
          %1932 = vst.msk [vmem:[#allocation2 + $0x8] sm:$0xff] %vm1930, %v1928
        $region272: #{attention_vae_forward.1} parent=171 // pred_fallthru
          _
        %v1933 = vld [vmem:[#allocation2] sm:$0xff]
        %v1934 = vld [vmem:[#allocation2 + $0x8] sm:$0xff]
        %v1935 = vld [vmem:[%s1829] sm:$0xff]
        %v1936 = vld [vmem:[%s1829 + $0x8] sm:$0xff]
        %v1937 = vld [vmem:[%s1829 + $0x10] sm:$0xff]
        %v1938 = vld [vmem:[%s1510] sm:$0x1]
        %v1940 = vperm.slane %v1938, 0
        %vm1942 = vcmask 195584
        %v1944 = vsel %vm1942, %v1933, 0
        %v1947 = vsel %vm1942, %v1934, 0
        %1949 = vmatpush.msra.mxu0 0.0
        %1950 = vmatpush.msra.mxu0 0.0
        %1951 = vmatpush.msra.mxu0 0.0
        %1952 = vmatpush.msra.mxu0 0.0
        %1953 = vmatpush.msra.mxu0 0.0
        %1954 = vmatpush.msra.mxu0 0.0
        %1955 = vmatpush.msra.mxu0 0.0
        %1956 = vmatpush.msra.mxu0 0.0
        %1957 = vmatpush.msra.mxu0 0.0
        %1958 = vmatpush.msra.mxu0 0.0
        %1959 = vmatpush.msra.mxu0 0.0
        %1960 = vmatpush.msra.mxu0 0.0
        %1961 = vmatpush.msra.mxu0 0.0
        %1962 = vmatpush.msra.mxu0 %v1937
        %1963 = vmatpush.msra.mxu0 %v1936
        %1964 = vmatpush.msra.mxu0 %v1935
        %1965 = vmatmul.f32.gmra.mxu0 %v1944
        %v1966 = vpop.f32.mrf.mxu0
        %v1967 = vadd.f32 %v1940, %v1966
        %1968 = vmatmul.f32.gmra.mxu0 %v1947
        %v1969 = vpop.f32.mrf.mxu0
        %v1970 = vadd.f32 %v1940, %v1969
        %1971 = vdwg.mxu0
        %v1972 = vld [vmem:[%s1520] sm:$0xff]
        %v1973 = vld [vmem:[%s1520 + $0x8] sm:$0xff]
        %v1974 = vld [vmem:[%s1520 + $0x10] sm:$0xff]
        %v1975 = vld [vmem:[%s1529] sm:$0x1]
        %v1977 = vperm.slane %v1975, 0
        %1979 = vmatpush.msra.mxu0 0.0
        %1980 = vmatpush.msra.mxu0 0.0
        %1981 = vmatpush.msra.mxu0 0.0
        %1982 = vmatpush.msra.mxu0 0.0
        %1983 = vmatpush.msra.mxu0 0.0
        %1984 = vmatpush.msra.mxu0 0.0
        %1985 = vmatpush.msra.mxu0 0.0
        %1986 = vmatpush.msra.mxu0 0.0
        %1987 = vmatpush.msra.mxu0 0.0
        %1988 = vmatpush.msra.mxu0 0.0
        %1989 = vmatpush.msra.mxu0 0.0
        %1990 = vmatpush.msra.mxu0 0.0
        %1991 = vmatpush.msra.mxu0 0.0
        %1992 = vmatpush.msra.mxu0 %v1974
        %1993 = vmatpush.msra.mxu0 %v1973
        %1994 = vmatpush.msra.mxu0 %v1972
        %1995 = vmatmul.f32.gmra.mxu0 %v1944
        %v1996 = vpop.f32.mrf.mxu0
        %v1997 = vadd.f32 %v1977, %v1996
        %1998 = vmatmul.f32.gmra.mxu0 %v1947
        %v1999 = vpop.f32.mrf.mxu0
        %v2000 = vadd.f32 %v1977, %v1999
        %2001 = vdwg.mxu0
        %v2002 = vld [vmem:[%s1539] sm:$0xff]
        %v2003 = vld [vmem:[%s1539 + $0x8] sm:$0xff]
        %v2004 = vld [vmem:[%s1539 + $0x10] sm:$0xff]
        %v2005 = vld [vmem:[%s1548] sm:$0x1]
        %v2007 = vperm.slane %v2005, 0
        %2009 = vmatpush.msra.mxu0 0.0
        %2010 = vmatpush.msra.mxu0 0.0
        %2011 = vmatpush.msra.mxu0 0.0
        %2012 = vmatpush.msra.mxu0 0.0
        %2013 = vmatpush.msra.mxu0 0.0
        %2014 = vmatpush.msra.mxu0 0.0
        %2015 = vmatpush.msra.mxu0 0.0
        %2016 = vmatpush.msra.mxu0 0.0
        %2017 = vmatpush.msra.mxu0 0.0
        %2018 = vmatpush.msra.mxu0 0.0
        %2019 = vmatpush.msra.mxu0 0.0
        %2020 = vmatpush.msra.mxu0 0.0
        %2021 = vmatpush.msra.mxu0 0.0
        %2022 = vmatpush.msra.mxu0 %v2004
        %2023 = vmatpush.msra.mxu0 %v2003
        %2024 = vmatpush.msra.mxu0 %v2002
        %2025 = vmatmul.f32.gmra.mxu0 %v1944
        %v2026 = vpop.f32.mrf.mxu0
        %v2027 = vadd.f32 %v2007, %v2026
        %2028 = vmatmul.f32.gmra.mxu0 %v1947
        %v2029 = vpop.f32.mrf.mxu0
        %v2030 = vadd.f32 %v2007, %v2029
        %2031 = vdwg.mxu0
        %v2032 = vld [vmem:[%s7] sm:$0xff]
        %v2033 = vld [vmem:[%s7 + $0x8] sm:$0xff]
        %v2034 = vld [vmem:[%s7 + $0x10] sm:$0xff]
        %v2035 = vld [vmem:[%s7 + $0x18] sm:$0xff]
        %v2036 = vld [vmem:[%s7 + $0x20] sm:$0xff]
        %v2037 = vld [vmem:[%s7 + $0x28] sm:$0xff]
        %v2038 = vld [vmem:[%s7 + $0x30] sm:$0xff]
        %v2039 = vld [vmem:[%s7 + $0x38] sm:$0xff]
        %v2040 = vld [vmem:[%s7 + $0x40] sm:$0xff]
        %v2041 = vld [vmem:[%s7 + $0x48] sm:$0xff]
        %v2042 = vld [vmem:[%s7 + $0x50] sm:$0xff]
        %v2043 = vld [vmem:[%s7 + $0x58] sm:$0xff]
        %v2044 = vld [vmem:[%s7 + $0x60] sm:$0xff]
        %v2045 = vld [vmem:[%s7 + $0x68] sm:$0xff]
        %v2046 = vld [vmem:[%s7 + $0x70] sm:$0xff]
        %v2047 = vld [vmem:[%s7 + $0x78] sm:$0xff]
        %v2048 = vld [vmem:[%s7 + $0x80] sm:$0xff]
        %v2049 = vld [vmem:[%s7 + $0x88] sm:$0xff]
        %v2050 = vld [vmem:[%s7 + $0x90] sm:$0xff]
        %v2051 = vld [vmem:[%s7 + $0x98] sm:$0xff]
        %v2052 = vld [vmem:[%s7 + $0xa0] sm:$0xff]
        %v2053 = vld [vmem:[%s7 + $0xa8] sm:$0xff]
        %v2054 = vld [vmem:[%s7 + $0xb0] sm:$0xff]
        %v2055 = vld [vmem:[%s7 + $0xb8] sm:$0xff]
        %v2056 = vmul.f32 %v1997, %v2032
        %v2057 = vmul.f32 %v2000, %v2033
        %v2058 = vmul.f32 %v1997, %v2034
        %v2059 = vmul.f32 %v2000, %v2035
        %v2060 = vmul.f32 %v1997, %v2036
        %v2061 = vmul.f32 %v2000, %v2037
        %v2062 = vmul.f32 %v1997, %v2038
        %v2063 = vmul.f32 %v2000, %v2039
        %v2064 = vmul.f32 %v1997, %v2040
        %v2065 = vmul.f32 %v2000, %v2041
        %v2066 = vmul.f32 %v1997, %v2042
        %v2067 = vmul.f32 %v2000, %v2043
        %v2068 = vmul.f32 %v1997, %v2044
        %v2069 = vmul.f32 %v2000, %v2045
        %v2070 = vmul.f32 %v1997, %v2046
        %v2071 = vmul.f32 %v2000, %v2047
        %v2072 = vmul.f32 %v1997, %v2048
        %v2073 = vmul.f32 %v2000, %v2049
        %v2074 = vmul.f32 %v1997, %v2050
        %v2075 = vmul.f32 %v2000, %v2051
        %v2076 = vmul.f32 %v1997, %v2052
        %v2077 = vmul.f32 %v2000, %v2053
        %v2078 = vmul.f32 %v1997, %v2054
        %v2079 = vmul.f32 %v2000, %v2055
        %v2080 = vmul.f32 %v2027, %v2032
        %v2081 = vmul.f32 %v2030, %v2033
        %v2082 = vmul.f32 %v2027, %v2034
        %v2083 = vmul.f32 %v2030, %v2035
        %v2084 = vmul.f32 %v2027, %v2036
        %v2085 = vmul.f32 %v2030, %v2037
        %v2086 = vmul.f32 %v2027, %v2038
        %v2087 = vmul.f32 %v2030, %v2039
        %v2088 = vmul.f32 %v2027, %v2040
        %v2089 = vmul.f32 %v2030, %v2041
        %v2090 = vmul.f32 %v2027, %v2042
        %v2091 = vmul.f32 %v2030, %v2043
        %v2092 = vmul.f32 %v2027, %v2044
        %v2093 = vmul.f32 %v2030, %v2045
        %v2094 = vmul.f32 %v2027, %v2046
        %v2095 = vmul.f32 %v2030, %v2047
        %v2096 = vmul.f32 %v2027, %v2048
        %v2097 = vmul.f32 %v2030, %v2049
        %v2098 = vmul.f32 %v2027, %v2050
        %v2099 = vmul.f32 %v2030, %v2051
        %v2100 = vmul.f32 %v2027, %v2052
        %v2101 = vmul.f32 %v2030, %v2053
        %v2102 = vmul.f32 %v2027, %v2054
        %v2103 = vmul.f32 %v2030, %v2055
        %v2104 = vld [vmem:[%s5] sm:$0xff]
        %v2105 = vld [vmem:[%s5 + $0x8] sm:$0xff]
        %v2106 = vld [vmem:[%s5 + $0x10] sm:$0xff]
        %v2107 = vld [vmem:[%s5 + $0x18] sm:$0xff]
        %v2109 = vsel %vm1942, %v1967, 0
        %v2112 = vsel %vm1942, %v1970, 0
        %v2115 = vsel %vm1942, %v2056, 0
        %v2118 = vsel %vm1942, %v2057, 0
        %v2121 = vsel %vm1942, %v2058, 0
        %v2124 = vsel %vm1942, %v2059, 0
        %v2127 = vsel %vm1942, %v2060, 0
        %v2130 = vsel %vm1942, %v2061, 0
        %v2133 = vsel %vm1942, %v2062, 0
        %v2136 = vsel %vm1942, %v2063, 0
        %v2139 = vsel %vm1942, %v2064, 0
        %v2142 = vsel %vm1942, %v2065, 0
        %v2145 = vsel %vm1942, %v2066, 0
        %v2148 = vsel %vm1942, %v2067, 0
        %v2151 = vsel %vm1942, %v2068, 0
        %v2154 = vsel %vm1942, %v2069, 0
        %v2157 = vsel %vm1942, %v2070, 0
        %v2160 = vsel %vm1942, %v2071, 0
        %v2163 = vsel %vm1942, %v2072, 0
        %v2166 = vsel %vm1942, %v2073, 0
        %v2169 = vsel %vm1942, %v2074, 0
        %v2172 = vsel %vm1942, %v2075, 0
        %v2175 = vsel %vm1942, %v2076, 0
        %v2178 = vsel %vm1942, %v2077, 0
        %v2181 = vsel %vm1942, %v2078, 0
        %v2184 = vsel %vm1942, %v2079, 0
        %2186 = vmatpush.xpose.msra.mxu0 %v2160
        %2187 = vmatpush.xpose.msra.mxu0 %v2157
        %2188 = vmatpush.xpose.msra.mxu0 %v2154
        %2189 = vmatpush.xpose.msra.mxu0 %v2151
        %2190 = vmatpush.xpose.msra.mxu0 %v2148
        %2191 = vmatpush.xpose.msra.mxu0 %v2145
        %2192 = vmatpush.xpose.msra.mxu0 %v2142
        %2193 = vmatpush.xpose.msra.mxu0 %v2139
        %2194 = vmatpush.xpose.msra.mxu0 %v2136
        %2195 = vmatpush.xpose.msra.mxu0 %v2133
        %2196 = vmatpush.xpose.msra.mxu0 %v2130
        %2197 = vmatpush.xpose.msra.mxu0 %v2127
        %2198 = vmatpush.xpose.msra.mxu0 %v2124
        %2199 = vmatpush.xpose.msra.mxu0 %v2121
        %2200 = vmatpush.xpose.msra.mxu0 %v2118
        %2201 = vmatpush.xpose.msra.mxu0 %v2115
        %2202 = vmatmul.f32.gmra.mxu0 %v2109
        %v2203 = vpop.f32.mrf.mxu0
        %v2204 = vadd.f32 %v2104, %v2203
        %2205 = vmatmul.f32.gmra.mxu0 %v2112
        %v2206 = vpop.f32.mrf.mxu0
        %v2207 = vadd.f32 %v2106, %v2206
        %2208 = vdwg.mxu0
        %2209 = vmatpush.xpose.msra.mxu0 0.0
        %2210 = vmatpush.xpose.msra.mxu0 0.0
        %2211 = vmatpush.xpose.msra.mxu0 0.0
        %2212 = vmatpush.xpose.msra.mxu0 0.0
        %2213 = vmatpush.xpose.msra.mxu0 0.0
        %2214 = vmatpush.xpose.msra.mxu0 0.0
        %2215 = vmatpush.xpose.msra.mxu0 0.0
        %2216 = vmatpush.xpose.msra.mxu0 0.0
        %2217 = vmatpush.xpose.msra.mxu0 %v2184
        %2218 = vmatpush.xpose.msra.mxu0 %v2181
        %2219 = vmatpush.xpose.msra.mxu0 %v2178
        %2220 = vmatpush.xpose.msra.mxu0 %v2175
        %2221 = vmatpush.xpose.msra.mxu0 %v2172
        %2222 = vmatpush.xpose.msra.mxu0 %v2169
        %2223 = vmatpush.xpose.msra.mxu0 %v2166
        %2224 = vmatpush.xpose.msra.mxu0 %v2163
        %2225 = vmatmul.f32.gmra.mxu0 %v2109
        %v2226 = vpop.f32.mrf.mxu0
        %v2227 = vadd.f32 %v2105, %v2226
        %2228 = vmatmul.f32.gmra.mxu0 %v2112
        %v2229 = vpop.f32.mrf.mxu0
        %v2230 = vadd.f32 %v2107, %v2229
        %2231 = vdwg.mxu0
        %vm2232 = vcmask 523264
        %v2233 = vsel %vm2232, %v2227, -inf
        %v2234 = vmax.f32 %v2204, %v2233
        %2235 = vmax.xlane.f32.xlu0 %v2234
        %v2236 = vpop.xlane.xlu0 %2235
        %v2237 = vsel %vm2232, %v2230, -inf
        %v2238 = vmax.f32 %v2207, %v2237
        %2239 = vmax.xlane.f32.xlu0 %v2238
        %v2240 = vpop.xlane.xlu0 %2239
        %v2241 = vsub.f32 %v2204, %v2236
        %v2242 = vsub.f32 %v2227, %v2236
        %v2243 = vsub.f32 %v2207, %v2240
        %v2244 = vsub.f32 %v2230, %v2240
        %v2245 = vmul.f32 %v2241, 1.442695
        %v2246 = vpow.pop %v2245
        %v2247 = vmul.f32 %v2242, 1.442695
        %v2248 = vpow.pop %v2247
        %v2249 = vmul.f32 %v2243, 1.442695
        %v2250 = vpow.pop %v2249
        %v2251 = vmul.f32 %v2244, 1.442695
        %v2252 = vpow.pop %v2251
        %v2253 = vld [vmem:[%s9] sm:$0xff]
        %v2254 = vld [vmem:[%s9 + $0x8] sm:$0xff]
        %v2255 = vld [vmem:[%s9 + $0x10] sm:$0xff]
        %v2256 = vld [vmem:[%s9 + $0x18] sm:$0xff]
        %v2257 = vld [vmem:[%s9 + $0x20] sm:$0xff]
        %v2258 = vld [vmem:[%s9 + $0x28] sm:$0xff]
        %v2259 = vld [vmem:[%s9 + $0x30] sm:$0xff]
        %v2260 = vld [vmem:[%s9 + $0x38] sm:$0xff]
        %v2261 = vld [vmem:[%s9 + $0x40] sm:$0xff]
        %v2262 = vld [vmem:[%s9 + $0x48] sm:$0xff]
        %v2263 = vld [vmem:[%s9 + $0x50] sm:$0xff]
        %v2264 = vld [vmem:[%s9 + $0x58] sm:$0xff]
        %v2265 = vld [vmem:[%s9 + $0x60] sm:$0xff]
        %v2266 = vld [vmem:[%s9 + $0x68] sm:$0xff]
        %v2267 = vld [vmem:[%s9 + $0x70] sm:$0xff]
        %v2268 = vld [vmem:[%s9 + $0x78] sm:$0xff]
        %v2269 = vld [vmem:[%s9 + $0x80] sm:$0xff]
        %v2270 = vld [vmem:[%s9 + $0x88] sm:$0xff]
        %v2271 = vld [vmem:[%s9 + $0x90] sm:$0xff]
        %v2272 = vld [vmem:[%s9 + $0x98] sm:$0xff]
        %v2273 = vld [vmem:[%s9 + $0xa0] sm:$0xff]
        %v2274 = vld [vmem:[%s9 + $0xa8] sm:$0xff]
        %v2275 = vld [vmem:[%s9 + $0xb0] sm:$0xff]
        %v2276 = vld [vmem:[%s9 + $0xb8] sm:$0xff]
        %v2278 = vsel %vm2232, %v2248, 0
        %v2281 = vsel %vm2232, %v2252, 0
        %2283 = vmatpush.msra.mxu0 %v2268
        %2284 = vmatpush.msra.mxu0 %v2267
        %2285 = vmatpush.msra.mxu0 %v2266
        %2286 = vmatpush.msra.mxu0 %v2265
        %2287 = vmatpush.msra.mxu0 %v2264
        %2288 = vmatpush.msra.mxu0 %v2263
        %2289 = vmatpush.msra.mxu0 %v2262
        %2290 = vmatpush.msra.mxu0 %v2261
        %2291 = vmatpush.msra.mxu0 %v2260
        %2292 = vmatpush.msra.mxu0 %v2259
        %2293 = vmatpush.msra.mxu0 %v2258
        %2294 = vmatpush.msra.mxu0 %v2257
        %2295 = vmatpush.msra.mxu0 %v2256
        %2296 = vmatpush.msra.mxu0 %v2255
        %2297 = vmatpush.msra.mxu0 %v2254
        %2298 = vmatpush.msra.mxu0 %v2253
        %2299 = vmatmul.f32.gmra.mxu0 %v2246
        %v2300 = vpop.f32.mrf.mxu0
        %v2301 = vadd.f32 0.0, %v2300
        %2302 = vmatmul.f32.gmra.mxu0 %v2250
        %v2303 = vpop.f32.mrf.mxu0
        %v2304 = vadd.f32 0.0, %v2303
        %2305 = vdwg.mxu0
        %2306 = vmatpush.msra.mxu0 0.0
        %2307 = vmatpush.msra.mxu0 0.0
        %2308 = vmatpush.msra.mxu0 0.0
        %2309 = vmatpush.msra.mxu0 0.0
        %2310 = vmatpush.msra.mxu0 0.0
        %2311 = vmatpush.msra.mxu0 0.0
        %2312 = vmatpush.msra.mxu0 0.0
        %2313 = vmatpush.msra.mxu0 0.0
        %2314 = vmatpush.msra.mxu0 %v2276
        %2315 = vmatpush.msra.mxu0 %v2275
        %2316 = vmatpush.msra.mxu0 %v2274
        %2317 = vmatpush.msra.mxu0 %v2273
        %2318 = vmatpush.msra.mxu0 %v2272
        %2319 = vmatpush.msra.mxu0 %v2271
        %2320 = vmatpush.msra.mxu0 %v2270
        %2321 = vmatpush.msra.mxu0 %v2269
        %2322 = vmatmul.f32.gmra.mxu0 %v2278
        %v2323 = vpop.f32.mrf.mxu0
        %v2324 = vadd.f32 %v2301, %v2323
        %2325 = vmatmul.f32.gmra.mxu0 %v2281
        %v2326 = vpop.f32.mrf.mxu0
        %v2327 = vadd.f32 %v2304, %v2326
        %2328 = vdwg.mxu0
        %v2329 = vmax.f32 %v2324, 1e-30
        %v2330 = vmax.f32 %v2327, 1e-30
        %v2331 = vrcp.pop %v2329
        %v2332 = vrcp.pop %v2330
        %2333 = vmatpush.msra.mxu0 %v2095
        %2334 = vmatpush.msra.mxu0 %v2094
        %2335 = vmatpush.msra.mxu0 %v2093
        %2336 = vmatpush.msra.mxu0 %v2092
        %2337 = vmatpush.msra.mxu0 %v2091
        %2338 = vmatpush.msra.mxu0 %v2090
        %2339 = vmatpush.msra.mxu0 %v2089
        %2340 = vmatpush.msra.mxu0 %v2088
        %2341 = vmatpush.msra.mxu0 %v2087
        %2342 = vmatpush.msra.mxu0 %v2086
        %2343 = vmatpush.msra.mxu0 %v2085
        %2344 = vmatpush.msra.mxu0 %v2084
        %2345 = vmatpush.msra.mxu0 %v2083
        %2346 = vmatpush.msra.mxu0 %v2082
        %2347 = vmatpush.msra.mxu0 %v2081
        %2348 = vmatpush.msra.mxu0 %v2080
        %2349 = vmatmul.f32.gmra.mxu0 %v2246
        %v2350 = vpop.f32.mrf.mxu0
        %v2351 = vadd.f32 0.0, %v2350
        %2352 = vmatmul.f32.gmra.mxu0 %v2250
        %v2353 = vpop.f32.mrf.mxu0
        %v2354 = vadd.f32 0.0, %v2353
        %2355 = vdwg.mxu0
        %2356 = vmatpush.msra.mxu0 0.0
        %2357 = vmatpush.msra.mxu0 0.0
        %2358 = vmatpush.msra.mxu0 0.0
        %2359 = vmatpush.msra.mxu0 0.0
        %2360 = vmatpush.msra.mxu0 0.0
        %2361 = vmatpush.msra.mxu0 0.0
        %2362 = vmatpush.msra.mxu0 0.0
        %2363 = vmatpush.msra.mxu0 0.0
        %2364 = vmatpush.msra.mxu0 %v2103
        %2365 = vmatpush.msra.mxu0 %v2102
        %2366 = vmatpush.msra.mxu0 %v2101
        %2367 = vmatpush.msra.mxu0 %v2100
        %2368 = vmatpush.msra.mxu0 %v2099
        %2369 = vmatpush.msra.mxu0 %v2098
        %2370 = vmatpush.msra.mxu0 %v2097
        %2371 = vmatpush.msra.mxu0 %v2096
        %2372 = vmatmul.f32.gmra.mxu0 %v2278
        %v2373 = vpop.f32.mrf.mxu0
        %v2374 = vadd.f32 %v2351, %v2373
        %2375 = vmatmul.f32.gmra.mxu0 %v2281
        %v2376 = vpop.f32.mrf.mxu0
        %v2377 = vadd.f32 %v2354, %v2376
        %2378 = vdwg.mxu0
        %v2379 = vld [vmem:[%s11] sm:$0xff]
        %v2380 = vld [vmem:[%s11 + $0x8] sm:$0xf]
        %vm2381 = vcmask 97280
        %v2383 = vsel %vm2381, %v2331, 0
        %v2386 = vsel %vm2381, %v2332, 0
        %vm2388 = vcmask 1043456
        %v2390 = vsel %vm2388, %v2380, 0
        %2392 = vmatpush.msra.mxu0 0.0
        %2393 = vmatpush.msra.mxu0 0.0
        %2394 = vmatpush.msra.mxu0 0.0
        %2395 = vmatpush.msra.mxu0 0.0
        %2396 = vmatpush.msra.mxu0 0.0
        %2397 = vmatpush.msra.mxu0 0.0
        %2398 = vmatpush.msra.mxu0 0.0
        %2399 = vmatpush.msra.mxu0 0.0
        %2400 = vmatpush.msra.mxu0 0.0
        %2401 = vmatpush.msra.mxu0 0.0
        %2402 = vmatpush.msra.mxu0 0.0
        %2403 = vmatpush.msra.mxu0 0.0
        %2404 = vmatpush.msra.mxu0 0.0
        %2405 = vmatpush.msra.mxu0 0.0
        %2406 = vmatpush.msra.mxu0 %v2390
        %2407 = vmatpush.msra.mxu0 %v2379
        %2408 = vmatmul.f32.gmra.mxu0 %v2383
        %v2409 = vpop.f32.mrf.mxu0
        %v2410 = vadd.f32 0.0, %v2409
        %2411 = vmatmul.f32.gmra.mxu0 %v2386
        %v2412 = vpop.f32.mrf.mxu0
        %v2413 = vadd.f32 0.0, %v2412
        %2414 = vdwg.mxu0
        %v2415 = vmul.f32 %v2374, %v2410
        %v2416 = vmul.f32 %v2377, %v2413
        %v2417 = vld [vmem:[%s1558] sm:$0xff]
        %v2418 = vld [vmem:[%s1558 + $0x8] sm:$0xff]
        %v2419 = vld [vmem:[%s1558 + $0x10] sm:$0xff]
        %v2420 = vld [vmem:[%s1567] sm:$0x1]
        %v2422 = vperm.slane %v2420, 0
        %v2425 = vsel %vm1942, %v2415, 0
        %v2428 = vsel %vm1942, %v2416, 0
        %2430 = vmatpush.msra.mxu0 0.0
        %2431 = vmatpush.msra.mxu0 0.0
        %2432 = vmatpush.msra.mxu0 0.0
        %2433 = vmatpush.msra.mxu0 0.0
        %2434 = vmatpush.msra.mxu0 0.0
        %2435 = vmatpush.msra.mxu0 0.0
        %2436 = vmatpush.msra.mxu0 0.0
        %2437 = vmatpush.msra.mxu0 0.0
        %2438 = vmatpush.msra.mxu0 0.0
        %2439 = vmatpush.msra.mxu0 0.0
        %2440 = vmatpush.msra.mxu0 0.0
        %2441 = vmatpush.msra.mxu0 0.0
        %2442 = vmatpush.msra.mxu0 0.0
        %2443 = vmatpush.msra.mxu0 %v2419
        %2444 = vmatpush.msra.mxu0 %v2418
        %2445 = vmatpush.msra.mxu0 %v2417
        %2446 = vmatmul.f32.gmra.mxu0 %v2425
        %v2447 = vpop.f32.mrf.mxu0
        %v2448 = vadd.f32 %v2422, %v2447
        %2449 = vmatmul.f32.gmra.mxu0 %v2428
        %v2450 = vpop.f32.mrf.mxu0
        %v2451 = vadd.f32 %v2422, %v2450
        %2452 = vdwg.mxu0
        %v2453 = vadd.f32 %v1933, %v2448
        %v2454 = vadd.f32 %v1934, %v2451
        %v2455 = vld [vmem:[%s1595] sm:$0x1]
        %v2456 = vld [vmem:[%s1604] sm:$0x1]
        %v2457 = vsel %vm1942, %v2453, 0.0
        %2458 = vadd.xlane.f32.xlu0 %v2457
        %v2459 = vpop.xlane.xlu0 %2458
        %v2460 = vsel %vm1942, %v2454, 0.0
        %2461 = vadd.xlane.f32.xlu0 %v2460
        %v2462 = vpop.xlane.xlu0 %2461
        %v2463 = vrcp.pop 24.0
        %v2464 = vmul.f32 24.0, %v2463
        %v2465 = vsub.f32 1.0, %v2464
        %v2466 = vmul.f32 %v2463, %v2465
        %v2467 = vadd.f32 %v2463, %v2466
        %vm2468 = vweird.f32 %v2463
        %v2469 = vsel %vm2468, %v2463, %v2467
        %v2470 = vmul.f32 %v2459, %v2469
        %v2471 = vmul.f32 %v2462, %v2469
        %v2472 = vsub.f32 %v2453, %v2470
        %v2473 = vsub.f32 %v2454, %v2471
        %v2474 = vmul.f32 %v2472, %v2472
        %v2475 = vmul.f32 %v2473, %v2473
        %v2476 = vsel %vm1942, %v2474, 0.0
        %2477 = vadd.xlane.f32.xlu0 %v2476
        %v2478 = vpop.xlane.xlu0 %2477
        %v2479 = vsel %vm1942, %v2475, 0.0
        %2480 = vadd.xlane.f32.xlu0 %v2479
        %v2481 = vpop.xlane.xlu0 %2480
        %v2482 = vmul.f32 %v2478, %v2469
        %v2483 = vmul.f32 %v2481, %v2469
        %v2484 = vadd.f32 %v2482, 1e-05
        %v2485 = vadd.f32 %v2483, 1e-05
        %v2486 = vrsqrt.pop %v2484
        %v2487 = vmul.f32 %v2486, %v2484
        %v2488 = vmul.f32 %v2487, %v2486
        %v2489 = vmul.f32 0.5, %v2488
        %v2490 = vsub.f32 1.5, %v2489
        %v2491 = vmul.f32 %v2486, %v2490
        %vm2492 = vweird.f32 %v2484
        %vm2493 = vweird.f32 %v2486
        %vm2494 = vmor %vm2492, %vm2493
        %v2495 = vsel %vm2494, %v2486, %v2491
        %v2496 = vrsqrt.pop %v2485
        %v2497 = vmul.f32 %v2496, %v2485
        %v2498 = vmul.f32 %v2497, %v2496
        %v2499 = vmul.f32 0.5, %v2498
        %v2500 = vsub.f32 1.5, %v2499
        %v2501 = vmul.f32 %v2496, %v2500
        %vm2502 = vweird.f32 %v2485
        %vm2503 = vweird.f32 %v2496
        %vm2504 = vmor %vm2502, %vm2503
        %v2505 = vsel %vm2504, %v2496, %v2501
        %v2506 = vmul.f32 %v2472, %v2495
        %v2507 = vmul.f32 %v2473, %v2505
        %v2509 = vperm.slane %v2455, 0
        %v2511 = vmul.f32 %v2506, %v2509
        %v2512 = vmul.f32 %v2507, %v2509
        %v2514 = vperm.slane %v2456, 0
        %v2516 = vadd.f32 %v2511, %v2514
        %v2517 = vadd.f32 %v2512, %v2514
        %v2518 = vpack.c.bf16 %v2517, %v2516
        %v2519 = vld [vmem:[%s1834] sm:$0xff]
        %v2520 = vld [vmem:[%s1834 + $0x8] sm:$0xff]
        %v2521 = vld [vmem:[%s1834 + $0x10] sm:$0xff]
        %v2522 = vld [vmem:[%s1834 + $0x18] sm:$0xff]
        %v2523 = vld [vmem:[%s1834 + $0x20] sm:$0xff]
        %v2524 = vld [vmem:[%s1834 + $0x28] sm:$0xff]
        %v2525 = vld [vmem:[%s1834 + $0x30] sm:$0xff]
        %v2526 = vld [vmem:[%s1834 + $0x38] sm:$0xff]
        %v2527 = vld [vmem:[%s1834 + $0x40] sm:$0xff]
        %v2528 = vld [vmem:[%s1834 + $0x48] sm:$0xff]
        %v2529 = vld [vmem:[%s1834 + $0x50] sm:$0xff]
        %v2530 = vld [vmem:[%s1834 + $0x58] sm:$0xff]
        %v2531 = vld [vmem:[%s1834 + $0x60] sm:$0xff]
        %v2532 = vld [vmem:[%s1834 + $0x68] sm:$0xff]
        %v2533 = vld [vmem:[%s1834 + $0x70] sm:$0xff]
        %v2534 = vld [vmem:[%s1834 + $0x78] sm:$0xff]
        %v2535 = vld [vmem:[%s1834 + $0x80] sm:$0xff]
        %v2536 = vld [vmem:[%s1834 + $0x88] sm:$0xff]
        %v2537 = vld [vmem:[%s1834 + $0x90] sm:$0xff]
        %v2538 = vld [vmem:[%s1834 + $0x98] sm:$0xff]
        %v2539 = vld [vmem:[%s1834 + $0xa0] sm:$0xff]
        %v2540 = vld [vmem:[%s1834 + $0xa8] sm:$0xff]
        %v2541 = vld [vmem:[%s1834 + $0xb0] sm:$0xff]
        %v2542 = vld [vmem:[%s1834 + $0xb8] sm:$0xff]
        %v2543 = vld [vmem:[%s1838] sm:$0xff]
        %v2544 = vld [vmem:[%s1838 + $0x8] sm:$0xff]
        %v2547 = vperm.slane %v2543, 0
        %v2548 = vperm.slane %v2543, 1
        %v2549 = vperm.slane %v2543, 2
        %v2550 = vperm.slane %v2543, 3
        %v2551 = vperm.slane %v2543, 4
        %v2552 = vperm.slane %v2543, 5
        %v2553 = vperm.slane %v2543, 6
        %v2554 = vperm.slane %v2543, 7
        %v2555 = vperm.slane %v2544, 0
        %v2556 = vperm.slane %v2544, 1
        %v2557 = vperm.slane %v2544, 2
        %v2558 = vperm.slane %v2544, 3
        %v2559 = vperm.slane %v2544, 4
        %v2560 = vperm.slane %v2544, 5
        %v2561 = vperm.slane %v2544, 6
        %v2562 = vperm.slane %v2544, 7
        %v2603 = vunpack.c.l.b16 %v2519
        %v2604 = vunpack.c.h.b16 %v2519
        %v2605 = vunpack.c.l.b16 %v2520
        %v2606 = vunpack.c.h.b16 %v2520
        %v2607 = vunpack.c.l.b16 %v2521
        %v2608 = vunpack.c.h.b16 %v2521
        %v2609 = vunpack.c.l.b16 %v2522
        %v2610 = vunpack.c.h.b16 %v2522
        %v2611 = vunpack.c.l.b16 %v2523
        %v2612 = vunpack.c.h.b16 %v2523
        %v2613 = vunpack.c.l.b16 %v2524
        %v2614 = vunpack.c.h.b16 %v2524
        %v2615 = vunpack.c.l.b16 %v2525
        %v2616 = vunpack.c.h.b16 %v2525
        %v2617 = vunpack.c.l.b16 %v2526
        %v2618 = vunpack.c.h.b16 %v2526
        %v2619 = vunpack.c.l.b16 %v2527
        %v2620 = vunpack.c.h.b16 %v2527
        %v2621 = vunpack.c.l.b16 %v2528
        %v2622 = vunpack.c.h.b16 %v2528
        %v2623 = vunpack.c.l.b16 %v2529
        %v2624 = vunpack.c.h.b16 %v2529
        %v2625 = vunpack.c.l.b16 %v2530
        %v2626 = vunpack.c.h.b16 %v2530
        %v2627 = vunpack.c.l.b16 %v2531
        %v2628 = vunpack.c.h.b16 %v2531
        %v2629 = vunpack.c.l.b16 %v2532
        %v2630 = vunpack.c.h.b16 %v2532
        %v2631 = vunpack.c.l.b16 %v2533
        %v2632 = vunpack.c.h.b16 %v2533
        %v2633 = vunpack.c.l.b16 %v2534
        %v2634 = vunpack.c.h.b16 %v2534
        %v2635 = vunpack.c.l.b16 %v2535
        %v2636 = vunpack.c.h.b16 %v2535
        %v2637 = vunpack.c.l.b16 %v2536
        %v2638 = vunpack.c.h.b16 %v2536
        %v2639 = vunpack.c.l.b16 %v2537
        %v2640 = vunpack.c.h.b16 %v2537
        %v2641 = vunpack.c.l.b16 %v2538
        %v2642 = vunpack.c.h.b16 %v2538
        %v2643 = vunpack.c.l.b16 %v2539
        %v2644 = vunpack.c.h.b16 %v2539
        %v2645 = vunpack.c.l.b16 %v2540
        %v2646 = vunpack.c.h.b16 %v2540
        %v2647 = vunpack.c.l.b16 %v2541
        %v2648 = vunpack.c.h.b16 %v2541
        %v2649 = vunpack.c.l.b16 %v2542
        %v2650 = vunpack.c.h.b16 %v2542
        %v2651 = vpack.c.b16 %v2619, %v2603
        %v2652 = vpack.c.b16 %v2620, %v2604
        %v2653 = vpack.c.b16 %v2621, %v2605
        %v2654 = vpack.c.b16 %v2622, %v2606
        %v2655 = vpack.c.b16 %v2623, %v2607
        %v2656 = vpack.c.b16 %v2624, %v2608
        %v2657 = vpack.c.b16 %v2625, %v2609
        %v2658 = vpack.c.b16 %v2626, %v2610
        %v2659 = vpack.c.b16 %v2627, %v2611
        %v2660 = vpack.c.b16 %v2628, %v2612
        %v2661 = vpack.c.b16 %v2629, %v2613
        %v2662 = vpack.c.b16 %v2630, %v2614
        %v2663 = vpack.c.b16 %v2631, %v2615
        %v2664 = vpack.c.b16 %v2632, %v2616
        %v2665 = vpack.c.b16 %v2633, %v2617
        %v2666 = vpack.c.b16 %v2634, %v2618
        %v2667 = vpack.c.b16 %v2635, %v2635
        %v2668 = vpack.c.b16 %v2636, %v2636
        %v2669 = vpack.c.b16 %v2637, %v2637
        %v2670 = vpack.c.b16 %v2638, %v2638
        %v2671 = vpack.c.b16 %v2639, %v2639
        %v2672 = vpack.c.b16 %v2640, %v2640
        %v2673 = vpack.c.b16 %v2641, %v2641
        %v2674 = vpack.c.b16 %v2642, %v2642
        %v2675 = vpack.c.b16 %v2643, %v2643
        %v2676 = vpack.c.b16 %v2644, %v2644
        %v2677 = vpack.c.b16 %v2645, %v2645
        %v2678 = vpack.c.b16 %v2646, %v2646
        %v2679 = vpack.c.b16 %v2647, %v2647
        %v2680 = vpack.c.b16 %v2648, %v2648
        %v2681 = vpack.c.b16 %v2649, %v2649
        %v2682 = vpack.c.b16 %v2650, %v2650
        %v2700 = vsel %vm1942, %v2518, 0
        %v2703 = vsel %vm2388, %v2667, 0
        %v2706 = vsel %vm2388, %v2668, 0
        %v2709 = vsel %vm2388, %v2669, 0
        %v2712 = vsel %vm2388, %v2670, 0
        %v2715 = vsel %vm2388, %v2671, 0
        %v2718 = vsel %vm2388, %v2672, 0
        %v2721 = vsel %vm2388, %v2673, 0
        %v2724 = vsel %vm2388, %v2674, 0
        %v2727 = vsel %vm2388, %v2675, 0
        %v2730 = vsel %vm2388, %v2676, 0
        %v2733 = vsel %vm2388, %v2677, 0
        %v2736 = vsel %vm2388, %v2678, 0
        %v2739 = vsel %vm2388, %v2679, 0
        %v2742 = vsel %vm2388, %v2680, 0
        %v2745 = vsel %vm2388, %v2681, 0
        %v2748 = vsel %vm2388, %v2682, 0
        %2750 = vmatpush.bf16.msra.mxu0 0
        %2751 = vmatpush.bf16.msra.mxu0 0
        %2752 = vmatpush.bf16.msra.mxu0 0
        %2753 = vmatpush.bf16.msra.mxu0 0
        %2754 = vmatpush.bf16.msra.mxu0 0
        %2755 = vmatpush.bf16.msra.mxu0 0
        %2756 = vmatpush.bf16.msra.mxu0 %v2703
        %2757 = vmatpush.bf16.msra.mxu0 %v2651
        %2758 = vmatmul.bf16.gmra.mxu0 %v2700
        %v2759 = vpop.f32.mrf.mxu0
        %v2760 = vadd.f32 %v2547, %v2759
        %v2761 = vpop.f32.mrf.mxu0
        %v2762 = vadd.f32 %v2547, %v2761
        %2763 = vdwg.mxu0
        %2764 = vmatpush.bf16.msra.mxu0 0
        %2765 = vmatpush.bf16.msra.mxu0 0
        %2766 = vmatpush.bf16.msra.mxu0 0
        %2767 = vmatpush.bf16.msra.mxu0 0
        %2768 = vmatpush.bf16.msra.mxu0 0
        %2769 = vmatpush.bf16.msra.mxu0 0
        %2770 = vmatpush.bf16.msra.mxu0 %v2706
        %2771 = vmatpush.bf16.msra.mxu0 %v2652
        %2772 = vmatmul.bf16.gmra.mxu0 %v2700
        %v2773 = vpop.f32.mrf.mxu0
        %v2774 = vadd.f32 %v2548, %v2773
        %v2775 = vpop.f32.mrf.mxu0
        %v2776 = vadd.f32 %v2548, %v2775
        %2777 = vdwg.mxu0
        %2778 = vmatpush.bf16.msra.mxu0 0
        %2779 = vmatpush.bf16.msra.mxu0 0
        %2780 = vmatpush.bf16.msra.mxu0 0
        %2781 = vmatpush.bf16.msra.mxu0 0
        %2782 = vmatpush.bf16.msra.mxu0 0
        %2783 = vmatpush.bf16.msra.mxu0 0
        %2784 = vmatpush.bf16.msra.mxu0 %v2709
        %2785 = vmatpush.bf16.msra.mxu0 %v2653
        %2786 = vmatmul.bf16.gmra.mxu0 %v2700
        %v2787 = vpop.f32.mrf.mxu0
        %v2788 = vadd.f32 %v2549, %v2787
        %v2789 = vpop.f32.mrf.mxu0
        %v2790 = vadd.f32 %v2549, %v2789
        %2791 = vdwg.mxu0
        %2792 = vmatpush.bf16.msra.mxu0 0
        %2793 = vmatpush.bf16.msra.mxu0 0
        %2794 = vmatpush.bf16.msra.mxu0 0
        %2795 = vmatpush.bf16.msra.mxu0 0
        %2796 = vmatpush.bf16.msra.mxu0 0
        %2797 = vmatpush.bf16.msra.mxu0 0
        %2798 = vmatpush.bf16.msra.mxu0 %v2712
        %2799 = vmatpush.bf16.msra.mxu0 %v2654
        %2800 = vmatmul.bf16.gmra.mxu0 %v2700
        %v2801 = vpop.f32.mrf.mxu0
        %v2802 = vadd.f32 %v2550, %v2801
        %v2803 = vpop.f32.mrf.mxu0
        %v2804 = vadd.f32 %v2550, %v2803
        %2805 = vdwg.mxu0
        %2806 = vmatpush.bf16.msra.mxu0 0
        %2807 = vmatpush.bf16.msra.mxu0 0
        %2808 = vmatpush.bf16.msra.mxu0 0
        %2809 = vmatpush.bf16.msra.mxu0 0
        %2810 = vmatpush.bf16.msra.mxu0 0
        %2811 = vmatpush.bf16.msra.mxu0 0
        %2812 = vmatpush.bf16.msra.mxu0 %v2715
        %2813 = vmatpush.bf16.msra.mxu0 %v2655
        %2814 = vmatmul.bf16.gmra.mxu0 %v2700
        %v2815 = vpop.f32.mrf.mxu0
        %v2816 = vadd.f32 %v2551, %v2815
        %v2817 = vpop.f32.mrf.mxu0
        %v2818 = vadd.f32 %v2551, %v2817
        %2819 = vdwg.mxu0
        %2820 = vmatpush.bf16.msra.mxu0 0
        %2821 = vmatpush.bf16.msra.mxu0 0
        %2822 = vmatpush.bf16.msra.mxu0 0
        %2823 = vmatpush.bf16.msra.mxu0 0
        %2824 = vmatpush.bf16.msra.mxu0 0
        %2825 = vmatpush.bf16.msra.mxu0 0
        %2826 = vmatpush.bf16.msra.mxu0 %v2718
        %2827 = vmatpush.bf16.msra.mxu0 %v2656
        %2828 = vmatmul.bf16.gmra.mxu0 %v2700
        %v2829 = vpop.f32.mrf.mxu0
        %v2830 = vadd.f32 %v2552, %v2829
        %v2831 = vpop.f32.mrf.mxu0
        %v2832 = vadd.f32 %v2552, %v2831
        %2833 = vdwg.mxu0
        %2834 = vmatpush.bf16.msra.mxu0 0
        %2835 = vmatpush.bf16.msra.mxu0 0
        %2836 = vmatpush.bf16.msra.mxu0 0
        %2837 = vmatpush.bf16.msra.mxu0 0
        %2838 = vmatpush.bf16.msra.mxu0 0
        %2839 = vmatpush.bf16.msra.mxu0 0
        %2840 = vmatpush.bf16.msra.mxu0 %v2721
        %2841 = vmatpush.bf16.msra.mxu0 %v2657
        %2842 = vmatmul.bf16.gmra.mxu0 %v2700
        %v2843 = vpop.f32.mrf.mxu0
        %v2844 = vadd.f32 %v2553, %v2843
        %v2845 = vpop.f32.mrf.mxu0
        %v2846 = vadd.f32 %v2553, %v2845
        %2847 = vdwg.mxu0
        %2848 = vmatpush.bf16.msra.mxu0 0
        %2849 = vmatpush.bf16.msra.mxu0 0
        %2850 = vmatpush.bf16.msra.mxu0 0
        %2851 = vmatpush.bf16.msra.mxu0 0
        %2852 = vmatpush.bf16.msra.mxu0 0
        %2853 = vmatpush.bf16.msra.mxu0 0
        %2854 = vmatpush.bf16.msra.mxu0 %v2724
        %2855 = vmatpush.bf16.msra.mxu0 %v2658
        %2856 = vmatmul.bf16.gmra.mxu0 %v2700
        %v2857 = vpop.f32.mrf.mxu0
        %v2858 = vadd.f32 %v2554, %v2857
        %v2859 = vpop.f32.mrf.mxu0
        %v2860 = vadd.f32 %v2554, %v2859
        %2861 = vdwg.mxu0
        %2862 = vmatpush.bf16.msra.mxu0 0
        %2863 = vmatpush.bf16.msra.mxu0 0
        %2864 = vmatpush.bf16.msra.mxu0 0
        %2865 = vmatpush.bf16.msra.mxu0 0
        %2866 = vmatpush.bf16.msra.mxu0 0
        %2867 = vmatpush.bf16.msra.mxu0 0
        %2868 = vmatpush.bf16.msra.mxu0 %v2727
        %2869 = vmatpush.bf16.msra.mxu0 %v2659
        %2870 = vmatmul.bf16.gmra.mxu0 %v2700
        %v2871 = vpop.f32.mrf.mxu0
        %v2872 = vadd.f32 %v2555, %v2871
        %v2873 = vpop.f32.mrf.mxu0
        %v2874 = vadd.f32 %v2555, %v2873
        %2875 = vdwg.mxu0
        %2876 = vmatpush.bf16.msra.mxu0 0
        %2877 = vmatpush.bf16.msra.mxu0 0
        %2878 = vmatpush.bf16.msra.mxu0 0
        %2879 = vmatpush.bf16.msra.mxu0 0
        %2880 = vmatpush.bf16.msra.mxu0 0
        %2881 = vmatpush.bf16.msra.mxu0 0
        %2882 = vmatpush.bf16.msra.mxu0 %v2730
        %2883 = vmatpush.bf16.msra.mxu0 %v2660
        %2884 = vmatmul.bf16.gmra.mxu0 %v2700
        %v2885 = vpop.f32.mrf.mxu0
        %v2886 = vadd.f32 %v2556, %v2885
        %v2887 = vpop.f32.mrf.mxu0
        %v2888 = vadd.f32 %v2556, %v2887
        %2889 = vdwg.mxu0
        %2890 = vmatpush.bf16.msra.mxu0 0
        %2891 = vmatpush.bf16.msra.mxu0 0
        %2892 = vmatpush.bf16.msra.mxu0 0
        %2893 = vmatpush.bf16.msra.mxu0 0
        %2894 = vmatpush.bf16.msra.mxu0 0
        %2895 = vmatpush.bf16.msra.mxu0 0
        %2896 = vmatpush.bf16.msra.mxu0 %v2733
        %2897 = vmatpush.bf16.msra.mxu0 %v2661
        %2898 = vmatmul.bf16.gmra.mxu0 %v2700
        %v2899 = vpop.f32.mrf.mxu0
        %v2900 = vadd.f32 %v2557, %v2899
        %v2901 = vpop.f32.mrf.mxu0
        %v2902 = vadd.f32 %v2557, %v2901
        %2903 = vdwg.mxu0
        %2904 = vmatpush.bf16.msra.mxu0 0
        %2905 = vmatpush.bf16.msra.mxu0 0
        %2906 = vmatpush.bf16.msra.mxu0 0
        %2907 = vmatpush.bf16.msra.mxu0 0
        %2908 = vmatpush.bf16.msra.mxu0 0
        %2909 = vmatpush.bf16.msra.mxu0 0
        %2910 = vmatpush.bf16.msra.mxu0 %v2736
        %2911 = vmatpush.bf16.msra.mxu0 %v2662
        %2912 = vmatmul.bf16.gmra.mxu0 %v2700
        %v2913 = vpop.f32.mrf.mxu0
        %v2914 = vadd.f32 %v2558, %v2913
        %v2915 = vpop.f32.mrf.mxu0
        %v2916 = vadd.f32 %v2558, %v2915
        %2917 = vdwg.mxu0
        %2918 = vmatpush.bf16.msra.mxu0 0
        %2919 = vmatpush.bf16.msra.mxu0 0
        %2920 = vmatpush.bf16.msra.mxu0 0
        %2921 = vmatpush.bf16.msra.mxu0 0
        %2922 = vmatpush.bf16.msra.mxu0 0
        %2923 = vmatpush.bf16.msra.mxu0 0
        %2924 = vmatpush.bf16.msra.mxu0 %v2739
        %2925 = vmatpush.bf16.msra.mxu0 %v2663
        %2926 = vmatmul.bf16.gmra.mxu0 %v2700
        %v2927 = vpop.f32.mrf.mxu0
        %v2928 = vadd.f32 %v2559, %v2927
        %v2929 = vpop.f32.mrf.mxu0
        %v2930 = vadd.f32 %v2559, %v2929
        %2931 = vdwg.mxu0
        %2932 = vmatpush.bf16.msra.mxu0 0
        %2933 = vmatpush.bf16.msra.mxu0 0
        %2934 = vmatpush.bf16.msra.mxu0 0
        %2935 = vmatpush.bf16.msra.mxu0 0
        %2936 = vmatpush.bf16.msra.mxu0 0
        %2937 = vmatpush.bf16.msra.mxu0 0
        %2938 = vmatpush.bf16.msra.mxu0 %v2742
        %2939 = vmatpush.bf16.msra.mxu0 %v2664
        %2940 = vmatmul.bf16.gmra.mxu0 %v2700
        %v2941 = vpop.f32.mrf.mxu0
        %v2942 = vadd.f32 %v2560, %v2941
        %v2943 = vpop.f32.mrf.mxu0
        %v2944 = vadd.f32 %v2560, %v2943
        %2945 = vdwg.mxu0
        %2946 = vmatpush.bf16.msra.mxu0 0
        %2947 = vmatpush.bf16.msra.mxu0 0
        %2948 = vmatpush.bf16.msra.mxu0 0
        %2949 = vmatpush.bf16.msra.mxu0 0
        %2950 = vmatpush.bf16.msra.mxu0 0
        %2951 = vmatpush.bf16.msra.mxu0 0
        %2952 = vmatpush.bf16.msra.mxu0 %v2745
        %2953 = vmatpush.bf16.msra.mxu0 %v2665
        %2954 = vmatmul.bf16.gmra.mxu0 %v2700
        %v2955 = vpop.f32.mrf.mxu0
        %v2956 = vadd.f32 %v2561, %v2955
        %v2957 = vpop.f32.mrf.mxu0
        %v2958 = vadd.f32 %v2561, %v2957
        %2959 = vdwg.mxu0
        %2960 = vmatpush.bf16.msra.mxu0 0
        %2961 = vmatpush.bf16.msra.mxu0 0
        %2962 = vmatpush.bf16.msra.mxu0 0
        %2963 = vmatpush.bf16.msra.mxu0 0
        %2964 = vmatpush.bf16.msra.mxu0 0
        %2965 = vmatpush.bf16.msra.mxu0 0
        %2966 = vmatpush.bf16.msra.mxu0 %v2748
        %2967 = vmatpush.bf16.msra.mxu0 %v2666
        %2968 = vmatmul.bf16.gmra.mxu0 %v2700
        %v2969 = vpop.f32.mrf.mxu0
        %v2970 = vadd.f32 %v2562, %v2969
        %v2971 = vpop.f32.mrf.mxu0
        %v2972 = vadd.f32 %v2562, %v2971
        %2973 = vdwg.mxu0
        %v2974 = vmax.f32 %v2760, 0.0
        %v2975 = vmax.f32 %v2774, 0.0
        %v2976 = vmax.f32 %v2788, 0.0
        %v2977 = vmax.f32 %v2802, 0.0
        %v2978 = vmax.f32 %v2816, 0.0
        %v2979 = vmax.f32 %v2830, 0.0
        %v2980 = vmax.f32 %v2844, 0.0
        %v2981 = vmax.f32 %v2858, 0.0
        %v2982 = vmax.f32 %v2872, 0.0
        %v2983 = vmax.f32 %v2886, 0.0
        %v2984 = vmax.f32 %v2900, 0.0
        %v2985 = vmax.f32 %v2914, 0.0
        %v2986 = vmax.f32 %v2928, 0.0
        %v2987 = vmax.f32 %v2942, 0.0
        %v2988 = vmax.f32 %v2956, 0.0
        %v2989 = vmax.f32 %v2970, 0.0
        %v2990 = vmax.f32 %v2762, 0.0
        %v2991 = vmax.f32 %v2776, 0.0
        %v2992 = vmax.f32 %v2790, 0.0
        %v2993 = vmax.f32 %v2804, 0.0
        %v2994 = vmax.f32 %v2818, 0.0
        %v2995 = vmax.f32 %v2832, 0.0
        %v2996 = vmax.f32 %v2846, 0.0
        %v2997 = vmax.f32 %v2860, 0.0
        %v2998 = vmax.f32 %v2874, 0.0
        %v2999 = vmax.f32 %v2888, 0.0
        %v3000 = vmax.f32 %v2902, 0.0
        %v3001 = vmax.f32 %v2916, 0.0
        %v3002 = vmax.f32 %v2930, 0.0
        %v3003 = vmax.f32 %v2944, 0.0
        %v3004 = vmax.f32 %v2958, 0.0
        %v3005 = vmax.f32 %v2972, 0.0
        %v3006 = vpack.c.bf16 %v2990, %v2974
        %v3007 = vpack.c.bf16 %v2991, %v2975
        %v3008 = vpack.c.bf16 %v2992, %v2976
        %v3009 = vpack.c.bf16 %v2993, %v2977
        %v3010 = vpack.c.bf16 %v2994, %v2978
        %v3011 = vpack.c.bf16 %v2995, %v2979
        %v3012 = vpack.c.bf16 %v2996, %v2980
        %v3013 = vpack.c.bf16 %v2997, %v2981
        %v3014 = vpack.c.bf16 %v2998, %v2982
        %v3015 = vpack.c.bf16 %v2999, %v2983
        %v3016 = vpack.c.bf16 %v3000, %v2984
        %v3017 = vpack.c.bf16 %v3001, %v2985
        %v3018 = vpack.c.bf16 %v3002, %v2986
        %v3019 = vpack.c.bf16 %v3003, %v2987
        %v3020 = vpack.c.bf16 %v3004, %v2988
        %v3021 = vpack.c.bf16 %v3005, %v2989
        %v3022 = vld [vmem:[%s1577] sm:$0xff]
        %v3023 = vld [vmem:[%s1577 + $0x8] sm:$0xff]
        %v3024 = vld [vmem:[%s1577 + $0x10] sm:$0xff]
        %v3025 = vld [vmem:[%s1577 + $0x18] sm:$0xff]
        %v3026 = vld [vmem:[%s1577 + $0x20] sm:$0xff]
        %v3027 = vld [vmem:[%s1577 + $0x28] sm:$0xff]
        %v3028 = vld [vmem:[%s1577 + $0x30] sm:$0xff]
        %v3029 = vld [vmem:[%s1577 + $0x38] sm:$0xff]
        %v3030 = vld [vmem:[%s1577 + $0x40] sm:$0xff]
        %v3031 = vld [vmem:[%s1577 + $0x48] sm:$0xff]
        %v3032 = vld [vmem:[%s1577 + $0x50] sm:$0xff]
        %v3033 = vld [vmem:[%s1577 + $0x58] sm:$0xff]
        %v3034 = vld [vmem:[%s1577 + $0x60] sm:$0xff]
        %v3035 = vld [vmem:[%s1577 + $0x68] sm:$0xff]
        %v3036 = vld [vmem:[%s1577 + $0x70] sm:$0xff]
        %v3037 = vld [vmem:[%s1577 + $0x78] sm:$0xff]
        %v3038 = vld [vmem:[%s1577 + $0x80] sm:$0xff]
        %v3039 = vld [vmem:[%s1577 + $0x88] sm:$0xff]
        %v3040 = vld [vmem:[%s1577 + $0x90] sm:$0xff]
        %v3041 = vld [vmem:[%s1577 + $0x98] sm:$0xff]
        %v3042 = vld [vmem:[%s1577 + $0xa0] sm:$0xff]
        %v3043 = vld [vmem:[%s1577 + $0xa8] sm:$0xff]
        %v3044 = vld [vmem:[%s1577 + $0xb0] sm:$0xff]
        %v3045 = vld [vmem:[%s1577 + $0xb8] sm:$0xff]
        %v3046 = vld [vmem:[%s1586] sm:$0x1]
        %v3048 = vperm.slane %v3046, 0
        %v3074 = vunpack.c.l.b16 %v3022
        %v3075 = vunpack.c.h.b16 %v3022
        %v3076 = vunpack.c.l.b16 %v3023
        %v3077 = vunpack.c.h.b16 %v3023
        %v3078 = vunpack.c.l.b16 %v3024
        %v3079 = vunpack.c.h.b16 %v3024
        %v3080 = vunpack.c.l.b16 %v3025
        %v3081 = vunpack.c.h.b16 %v3025
        %v3082 = vunpack.c.l.b16 %v3026
        %v3083 = vunpack.c.h.b16 %v3026
        %v3084 = vunpack.c.l.b16 %v3027
        %v3085 = vunpack.c.h.b16 %v3027
        %v3086 = vunpack.c.l.b16 %v3028
        %v3087 = vunpack.c.h.b16 %v3028
        %v3088 = vunpack.c.l.b16 %v3029
        %v3089 = vunpack.c.h.b16 %v3029
        %v3090 = vunpack.c.l.b16 %v3030
        %v3091 = vunpack.c.h.b16 %v3030
        %v3092 = vunpack.c.l.b16 %v3031
        %v3093 = vunpack.c.h.b16 %v3031
        %v3094 = vunpack.c.l.b16 %v3032
        %v3095 = vunpack.c.h.b16 %v3032
        %v3096 = vunpack.c.l.b16 %v3033
        %v3097 = vunpack.c.h.b16 %v3033
        %v3098 = vunpack.c.l.b16 %v3034
        %v3099 = vunpack.c.h.b16 %v3034
        %v3100 = vunpack.c.l.b16 %v3035
        %v3101 = vunpack.c.h.b16 %v3035
        %v3102 = vunpack.c.l.b16 %v3036
        %v3103 = vunpack.c.h.b16 %v3036
        %v3104 = vunpack.c.l.b16 %v3037
        %v3105 = vunpack.c.h.b16 %v3037
        %v3106 = vunpack.c.l.b16 %v3038
        %v3107 = vunpack.c.h.b16 %v3038
        %v3108 = vunpack.c.l.b16 %v3039
        %v3109 = vunpack.c.h.b16 %v3039
        %v3110 = vunpack.c.l.b16 %v3040
        %v3111 = vunpack.c.h.b16 %v3040
        %v3112 = vunpack.c.l.b16 %v3041
        %v3113 = vunpack.c.h.b16 %v3041
        %v3114 = vunpack.c.l.b16 %v3042
        %v3115 = vunpack.c.h.b16 %v3042
        %v3116 = vunpack.c.l.b16 %v3043
        %v3117 = vunpack.c.h.b16 %v3043
        %v3118 = vunpack.c.l.b16 %v3044
        %v3119 = vunpack.c.h.b16 %v3044
        %v3120 = vunpack.c.l.b16 %v3045
        %v3121 = vunpack.c.h.b16 %v3045
        %v3122 = vpack.c.b16 %v3090, %v3074
        %v3123 = vpack.c.b16 %v3091, %v3075
        %v3124 = vpack.c.b16 %v3092, %v3076
        %v3125 = vpack.c.b16 %v3093, %v3077
        %v3126 = vpack.c.b16 %v3094, %v3078
        %v3127 = vpack.c.b16 %v3095, %v3079
        %v3128 = vpack.c.b16 %v3096, %v3080
        %v3129 = vpack.c.b16 %v3097, %v3081
        %v3130 = vpack.c.b16 %v3098, %v3082
        %v3131 = vpack.c.b16 %v3099, %v3083
        %v3132 = vpack.c.b16 %v3100, %v3084
        %v3133 = vpack.c.b16 %v3101, %v3085
        %v3134 = vpack.c.b16 %v3102, %v3086
        %v3135 = vpack.c.b16 %v3103, %v3087
        %v3136 = vpack.c.b16 %v3104, %v3088
        %v3137 = vpack.c.b16 %v3105, %v3089
        %v3138 = vpack.c.b16 %v3106, %v3106
        %v3139 = vpack.c.b16 %v3107, %v3107
        %v3140 = vpack.c.b16 %v3108, %v3108
        %v3141 = vpack.c.b16 %v3109, %v3109
        %v3142 = vpack.c.b16 %v3110, %v3110
        %v3143 = vpack.c.b16 %v3111, %v3111
        %v3144 = vpack.c.b16 %v3112, %v3112
        %v3145 = vpack.c.b16 %v3113, %v3113
        %v3146 = vpack.c.b16 %v3114, %v3114
        %v3147 = vpack.c.b16 %v3115, %v3115
        %v3148 = vpack.c.b16 %v3116, %v3116
        %v3149 = vpack.c.b16 %v3117, %v3117
        %v3150 = vpack.c.b16 %v3118, %v3118
        %v3151 = vpack.c.b16 %v3119, %v3119
        %v3152 = vpack.c.b16 %v3120, %v3120
        %v3153 = vpack.c.b16 %v3121, %v3121
        %3186 = vmatpush.bf16.xpose.msra.mxu0 0
        %3187 = vmatpush.bf16.xpose.msra.mxu0 0
        %3188 = vmatpush.bf16.xpose.msra.mxu0 0
        %3189 = vmatpush.bf16.xpose.msra.mxu0 0
        %3190 = vmatpush.bf16.xpose.msra.mxu0 0
        %3191 = vmatpush.bf16.xpose.msra.mxu0 0
        %3192 = vmatpush.bf16.xpose.msra.mxu0 %v3138
        %3193 = vmatpush.bf16.xpose.msra.mxu0 %v3122
        %3194 = vmatmul.bf16.gmra.mxu0 %v3006
        %v3195 = vpop.f32.mrf.mxu0
        %v3196 = vadd.f32 %v3048, %v3195
        %v3197 = vpop.f32.mrf.mxu0
        %v3198 = vadd.f32 %v3048, %v3197
        %3199 = vdwg.mxu0
        %3200 = vmatpush.bf16.xpose.msra.mxu0 0
        %3201 = vmatpush.bf16.xpose.msra.mxu0 0
        %3202 = vmatpush.bf16.xpose.msra.mxu0 0
        %3203 = vmatpush.bf16.xpose.msra.mxu0 0
        %3204 = vmatpush.bf16.xpose.msra.mxu0 0
        %3205 = vmatpush.bf16.xpose.msra.mxu0 0
        %3206 = vmatpush.bf16.xpose.msra.mxu0 %v3139
        %3207 = vmatpush.bf16.xpose.msra.mxu0 %v3123
        %3208 = vmatmul.bf16.gmra.mxu0 %v3007
        %v3209 = vpop.f32.mrf.mxu0
        %v3210 = vadd.f32 %v3196, %v3209
        %v3211 = vpop.f32.mrf.mxu0
        %v3212 = vadd.f32 %v3198, %v3211
        %3213 = vdwg.mxu0
        %3214 = vmatpush.bf16.xpose.msra.mxu0 0
        %3215 = vmatpush.bf16.xpose.msra.mxu0 0
        %3216 = vmatpush.bf16.xpose.msra.mxu0 0
        %3217 = vmatpush.bf16.xpose.msra.mxu0 0
        %3218 = vmatpush.bf16.xpose.msra.mxu0 0
        %3219 = vmatpush.bf16.xpose.msra.mxu0 0
        %3220 = vmatpush.bf16.xpose.msra.mxu0 %v3140
        %3221 = vmatpush.bf16.xpose.msra.mxu0 %v3124
        %3222 = vmatmul.bf16.gmra.mxu0 %v3008
        %v3223 = vpop.f32.mrf.mxu0
        %v3224 = vadd.f32 %v3210, %v3223
        %v3225 = vpop.f32.mrf.mxu0
        %v3226 = vadd.f32 %v3212, %v3225
        %3227 = vdwg.mxu0
        %3228 = vmatpush.bf16.xpose.msra.mxu0 0
        %3229 = vmatpush.bf16.xpose.msra.mxu0 0
        %3230 = vmatpush.bf16.xpose.msra.mxu0 0
        %3231 = vmatpush.bf16.xpose.msra.mxu0 0
        %3232 = vmatpush.bf16.xpose.msra.mxu0 0
        %3233 = vmatpush.bf16.xpose.msra.mxu0 0
        %3234 = vmatpush.bf16.xpose.msra.mxu0 %v3141
        %3235 = vmatpush.bf16.xpose.msra.mxu0 %v3125
        %3236 = vmatmul.bf16.gmra.mxu0 %v3009
        %v3237 = vpop.f32.mrf.mxu0
        %v3238 = vadd.f32 %v3224, %v3237
        %v3239 = vpop.f32.mrf.mxu0
        %v3240 = vadd.f32 %v3226, %v3239
        %3241 = vdwg.mxu0
        %3242 = vmatpush.bf16.xpose.msra.mxu0 0
        %3243 = vmatpush.bf16.xpose.msra.mxu0 0
        %3244 = vmatpush.bf16.xpose.msra.mxu0 0
        %3245 = vmatpush.bf16.xpose.msra.mxu0 0
        %3246 = vmatpush.bf16.xpose.msra.mxu0 0
        %3247 = vmatpush.bf16.xpose.msra.mxu0 0
        %3248 = vmatpush.bf16.xpose.msra.mxu0 %v3142
        %3249 = vmatpush.bf16.xpose.msra.mxu0 %v3126
        %3250 = vmatmul.bf16.gmra.mxu0 %v3010
        %v3251 = vpop.f32.mrf.mxu0
        %v3252 = vadd.f32 %v3238, %v3251
        %v3253 = vpop.f32.mrf.mxu0
        %v3254 = vadd.f32 %v3240, %v3253
        %3255 = vdwg.mxu0
        %3256 = vmatpush.bf16.xpose.msra.mxu0 0
        %3257 = vmatpush.bf16.xpose.msra.mxu0 0
        %3258 = vmatpush.bf16.xpose.msra.mxu0 0
        %3259 = vmatpush.bf16.xpose.msra.mxu0 0
        %3260 = vmatpush.bf16.xpose.msra.mxu0 0
        %3261 = vmatpush.bf16.xpose.msra.mxu0 0
        %3262 = vmatpush.bf16.xpose.msra.mxu0 %v3143
        %3263 = vmatpush.bf16.xpose.msra.mxu0 %v3127
        %3264 = vmatmul.bf16.gmra.mxu0 %v3011
        %v3265 = vpop.f32.mrf.mxu0
        %v3266 = vadd.f32 %v3252, %v3265
        %v3267 = vpop.f32.mrf.mxu0
        %v3268 = vadd.f32 %v3254, %v3267
        %3269 = vdwg.mxu0
        %3270 = vmatpush.bf16.xpose.msra.mxu0 0
        %3271 = vmatpush.bf16.xpose.msra.mxu0 0
        %3272 = vmatpush.bf16.xpose.msra.mxu0 0
        %3273 = vmatpush.bf16.xpose.msra.mxu0 0
        %3274 = vmatpush.bf16.xpose.msra.mxu0 0
        %3275 = vmatpush.bf16.xpose.msra.mxu0 0
        %3276 = vmatpush.bf16.xpose.msra.mxu0 %v3144
        %3277 = vmatpush.bf16.xpose.msra.mxu0 %v3128
        %3278 = vmatmul.bf16.gmra.mxu0 %v3012
        %v3279 = vpop.f32.mrf.mxu0
        %v3280 = vadd.f32 %v3266, %v3279
        %v3281 = vpop.f32.mrf.mxu0
        %v3282 = vadd.f32 %v3268, %v3281
        %3283 = vdwg.mxu0
        %3284 = vmatpush.bf16.xpose.msra.mxu0 0
        %3285 = vmatpush.bf16.xpose.msra.mxu0 0
        %3286 = vmatpush.bf16.xpose.msra.mxu0 0
        %3287 = vmatpush.bf16.xpose.msra.mxu0 0
        %3288 = vmatpush.bf16.xpose.msra.mxu0 0
        %3289 = vmatpush.bf16.xpose.msra.mxu0 0
        %3290 = vmatpush.bf16.xpose.msra.mxu0 %v3145
        %3291 = vmatpush.bf16.xpose.msra.mxu0 %v3129
        %3292 = vmatmul.bf16.gmra.mxu0 %v3013
        %v3293 = vpop.f32.mrf.mxu0
        %v3294 = vadd.f32 %v3280, %v3293
        %v3295 = vpop.f32.mrf.mxu0
        %v3296 = vadd.f32 %v3282, %v3295
        %3297 = vdwg.mxu0
        %3298 = vmatpush.bf16.xpose.msra.mxu0 0
        %3299 = vmatpush.bf16.xpose.msra.mxu0 0
        %3300 = vmatpush.bf16.xpose.msra.mxu0 0
        %3301 = vmatpush.bf16.xpose.msra.mxu0 0
        %3302 = vmatpush.bf16.xpose.msra.mxu0 0
        %3303 = vmatpush.bf16.xpose.msra.mxu0 0
        %3304 = vmatpush.bf16.xpose.msra.mxu0 %v3146
        %3305 = vmatpush.bf16.xpose.msra.mxu0 %v3130
        %3306 = vmatmul.bf16.gmra.mxu0 %v3014
        %v3307 = vpop.f32.mrf.mxu0
        %v3308 = vadd.f32 %v3294, %v3307
        %v3309 = vpop.f32.mrf.mxu0
        %v3310 = vadd.f32 %v3296, %v3309
        %3311 = vdwg.mxu0
        %3312 = vmatpush.bf16.xpose.msra.mxu0 0
        %3313 = vmatpush.bf16.xpose.msra.mxu0 0
        %3314 = vmatpush.bf16.xpose.msra.mxu0 0
        %3315 = vmatpush.bf16.xpose.msra.mxu0 0
        %3316 = vmatpush.bf16.xpose.msra.mxu0 0
        %3317 = vmatpush.bf16.xpose.msra.mxu0 0
        %3318 = vmatpush.bf16.xpose.msra.mxu0 %v3147
        %3319 = vmatpush.bf16.xpose.msra.mxu0 %v3131
        %3320 = vmatmul.bf16.gmra.mxu0 %v3015
        %v3321 = vpop.f32.mrf.mxu0
        %v3322 = vadd.f32 %v3308, %v3321
        %v3323 = vpop.f32.mrf.mxu0
        %v3324 = vadd.f32 %v3310, %v3323
        %3325 = vdwg.mxu0
        %3326 = vmatpush.bf16.xpose.msra.mxu0 0
        %3327 = vmatpush.bf16.xpose.msra.mxu0 0
        %3328 = vmatpush.bf16.xpose.msra.mxu0 0
        %3329 = vmatpush.bf16.xpose.msra.mxu0 0
        %3330 = vmatpush.bf16.xpose.msra.mxu0 0
        %3331 = vmatpush.bf16.xpose.msra.mxu0 0
        %3332 = vmatpush.bf16.xpose.msra.mxu0 %v3148
        %3333 = vmatpush.bf16.xpose.msra.mxu0 %v3132
        %3334 = vmatmul.bf16.gmra.mxu0 %v3016
        %v3335 = vpop.f32.mrf.mxu0
        %v3336 = vadd.f32 %v3322, %v3335
        %v3337 = vpop.f32.mrf.mxu0
        %v3338 = vadd.f32 %v3324, %v3337
        %3339 = vdwg.mxu0
        %3340 = vmatpush.bf16.xpose.msra.mxu0 0
        %3341 = vmatpush.bf16.xpose.msra.mxu0 0
        %3342 = vmatpush.bf16.xpose.msra.mxu0 0
        %3343 = vmatpush.bf16.xpose.msra.mxu0 0
        %3344 = vmatpush.bf16.xpose.msra.mxu0 0
        %3345 = vmatpush.bf16.xpose.msra.mxu0 0
        %3346 = vmatpush.bf16.xpose.msra.mxu0 %v3149
        %3347 = vmatpush.bf16.xpose.msra.mxu0 %v3133
        %3348 = vmatmul.bf16.gmra.mxu0 %v3017
        %v3349 = vpop.f32.mrf.mxu0
        %v3350 = vadd.f32 %v3336, %v3349
        %v3351 = vpop.f32.mrf.mxu0
        %v3352 = vadd.f32 %v3338, %v3351
        %3353 = vdwg.mxu0
        %3354 = vmatpush.bf16.xpose.msra.mxu0 0
        %3355 = vmatpush.bf16.xpose.msra.mxu0 0
        %3356 = vmatpush.bf16.xpose.msra.mxu0 0
        %3357 = vmatpush.bf16.xpose.msra.mxu0 0
        %3358 = vmatpush.bf16.xpose.msra.mxu0 0
        %3359 = vmatpush.bf16.xpose.msra.mxu0 0
        %3360 = vmatpush.bf16.xpose.msra.mxu0 %v3150
        %3361 = vmatpush.bf16.xpose.msra.mxu0 %v3134
        %3362 = vmatmul.bf16.gmra.mxu0 %v3018
        %v3363 = vpop.f32.mrf.mxu0
        %v3364 = vadd.f32 %v3350, %v3363
        %v3365 = vpop.f32.mrf.mxu0
        %v3366 = vadd.f32 %v3352, %v3365
        %3367 = vdwg.mxu0
        %3368 = vmatpush.bf16.xpose.msra.mxu0 0
        %3369 = vmatpush.bf16.xpose.msra.mxu0 0
        %3370 = vmatpush.bf16.xpose.msra.mxu0 0
        %3371 = vmatpush.bf16.xpose.msra.mxu0 0
        %3372 = vmatpush.bf16.xpose.msra.mxu0 0
        %3373 = vmatpush.bf16.xpose.msra.mxu0 0
        %3374 = vmatpush.bf16.xpose.msra.mxu0 %v3151
        %3375 = vmatpush.bf16.xpose.msra.mxu0 %v3135
        %3376 = vmatmul.bf16.gmra.mxu0 %v3019
        %v3377 = vpop.f32.mrf.mxu0
        %v3378 = vadd.f32 %v3364, %v3377
        %v3379 = vpop.f32.mrf.mxu0
        %v3380 = vadd.f32 %v3366, %v3379
        %3381 = vdwg.mxu0
        %3382 = vmatpush.bf16.xpose.msra.mxu0 0
        %3383 = vmatpush.bf16.xpose.msra.mxu0 0
        %3384 = vmatpush.bf16.xpose.msra.mxu0 0
        %3385 = vmatpush.bf16.xpose.msra.mxu0 0
        %3386 = vmatpush.bf16.xpose.msra.mxu0 0
        %3387 = vmatpush.bf16.xpose.msra.mxu0 0
        %3388 = vmatpush.bf16.xpose.msra.mxu0 %v3152
        %3389 = vmatpush.bf16.xpose.msra.mxu0 %v3136
        %3390 = vmatmul.bf16.gmra.mxu0 %v3020
        %v3391 = vpop.f32.mrf.mxu0
        %v3392 = vadd.f32 %v3378, %v3391
        %v3393 = vpop.f32.mrf.mxu0
        %v3394 = vadd.f32 %v3380, %v3393
        %3395 = vdwg.mxu0
        %3396 = vmatpush.bf16.xpose.msra.mxu0 0
        %3397 = vmatpush.bf16.xpose.msra.mxu0 0
        %3398 = vmatpush.bf16.xpose.msra.mxu0 0
        %3399 = vmatpush.bf16.xpose.msra.mxu0 0
        %3400 = vmatpush.bf16.xpose.msra.mxu0 0
        %3401 = vmatpush.bf16.xpose.msra.mxu0 0
        %3402 = vmatpush.bf16.xpose.msra.mxu0 %v3153
        %3403 = vmatpush.bf16.xpose.msra.mxu0 %v3137
        %3404 = vmatmul.bf16.gmra.mxu0 %v3021
        %v3405 = vpop.f32.mrf.mxu0
        %v3406 = vadd.f32 %v3392, %v3405
        %v3407 = vpop.f32.mrf.mxu0
        %v3408 = vadd.f32 %v3394, %v3407
        %3409 = vdwg.mxu0
        %v3410 = vadd.f32 %v2516, %v3406
        %v3411 = vadd.f32 %v2517, %v3408
        %v3412 = vld [vmem:[%s1613] sm:$0x1]
        %v3413 = vld [vmem:[%s1622] sm:$0x1]
        %v3414 = vsel %vm1942, %v3410, 0.0
        %3415 = vadd.xlane.f32.xlu0 %v3414
        %v3416 = vpop.xlane.xlu0 %3415
        %v3417 = vsel %vm1942, %v3411, 0.0
        %3418 = vadd.xlane.f32.xlu0 %v3417
        %v3419 = vpop.xlane.xlu0 %3418
        %v3420 = vmul.f32 %v3416, %v2469
        %v3421 = vmul.f32 %v3419, %v2469
        %v3422 = vsub.f32 %v3410, %v3420
        %v3423 = vsub.f32 %v3411, %v3421
        %v3424 = vmul.f32 %v3422, %v3422
        %v3425 = vmul.f32 %v3423, %v3423
        %v3426 = vsel %vm1942, %v3424, 0.0
        %3427 = vadd.xlane.f32.xlu0 %v3426
        %v3428 = vpop.xlane.xlu0 %3427
        %v3429 = vsel %vm1942, %v3425, 0.0
        %3430 = vadd.xlane.f32.xlu0 %v3429
        %v3431 = vpop.xlane.xlu0 %3430
        %v3432 = vmul.f32 %v3428, %v2469
        %v3433 = vmul.f32 %v3431, %v2469
        %v3434 = vadd.f32 %v3432, 1e-05
        %v3435 = vadd.f32 %v3433, 1e-05
        %v3436 = vrsqrt.pop %v3434
        %v3437 = vmul.f32 %v3436, %v3434
        %v3438 = vmul.f32 %v3437, %v3436
        %v3439 = vmul.f32 0.5, %v3438
        %v3440 = vsub.f32 1.5, %v3439
        %v3441 = vmul.f32 %v3436, %v3440
        %vm3442 = vweird.f32 %v3434
        %vm3443 = vweird.f32 %v3436
        %vm3444 = vmor %vm3442, %vm3443
        %v3445 = vsel %vm3444, %v3436, %v3441
        %v3446 = vrsqrt.pop %v3435
        %v3447 = vmul.f32 %v3446, %v3435
        %v3448 = vmul.f32 %v3447, %v3446
        %v3449 = vmul.f32 0.5, %v3448
        %v3450 = vsub.f32 1.5, %v3449
        %v3451 = vmul.f32 %v3446, %v3450
        %vm3452 = vweird.f32 %v3435
        %vm3453 = vweird.f32 %v3446
        %vm3454 = vmor %vm3452, %vm3453
        %v3455 = vsel %vm3454, %v3446, %v3451
        %v3456 = vmul.f32 %v3422, %v3445
        %v3457 = vmul.f32 %v3423, %v3455
        %v3459 = vperm.slane %v3412, 0
        %v3461 = vmul.f32 %v3456, %v3459
        %v3462 = vmul.f32 %v3457, %v3459
        %v3464 = vperm.slane %v3413, 0
        %v3466 = vadd.f32 %v3461, %v3464
        %v3467 = vadd.f32 %v3462, %v3464
        %3468 = vst.msk [vmem:[#allocation2] sm:$0xff] %vm1942, %v3466
        %3469 = vst.msk [vmem:[#allocation2 + $0x8] sm:$0xff] %vm1942, %v3467
        %p3470 = scmp.eq.s32.totalorder %s100, 5
        // Predicated region
        $region273: #{attention_vae_forward.1} parent=171 // pred_check
          %p3471 = pneg %p3470
        $region274: #{attention_vae_forward.1} parent=171 // pred_check_branch
          %3473 = sbr.rel (%p3471) target = $region276
        $region275: #{attention_vae_forward.1} parent=171 // pred_region
          %v3474 = vsel %vm1942, %v3466, -inf
          %v3475 = vrot.slane %v3474, 4
          %v3476 = vmax.f32 %v3474, %v3475
          %v3477 = vrot.slane %v3476, 2
          %v3478 = vmax.f32 %v3476, %v3477
          %v3479 = vrot.slane %v3478, 1
          %v3480 = vmax.f32 %v3478, %v3479
          %v3481 = vsel %vm1942, %v3467, -inf
          %v3482 = vrot.slane %v3481, 4
          %v3483 = vmax.f32 %v3481, %v3482
          %v3484 = vrot.slane %v3483, 2
          %v3485 = vmax.f32 %v3483, %v3484
          %v3486 = vrot.slane %v3485, 1
          %v3487 = vmax.f32 %v3485, %v3486
          %vm3488 = vcmask 1040384
          %v3489 = vsel %vm3488, %v3480, %v3487
          %v3490 = vld [vmem:[%s53] sm:$0xff]
          %v3491 = vld [vmem:[%s53 + $0x8] sm:$0xff]
          %v3492 = vld [vmem:[%s53 + $0x10] sm:$0xff]
          %v3493 = vld [vmem:[#allocation21] sm:$0x1]
          %v3494 = vld [vmem:[%s57] sm:$0xff]
          %v3495 = vld [vmem:[%s57 + $0x8] sm:$0xff]
          %v3496 = vld [vmem:[%s57 + $0x10] sm:$0xff]
          %v3497 = vld [vmem:[%s57 + $0x18] sm:$0xff]
          %v3498 = vld [vmem:[%s57 + $0x20] sm:$0xff]
          %v3499 = vld [vmem:[%s57 + $0x28] sm:$0xff]
          %v3500 = vld [vmem:[%s57 + $0x30] sm:$0xff]
          %v3501 = vld [vmem:[%s57 + $0x38] sm:$0xff]
          %v3502 = vld [vmem:[#allocation22] sm:$0x1]
          %v3504 = vperm.slane %v3493, 0
          %v3507 = vsel %vm1942, %v3489, 0
          %3509 = vmatpush.msra.mxu0 0.0
          %3510 = vmatpush.msra.mxu0 0.0
          %3511 = vmatpush.msra.mxu0 0.0
          %3512 = vmatpush.msra.mxu0 0.0
          %3513 = vmatpush.msra.mxu0 0.0
          %3514 = vmatpush.msra.mxu0 0.0
          %3515 = vmatpush.msra.mxu0 0.0
          %3516 = vmatpush.msra.mxu0 0.0
          %3517 = vmatpush.msra.mxu0 0.0
          %3518 = vmatpush.msra.mxu0 0.0
          %3519 = vmatpush.msra.mxu0 0.0
          %3520 = vmatpush.msra.mxu0 0.0
          %3521 = vmatpush.msra.mxu0 0.0
          %3522 = vmatpush.msra.mxu0 %v3492
          %3523 = vmatpush.msra.mxu0 %v3491
          %3524 = vmatpush.msra.mxu0 %v3490
          %3525 = vmatmul.f32.gmra.mxu0 %v3507
          %v3526 = vpop.f32.mrf.mxu0
          %v3527 = vadd.f32 %v3504, %v3526
          %3528 = vdwg.mxu0
          %v3529 = vmax.f32 %v3527, 0.0
          %v3531 = vperm.slane %v3502, 0
          %v3534 = vsel %vm2232, %v3529, 0
          %3536 = vmatpush.msra.mxu0 0.0
          %3537 = vmatpush.msra.mxu0 0.0
          %3538 = vmatpush.msra.mxu0 0.0
          %3539 = vmatpush.msra.mxu0 0.0
          %3540 = vmatpush.msra.mxu0 0.0
          %3541 = vmatpush.msra.mxu0 0.0
          %3542 = vmatpush.msra.mxu0 0.0
          %3543 = vmatpush.msra.mxu0 0.0
          %3544 = vmatpush.msra.mxu0 %v3501
          %3545 = vmatpush.msra.mxu0 %v3500
          %3546 = vmatpush.msra.mxu0 %v3499
          %3547 = vmatpush.msra.mxu0 %v3498
          %3548 = vmatpush.msra.mxu0 %v3497
          %3549 = vmatpush.msra.mxu0 %v3496
          %3550 = vmatpush.msra.mxu0 %v3495
          %3551 = vmatpush.msra.mxu0 %v3494
          %3552 = vmatmul.f32.gmra.mxu0 %v3534
          %v3553 = vpop.f32.mrf.mxu0
          %v3554 = vadd.f32 %v3531, %v3553
          %3555 = vdwg.mxu0
          %v3556 = vld [vmem:[#allocation24] sm:$0xff]
          %v3557 = vld [vmem:[#allocation24 + $0x8] sm:$0xff]
          %v3558 = vld [vmem:[#allocation24 + $0x10] sm:$0xff]
          %v3559 = vld [vmem:[#allocation25] sm:$0x1]
          %v3560 = vld [vmem:[%s65] sm:$0xff]
          %v3561 = vld [vmem:[%s65 + $0x8] sm:$0xff]
          %v3562 = vld [vmem:[%s65 + $0x10] sm:$0xff]
          %v3563 = vld [vmem:[%s65 + $0x18] sm:$0xff]
          %v3564 = vld [vmem:[%s65 + $0x20] sm:$0xff]
          %v3565 = vld [vmem:[%s65 + $0x28] sm:$0xff]
          %v3566 = vld [vmem:[%s65 + $0x30] sm:$0xff]
          %v3567 = vld [vmem:[%s65 + $0x38] sm:$0xff]
          %v3568 = vld [vmem:[#allocation27] sm:$0x1]
          %v3570 = vperm.slane %v3559, 0
          %3572 = vmatpush.msra.mxu0 0.0
          %3573 = vmatpush.msra.mxu0 0.0
          %3574 = vmatpush.msra.mxu0 0.0
          %3575 = vmatpush.msra.mxu0 0.0
          %3576 = vmatpush.msra.mxu0 0.0
          %3577 = vmatpush.msra.mxu0 0.0
          %3578 = vmatpush.msra.mxu0 0.0
          %3579 = vmatpush.msra.mxu0 0.0
          %3580 = vmatpush.msra.mxu0 0.0
          %3581 = vmatpush.msra.mxu0 0.0
          %3582 = vmatpush.msra.mxu0 0.0
          %3583 = vmatpush.msra.mxu0 0.0
          %3584 = vmatpush.msra.mxu0 0.0
          %3585 = vmatpush.msra.mxu0 %v3558
          %3586 = vmatpush.msra.mxu0 %v3557
          %3587 = vmatpush.msra.mxu0 %v3556
          %3588 = vmatmul.f32.gmra.mxu0 %v3507
          %v3589 = vpop.f32.mrf.mxu0
          %v3590 = vadd.f32 %v3570, %v3589
          %3591 = vdwg.mxu0
          %v3592 = vmax.f32 %v3590, 0.0
          %v3594 = vperm.slane %v3568, 0
          %v3597 = vsel %vm2232, %v3592, 0
          %3599 = vmatpush.msra.mxu0 0.0
          %3600 = vmatpush.msra.mxu0 0.0
          %3601 = vmatpush.msra.mxu0 0.0
          %3602 = vmatpush.msra.mxu0 0.0
          %3603 = vmatpush.msra.mxu0 0.0
          %3604 = vmatpush.msra.mxu0 0.0
          %3605 = vmatpush.msra.mxu0 0.0
          %3606 = vmatpush.msra.mxu0 0.0
          %3607 = vmatpush.msra.mxu0 %v3567
          %3608 = vmatpush.msra.mxu0 %v3566
          %3609 = vmatpush.msra.mxu0 %v3565
          %3610 = vmatpush.msra.mxu0 %v3564
          %3611 = vmatpush.msra.mxu0 %v3563
          %3612 = vmatpush.msra.mxu0 %v3562
          %3613 = vmatpush.msra.mxu0 %v3561
          %3614 = vmatpush.msra.mxu0 %v3560
          %3615 = vmatmul.f32.gmra.mxu0 %v3597
          %v3616 = vpop.f32.mrf.mxu0
          %v3617 = vadd.f32 %v3594, %v3616
          %3618 = vdwg.mxu0
          %v3619 = vmul.f32 %v3617, 0.5
          %v3620 = vmul.f32 %v3619, 1.442695
          %v3621 = vpow.pop %v3620
          %v3622 = vld [vmem:[%s3] sm:$0x3]
          %3624 = vrot.lane.b32.xlu0 %v3622, 6
          %v3625 = vpop.permute.xlu0 %3624
          %3627 = vrot.lane.b32.xlu0 %v3622, 12
          %v3628 = vpop.permute.xlu0 %3627
          %3630 = vrot.lane.b32.xlu0 %v3622, 18
          %v3631 = vpop.permute.xlu0 %3630
          %3633 = vrot.lane.b32.xlu0 %v3622, 24
          %v3634 = vpop.permute.xlu0 %3633
          %3636 = vrot.lane.b32.xlu0 %v3622, 30
          %v3637 = vpop.permute.xlu0 %3636
          %vm3639 = vcmask 48128
          %v3640 = vsel %vm3639, %v3622, %v3625
          %v3641 = vsel %vm2381, %v3640, %v3628
          %vm3642 = vcmask 146432
          %v3643 = vsel %vm3642, %v3641, %v3631
          %v3644 = vsel %vm1942, %v3643, %v3634
          %vm3645 = vcmask 244736
          %v3646 = vsel %vm3645, %v3644, %v3637
          %v3647 = vlaneseq
          %v3648 = vshrl.u32 %v3647, 7
          %v3649 = vadd.s32 %v3648, 8
          %v3650 = vadd.s32 %v3648, 16
          %v3651 = vadd.s32 %v3648, 24
          %v3652 = vadd.s32 %v3648, 32
          %v3653 = vlaneseq
          %v3654 = vand.u32 %v3653, 127
          %v3655 = vmul.u32 %v3654, 6
          %vm3656 = vcmp.ge.s32.totalorder %v3648, %v3655
          %vm3657 = vcmp.ge.s32.totalorder %v3649, %v3655
          %vm3658 = vcmp.ge.s32.totalorder %v3650, %v3655
          %vm3659 = vcmp.ge.s32.totalorder %v3651, %v3655
          %vm3660 = vcmp.ge.s32.totalorder %v3652, %v3655
          %v3661 = vadd.s32 %v3654, 1
          %v3662 = vmul.u32 %v3661, 6
          %vm3663 = vcmp.lt.s32.totalorder %v3648, %v3662
          %vm3664 = vcmp.lt.s32.totalorder %v3649, %v3662
          %vm3665 = vcmp.lt.s32.totalorder %v3650, %v3662
          %vm3666 = vcmp.lt.s32.totalorder %v3651, %v3662
          %vm3667 = vcmp.lt.s32.totalorder %v3652, %v3662
          %vm3668 = vmand %vm3656, %vm3663
          %vm3669 = vmand %vm3657, %vm3664
          %vm3670 = vmand %vm3658, %vm3665
          %vm3671 = vmand %vm3659, %vm3666
          %vm3672 = vmand %vm3660, %vm3667
          %v3673 = vsel %vm3668, 1, 0
          %v3674 = vsel %vm3669, 1, 0
          %v3675 = vsel %vm3670, 1, 0
          %v3676 = vsel %vm3671, 1, 0
          %v3677 = vsel %vm3672, 1, 0
          %v3678 = vcvt.s32.f32 %v3673
          %v3679 = vcvt.s32.f32 %v3674
          %v3680 = vcvt.s32.f32 %v3675
          %v3681 = vcvt.s32.f32 %v3676
          %v3682 = vcvt.s32.f32 %v3677
          %v3683 = vmul.f32 %v3621, %v3646
          %vm3684 = vcmask 293888
          %v3686 = vsel %vm3684, %v3683, 0
          %v3689 = vsel %vm2388, %v3682, 0
          %3691 = vmatpush.msra.mxu0 0.0
          %3692 = vmatpush.msra.mxu0 0.0
          %3693 = vmatpush.msra.mxu0 0.0
          %3694 = vmatpush.msra.mxu0 0.0
          %3695 = vmatpush.msra.mxu0 0.0
          %3696 = vmatpush.msra.mxu0 0.0
          %3697 = vmatpush.msra.mxu0 0.0
          %3698 = vmatpush.msra.mxu0 0.0
          %3699 = vmatpush.msra.mxu0 0.0
          %3700 = vmatpush.msra.mxu0 0.0
          %3701 = vmatpush.msra.mxu0 0.0
          %3702 = vmatpush.msra.mxu0 %v3689
          %3703 = vmatpush.msra.mxu0 %v3681
          %3704 = vmatpush.msra.mxu0 %v3680
          %3705 = vmatpush.msra.mxu0 %v3679
          %3706 = vmatpush.msra.mxu0 %v3678
          %3707 = vmatmul.f32.gmra.mxu0 %v3686
          %v3708 = vpop.f32.mrf.mxu0
          %v3709 = vadd.f32 %v3554, %v3708
          %3710 = vdwg.mxu0
          %v3711 = vld [vmem:[#allocation28] sm:$0x3f]
          %v3712 = vld [vmem:[#allocation30] sm:$0x1]
          %v3713 = vld [vmem:[#allocation31] sm:$0xff]
          %v3714 = vld [vmem:[#allocation31 + $0x8] sm:$0xff]
          %v3715 = vld [vmem:[#allocation31 + $0x10] sm:$0xff]
          %v3716 = vld [vmem:[#allocation31 + $0x18] sm:$0xff]
          %v3717 = vld [vmem:[#allocation31 + $0x20] sm:$0xff]
          %v3718 = vld [vmem:[#allocation31 + $0x28] sm:$0xff]
          %v3719 = vld [vmem:[#allocation31 + $0x30] sm:$0xff]
          %v3720 = vld [vmem:[#allocation31 + $0x38] sm:$0xff]
          %v3721 = vld [vmem:[#allocation33] sm:$0x1]
          %v3723 = vperm.slane %v3712, 0
          %v3726 = vsel %vm3639, %v3709, 0
          %vm3728 = vcmask 1045504
          %v3730 = vsel %vm3728, %v3711, 0
          %3732 = vmatpush.msra.mxu0 0.0
          %3733 = vmatpush.msra.mxu0 0.0
          %3734 = vmatpush.msra.mxu0 0.0
          %3735 = vmatpush.msra.mxu0 0.0
          %3736 = vmatpush.msra.mxu0 0.0
          %3737 = vmatpush.msra.mxu0 0.0
          %3738 = vmatpush.msra.mxu0 0.0
          %3739 = vmatpush.msra.mxu0 0.0
          %3740 = vmatpush.msra.mxu0 0.0
          %3741 = vmatpush.msra.mxu0 0.0
          %3742 = vmatpush.msra.mxu0 0.0
          %3743 = vmatpush.msra.mxu0 0.0
          %3744 = vmatpush.msra.mxu0 0.0
          %3745 = vmatpush.msra.mxu0 0.0
          %3746 = vmatpush.msra.mxu0 0.0
          %3747 = vmatpush.msra.mxu0 %v3730
          %3748 = vmatmul.f32.gmra.mxu0 %v3726
          %v3749 = vpop.f32.mrf.mxu0
          %v3750 = vadd.f32 %v3723, %v3749
          %3751 = vdwg.mxu0
          %v3752 = vmax.f32 %v3750, 0.0
          %v3754 = vperm.slane %v3721, 0
          %v3757 = vsel %vm2232, %v3752, 0
          %3759 = vmatpush.msra.mxu0 0.0
          %3760 = vmatpush.msra.mxu0 0.0
          %3761 = vmatpush.msra.mxu0 0.0
          %3762 = vmatpush.msra.mxu0 0.0
          %3763 = vmatpush.msra.mxu0 0.0
          %3764 = vmatpush.msra.mxu0 0.0
          %3765 = vmatpush.msra.mxu0 0.0
          %3766 = vmatpush.msra.mxu0 0.0
          %3767 = vmatpush.msra.mxu0 %v3720
          %3768 = vmatpush.msra.mxu0 %v3719
          %3769 = vmatpush.msra.mxu0 %v3718
          %3770 = vmatpush.msra.mxu0 %v3717
          %3771 = vmatpush.msra.mxu0 %v3716
          %3772 = vmatpush.msra.mxu0 %v3715
          %3773 = vmatpush.msra.mxu0 %v3714
          %3774 = vmatpush.msra.mxu0 %v3713
          %3775 = vmatmul.f32.gmra.mxu0 %v3757
          %v3776 = vpop.f32.mrf.mxu0
          %v3777 = vadd.f32 %v3754, %v3776
          %3778 = vdwg.mxu0
          %vm3779 = vcmask 779264
          %3780 = vst.msk [vmem:[%s77] sm:$0x3] %vm3779, %v3777
          %vm3781 = vcmask 41984
          %3782 = vst.msk [vmem:[#allocation34] sm:$0x3] %vm3781, %v3554
          %vm3783 = vcmask 287744
          %3784 = vst.msk [vmem:[%s81] sm:$0x3] %vm3783, %v3617
        $region276: #{attention_vae_forward.1} parent=171 // pred_fallthru
          _
        // Predicated region
        $region277: #{attention_vae_forward.1} parent=171 // pred_check
          %p3785 = pneg %p991
        $region278: #{attention_vae_forward.1} parent=171 // pred_check_branch
          %3787 = sbr.rel (%p3785) target = $region280
        $region279: #{attention_vae_forward.1} parent=171 // pred_region
          _
        $region280: #{attention_vae_forward.1} parent=171 // pred_fallthru
          _
        // Predicated region
        $region281: #{attention_vae_forward.1} parent=171 // pred_check
          %p3788 = pneg %p1012
        $region282: #{attention_vae_forward.1} parent=171 // pred_check_branch
          %3790 = sbr.rel (%p3788) target = $region284
        $region283: #{attention_vae_forward.1} parent=171 // pred_region
          %3792 = vsyncadd [#allocation5], 0
          %s3794 = sshll.u32 [#allocation34], 4
          %s3795 = int_to_ptr.vmem [resolvable:$true] %s3794
          %s3796 = sshll.u32 %s79, 4
          %s3797 = int_to_ptr.hbm [resolvable:$true] %s3796
          %3799 = dma.vmem_to_hbm [thread:$0]  %s3795, 32, %s3797, [#allocation5]
        $region284: #{attention_vae_forward.1} parent=171 // pred_fallthru
          _
        // Predicated region
        $region285: #{attention_vae_forward.1} parent=171 // pred_check
          %p3800 = pneg %p1033
        $region286: #{attention_vae_forward.1} parent=171 // pred_check_branch
          %3802 = sbr.rel (%p3800) target = $region288
        $region287: #{attention_vae_forward.1} parent=171 // pred_region
          _
        $region288: #{attention_vae_forward.1} parent=171 // pred_fallthru
          _
        // Predicated region
        $region289: #{attention_vae_forward.1} parent=171 // pred_check
          %p3803 = pneg %p991
        $region290: #{attention_vae_forward.1} parent=171 // pred_check_branch
          %3805 = sbr.rel (%p3803) target = $region292
        $region291: #{attention_vae_forward.1} parent=171 // pred_region
          _
        $region292: #{attention_vae_forward.1} parent=171 // pred_fallthru
          _
        // Predicated region
        $region293: #{attention_vae_forward.1} parent=171 // pred_check
          %p3806 = pneg %p1012
        $region294: #{attention_vae_forward.1} parent=171 // pred_check_branch
          %3808 = sbr.rel (%p3806) target = $region296
        $region295: #{attention_vae_forward.1} parent=171 // pred_region
          %3810 = dma.done [#allocation5], 32
        $region296: #{attention_vae_forward.1} parent=171 // pred_fallthru
          _
        // Predicated region
        $region297: #{attention_vae_forward.1} parent=171 // pred_check
          %p3811 = pneg %p1033
        $region298: #{attention_vae_forward.1} parent=171 // pred_check_branch
          %3813 = sbr.rel (%p3811) target = $region300
        $region299: #{attention_vae_forward.1} parent=171 // pred_region
          _
        $region300: #{attention_vae_forward.1} parent=171 // pred_fallthru
          _
      $region172: #{attention_vae_forward.1} parent=5 // pred_fallthru
        _
      %p3814 = scmp.le.s32.totalorder 2, %s95
      // Predicated region
      $region301: #{attention_vae_forward.1} parent=5 // pred_check
        %p3815 = pneg %p3814
      $region302: #{attention_vae_forward.1} parent=5 // pred_check_branch
        %3817 = sbr.rel (%p3815) target = $region304
      $region303: #{attention_vae_forward.1} parent=5 // pred_region
        %s3818 = ssub.s32 %s95, 2
      $region304: #{attention_vae_forward.1} parent=5 // pred_fallthru
        _
    $region6: #{attention_vae_forward.1} parent=1 // loop_footer
      %s99 = sadd.s32 1, %s95
    $region7: #{attention_vae_forward.1} parent=1 // loop_footer_branch
      %94 = sbr.rel target = $region3
    $region8: #{attention_vae_forward.1} parent=1 // loop_exit
      _
    %3819 = vsyncpa [#allocation4], 1
    %s3820 = scalar_lea.sflag [#allocation4], 1
    %3821 = vsyncpa %s3820, 1
    %3822 = vsyncpa [#allocation7], 1
    %3823 = vsyncpa [#allocation23], 1
    %3824 = vsyncpa [#allocation26], 1
    %3825 = vsyncpa [#allocation29], 1
    %3826 = vsyncpa [#allocation32], 1
    %3827 = vsyncpa [#allocation5], 1
    %s3828 = scalar_lea.sflag [#allocation5], 1
    %3829 = vsyncpa %s3828, 1

</llo_original>
